<compile_context>
chip_gen: v7x
topology: tpu7x:2x2x1
jax: 0.10.0
libtpu: 0.0.40
codegen_flags: <defaults>
</compile_context>

<pallas_src>
import jax
import jax.numpy as jnp
from jax.experimental import pallas as pl
from jax.experimental.pallas import tpu as pltpu

D_BINS = 8     # self.D
C_FEAT = 16    # self.C  (D*C = 128 -> lane-dense output slab)
CIN_PAD = 128  # conv1 input channels padded 88 -> 128
HIGH = jax.lax.Precision.HIGHEST


# ----------------------------- fused Pallas kernel ------------------------------

def _cam_encode_kernel(x_ref, w1_ref, b1_ref, w2_ref, b2_ref,
                       wh_ref, bh_ref, rep_ref, o_ref, h_ref):
    # x_ref : (1, H, W, 128)    bf16  channel-padded concat features (NO spatial pad)
    # w1/w2 : (9, 128, 128)     bf16  conv taps (tap = dy*3+dx), BN scale folded in
    # b1/b2 : (1, 128)          f32   folded BN offsets
    # wh    : (128, 256)        bf16  merged head: [:, :128]=tiled feat, [:, 128:136]=depth
    # bh    : (1, 256)          f32   merged bias (same layout)
    # rep   : (D, 128)          f32   0/1 expansion: rep[d, d*C + c] = 1
    # o_ref : (1, HW, 128)      f32   lane-dense depth*feat slab
    # h_ref : (H+2, W+2, 128)   bf16  VMEM scratch (padded conv input, reused twice)
    _, H, W, _ = x_ref.shape
    HW = H * W
    DC = o_ref.shape[-1]
    D = rep_ref.shape[0]
    CH = h_ref.shape[-1]

    # Zero only the 1-pixel border of the scratch; the interior is fully overwritten
    # every grid step, so this is O(perimeter) and safe under megacore sharding.
    zrow = jnp.zeros((1, W + 2, CH), h_ref.dtype)
    zcol = jnp.zeros((H, 1, CH), h_ref.dtype)
    h_ref[0:1, :, :] = zrow
    h_ref[H + 1:H + 2, :, :] = zrow
    h_ref[1:H + 1, 0:1, :] = zcol
    h_ref[1:H + 1, W + 1:W + 2, :] = zcol

    def conv3x3_bias_relu(w_ref_, b_row):
        # Padded input lives in h_ref.  3 hoisted dx (sublane) shifts reused by the
        # 3 dy taps; 9 accumulating K=128 MXU matmuls (no materialized im2col).
        src = h_ref[...]
        acc = jnp.zeros((HW, CH), jnp.float32)
        for dx in range(3):
            slab = src[:, dx:dx + W, :]                      # one sublane shift per dx
            for dy in range(3):
                tap = slab[dy:dy + H].reshape(HW, CH)        # cheap leading-dim slice
                acc = acc + jnp.dot(tap, w_ref_[dy * 3 + dx],
                                    preferred_element_type=jnp.float32)
        return jnp.maximum(acc + b_row, 0.0)                 # (HW, 128) f32

    # stage the (channel-padded) input into the scratch interior -> conv1
    h_ref[1:H + 1, 1:W + 1, :] = x_ref[0]
    y1 = conv3x3_bias_relu(w1_ref, b1_ref[0])                # conv1 + folded BN + ReLU

    # re-pad conv1 output in the same bf16 scratch (border stays zero) -> conv2
    h_ref[1:H + 1, 1:W + 1, :] = y1.reshape(H, W, CH).astype(jnp.bfloat16)
    y2 = conv3x3_bias_relu(w2_ref, b2_ref[0])                # conv2 + folded BN + ReLU
    h2b = y2.astype(jnp.bfloat16)

    # merged 1x1 head: one lane-dense N=256 matmul (tiled feature head | depth logits)
    head = jnp.dot(h2b, wh_ref[...], preferred_element_type=jnp.float32) + bh_ref[0]
    feat128 = head[:, :DC]                                   # (HW, 128)
    dl = head[:, DC:DC + D]                                  # (HW, D) depth logits

    # softmax over the D depth bins
    m = jnp.max(dl, axis=1, keepdims=True)
    e = jnp.exp(dl - m)
    inv = pl.reciprocal(jnp.sum(e, axis=1, keepdims=True), approx=True)
    depth = e * inv                                          # (HW, D)

    # expand depth to the 128-lane slab with the constant 0/1 matrix (exact in f32)
    depth128 = jnp.dot(depth, rep_ref[...], preferred_element_type=jnp.float32)

    o_ref[0] = depth128 * feat128                            # lane-dense store


def cam_encode_fused(cat_bf16, w1, b1, w2, b2, wh, bh, rep):
    """cat_bf16: [B,H,W,128] bf16 (channel-padded) -> [B, HW, D*C] f32 (lane-dense)."""
    B, H, W, _ = cat_bf16.shape
    DC = D_BINS * C_FEAT
    # TODO(synk): weight in_specs could be single-buffered (pipeline_mode) once row
    # tiling makes VMEM tight; marginal at these sizes.
    return pl.pallas_call(
        _cam_encode_kernel,
        out_shape=jax.ShapeDtypeStruct((B, H * W, DC), jnp.float32),
        grid=(B,),
        in_specs=[
            pl.BlockSpec((1, H, W, CIN_PAD), lambda b: (b, 0, 0, 0)),
            pl.BlockSpec((9, CIN_PAD, 128), lambda b: (0, 0, 0)),
            pl.BlockSpec((1, 128), lambda b: (0, 0)),
            pl.BlockSpec((9, 128, 128), lambda b: (0, 0, 0)),
            pl.BlockSpec((1, 128), lambda b: (0, 0)),
            pl.BlockSpec((128, 2 * DC), lambda b: (0, 0)),
            pl.BlockSpec((1, 2 * DC), lambda b: (0, 0)),
            pl.BlockSpec((D_BINS, DC), lambda b: (0, 0)),
        ],
        out_specs=pl.BlockSpec((1, H * W, DC), lambda b: (b, 0, 0)),
        scratch_shapes=[pltpu.VMEM((H + 2, W + 2, 128), jnp.bfloat16)],
        compiler_params=pltpu.CompilerParams(
            dimension_semantics=("parallel",),
            vmem_limit_bytes=64 * 1024 * 1024),
    )(cat_bf16, w1, b1, w2, b2, wh, bh, rep)


# --------------------------------- glue ------------------------------------

def _interp_matrix(n_in, n_out):
    s = jnp.arange(n_out, dtype=jnp.float32) * (n_in - 1) / (n_out - 1)
    i0 = jnp.clip(jnp.floor(s).astype(jnp.int32), 0, n_in - 2)
    w = s - i0.astype(jnp.float32)
    return (jax.nn.one_hot(i0, n_in, dtype=jnp.float32) * (1.0 - w)[:, None]
            + jax.nn.one_hot(i0 + 1, n_in, dtype=jnp.float32) * w[:, None])


def upsample2x_bilinear_align_corners(x):
    """NHWC bilinear x2 upsample (align_corners=True) as two dense matmuls."""
    B, H, W, C = x.shape
    mh = _interp_matrix(H, 2 * H)
    mw = _interp_matrix(W, 2 * W)
    y = jnp.einsum('oh,bhwc->bowc', mh, x, precision=HIGH)
    return jnp.einsum('pw,bowc->bopc', mw, y, precision=HIGH)


def fold_bn(gamma, beta, mean, var, eps=1e-5):
    scale = gamma / jnp.sqrt(var + eps)
    return scale, beta - mean * scale


def _avgpool(t, k):
    b, h, w, c = t.shape
    return t.reshape(b, h // k, k, w // k, k, c).mean(axis=(2, 4))


def _trunk_stub(params, x_nhwc):
    # TODO(synk): stands in for EfficientNet-b4 trunk feature extraction.
    x2 = jnp.einsum('bhwc,cd->bhwd', _avgpool(x_nhwc, 4), params["w_stub2"],
                    precision=HIGH)                       # [B, H/4, W/4, 32]
    x1 = jnp.einsum('bhwc,cd->bhwd', _avgpool(x_nhwc, 8), params["w_stub1"],
                    precision=HIGH)                       # [B, H/8, W/8, 56]
    return x1, x2


def prep_weights(params):
    """One-time prep: fold BN, pad Cin 88->128, tile/merge heads, cast bf16."""
    DC = D_BINS * C_FEAT

    s1, o1 = fold_bn(params["bn1_gamma"], params["bn1_beta"],
                     params["bn1_mean"], params["bn1_var"])
    w1 = params["w_conv1"] * s1[None, None, :]                     # (9, 88, 128)
    w1 = jnp.pad(w1, ((0, 0), (0, CIN_PAD - w1.shape[1]), (0, 0))).astype(jnp.bfloat16)
    b1 = o1.reshape(1, 128)

    s2, o2 = fold_bn(params["bn2_gamma"], params["bn2_beta"],
                     params["bn2_mean"], params["bn2_var"])
    w2 = (params["w_conv2"] * s2[None, None, :]).astype(jnp.bfloat16)  # (9, 128, 128)
    b2 = o2.reshape(1, 128)

    # merged 1x1 head: cols [0, DC) = tiled feature head, [DC, DC+D) = depth head
    wd = params["w_depth"][:, :D_BINS]                                       # (128, D)
    wf = jnp.tile(params["w_depth"][:, D_BINS:D_BINS + C_FEAT], (1, D_BINS))  # (128, DC)
    wh = jnp.concatenate(
        [wf, wd, jnp.zeros((128, DC - D_BINS), jnp.float32)], axis=1).astype(jnp.bfloat16)
    bd = params["b_depth"][:D_BINS]
    bf = jnp.tile(params["b_depth"][D_BINS:D_BINS + C_FEAT], D_BINS)
    bh = jnp.concatenate([bf, bd, jnp.zeros((DC - D_BINS,), jnp.float32)]).reshape(1, 2 * DC)

    # constant 0/1 depth->slab expansion: rep[d, d*C + c] = 1
    rep = (jnp.arange(DC)[None, :] // C_FEAT
           == jnp.arange(D_BINS)[:, None]).astype(jnp.float32)               # (D, DC)
    return (w1, b1, w2, b2, wh, bh, rep)


def cam_encode_forward(prepped, params, x_nchw):
    x = jnp.transpose(x_nchw, (0, 2, 3, 1))                 # NCHW -> NHWC
    x1, x2 = _trunk_stub(params, x)

    # Up: bilinear x2 upsample (align_corners=True), cat([x2, x1_up], channel dim).
    # Channel-pad 88 -> 128 and cast to bf16 in the same pass; the 1-pixel spatial
    # pad happens inside the kernel's VMEM scratch (no extra HBM pass).
    x1u = upsample2x_bilinear_align_corners(x1)
    B, h, w, _ = x2.shape
    c_real = x2.shape[-1] + x1u.shape[-1]
    cat = jnp.concatenate(
        [x2, x1u, jnp.zeros((B, h, w, CIN_PAD - c_real), x2.dtype)],
        axis=-1).astype(jnp.bfloat16)                        # [B, h, w, 128] bf16

    slab = cam_encode_fused(cat, *prepped)                   # [B, HW, D*C] f32

    new_x = slab.reshape(B, h, w, D_BINS, C_FEAT)
    # TODO(synk): downstream voxel pooling could consume [B, h, w, D, C] (or the raw
    # lane-dense [B, HW, D*C] slab, optionally bf16) directly; this transpose only
    # preserves the PyTorch layout.
    return jnp.transpose(new_x, (0, 4, 3, 1, 2))             # [B, C, D, h, w]


# ------------------------- pure-JAX reference check -------------------------

def ref_forward(params, x_nchw):
    x = jnp.transpose(x_nchw, (0, 2, 3, 1))
    x1, x2 = _trunk_stub(params, x)
    x1u = upsample2x_bilinear_align_corners(x1)
    h = jnp.concatenate([x2, x1u], axis=-1)

    def conv_bn_relu(h, w, gamma, beta, mean, var):
        B, H, W, _ = h.shape
        hp = jnp.pad(h, ((0, 0), (1, 1), (1, 1), (0, 0)))
        acc = jnp.zeros(h.shape[:3] + (w.shape[-1],), jnp.float32)
        for dy in range(3):
            for dx in range(3):
                acc = acc + jnp.einsum('bhwc,cd->bhwd',
                                       hp[:, dy:dy + H, dx:dx + W, :],
                                       w[dy * 3 + dx], precision=HIGH)
        s, o = fold_bn(gamma, beta, mean, var)
        return jnp.maximum(acc * s + o, 0.0)

    h = conv_bn_relu(h, params["w_conv1"], params["bn1_gamma"], params["bn1_beta"],
                     params["bn1_mean"], params["bn1_var"])
    h = conv_bn_relu(h, params["w_conv2"], params["bn2_gamma"], params["bn2_beta"],
                     params["bn2_mean"], params["bn2_var"])
    logits = jnp.einsum('bhwc,cd->bhwd', h, params["w_depth"],
                        precision=HIGH) + params["b_depth"]
    depth = jax.nn.softmax(logits[..., :D_BINS], axis=-1)
    feat = logits[..., D_BINS:D_BINS + C_FEAT]
    new_x = depth[..., :, None] * feat[..., None, :]        # [B, h, w, D, C]
    return jnp.transpose(new_x, (0, 4, 3, 1, 2))


# ------------------------------ param init ----------------------------------

def init_params(key):
    ks = jax.random.split(key, 14)
    return {
        "w_stub2": 0.3 * jax.random.normal(ks[0], (3, 32), jnp.float32),
        "w_stub1": 0.3 * jax.random.normal(ks[1], (3, 56), jnp.float32),
        "w_conv1": 0.05 * jax.random.normal(ks[2], (9, 88, 128), jnp.float32),
        "bn1_gamma": 1.0 + 0.1 * jax.random.normal(ks[3], (128,), jnp.float32),
        "bn1_beta": 0.1 * jax.random.normal(ks[4], (128,), jnp.float32),
        "bn1_mean": 0.1 * jax.random.normal(ks[5], (128,), jnp.float32),
        "bn1_var": jax.random.uniform(ks[6], (128,), jnp.float32, 0.5, 1.5),
        "w_conv2": 0.05 * jax.random.normal(ks[7], (9, 128, 128), jnp.float32),
        "bn2_gamma": 1.0 + 0.1 * jax.random.normal(ks[8], (128,), jnp.float32),
        "bn2_beta": 0.1 * jax.random.normal(ks[9], (128,), jnp.float32),
        "bn2_mean": 0.1 * jax.random.normal(ks[10], (128,), jnp.float32),
        "bn2_var": jax.random.uniform(ks[11], (128,), jnp.float32, 0.5, 1.5),
        "w_depth": 0.1 * jax.random.normal(ks[12], (128, D_BINS + C_FEAT), jnp.float32),
        "b_depth": 0.05 * jax.random.normal(ks[13], (D_BINS + C_FEAT,), jnp.float32),
    }


if __name__ == "__main__":
    key = jax.random.PRNGKey(0)
    pkey, xkey = jax.random.split(key)
    params = init_params(pkey)
    x = jax.random.normal(xkey, (2, 3, 32, 32), jnp.float32)   # NCHW like PyTorch

    prepped = prep_weights(params)          # BN fold / pad / tile / cast done ONCE

    out = jax.jit(cam_encode_forward)(prepped, params, x)
    out = jax.block_until_ready(out)
    assert out.shape == (2, C_FEAT, D_BINS, 8, 8), out.shape

    ref = jax.block_until_ready(ref_forward(params, x))
    err = float(jnp.max(jnp.abs(out - ref)))
    assert err < 1e-2, err

    print("KERNEL_OK")
</pallas_src>

<mosaic_0001>
module attributes {stable_mosaic.version = 11 : i64} {
  func.func @_cam_encode_kernel(%arg0: i32, %arg1: memref<1x8x8x128xbf16, #tpu.memory_space<vmem>>, %arg2: memref<9x128x128xbf16, #tpu.memory_space<vmem>>, %arg3: memref<1x128xf32, #tpu.memory_space<vmem>>, %arg4: memref<9x128x128xbf16, #tpu.memory_space<vmem>>, %arg5: memref<1x128xf32, #tpu.memory_space<vmem>>, %arg6: memref<128x256xbf16, #tpu.memory_space<vmem>>, %arg7: memref<1x256xf32, #tpu.memory_space<vmem>>, %arg8: memref<8x128xf32, #tpu.memory_space<vmem>>, %arg9: memref<1x64x128xf32, #tpu.memory_space<vmem>>, %arg10: memref<10x10x128xbf16, #tpu.memory_space<vmem>>) attributes {dimension_semantics = [#tpu.dimension_semantics<parallel>], iteration_bounds = array<i64: 2>, scalar_prefetch = 0 : i64, scratch_operands = 1 : i64, tpu.core_type = #tpu.core_type<tc>, window_params = [{transform_indices = @transform_0, window_bounds = array<i64: 1, 8, 8, 128>}, {pipeline_mode = #tpu.pipeline_mode<synchronous>, transform_indices = @transform_1, window_bounds = array<i64: 9, 128, 128>}, {pipeline_mode = #tpu.pipeline_mode<synchronous>, transform_indices = @transform_2, window_bounds = array<i64: 1, 128>}, {pipeline_mode = #tpu.pipeline_mode<synchronous>, transform_indices = @transform_3, window_bounds = array<i64: 9, 128, 128>}, {pipeline_mode = #tpu.pipeline_mode<synchronous>, transform_indices = @transform_4, window_bounds = array<i64: 1, 128>}, {pipeline_mode = #tpu.pipeline_mode<synchronous>, transform_indices = @transform_5, window_bounds = array<i64: 128, 256>}, {pipeline_mode = #tpu.pipeline_mode<synchronous>, transform_indices = @transform_6, window_bounds = array<i64: 1, 256>}, {pipeline_mode = #tpu.pipeline_mode<synchronous>, transform_indices = @transform_7, window_bounds = array<i64: 8, 128>}, {transform_indices = @transform_8, window_bounds = array<i64: 1, 64, 128>}]} {
    %cst = arith.constant 0.000000e+00 : bf16
    %0 = vector.broadcast %cst : bf16 to vector<1x10x128xbf16>
    %cst_0 = arith.constant 0.000000e+00 : bf16
    %1 = vector.broadcast %cst_0 : bf16 to vector<8x1x128xbf16>
    %c0 = arith.constant 0 : index
    %c0_1 = arith.constant 0 : index
    %c0_2 = arith.constant 0 : index
    %2 = vector.load %arg10[%c0, %c0_1, %c0_2] : memref<10x10x128xbf16, #tpu.memory_space<vmem>>, vector<1x10x128xbf16>
    tpu.vector_store %arg10[%c0, %c0_1, %c0_2], %0 {strides = array<i32>} : memref<10x10x128xbf16, #tpu.memory_space<vmem>>, vector<1x10x128xbf16>,
    %c9 = arith.constant 9 : index
    %c0_3 = arith.constant 0 : index
    %c0_4 = arith.constant 0 : index
    %3 = vector.load %arg10[%c9, %c0_3, %c0_4] : memref<10x10x128xbf16, #tpu.memory_space<vmem>>, vector<1x10x128xbf16>
    tpu.vector_store %arg10[%c9, %c0_3, %c0_4], %0 {strides = array<i32>} : memref<10x10x128xbf16, #tpu.memory_space<vmem>>, vector<1x10x128xbf16>,
    %c1 = arith.constant 1 : index
    %c0_5 = arith.constant 0 : index
    %c0_6 = arith.constant 0 : index
    %4 = vector.load %arg10[%c1, %c0_5, %c0_6] : memref<10x10x128xbf16, #tpu.memory_space<vmem>>, vector<8x1x128xbf16>
    tpu.vector_store %arg10[%c1, %c0_5, %c0_6], %1 {strides = array<i32>} : memref<10x10x128xbf16, #tpu.memory_space<vmem>>, vector<8x1x128xbf16>,
    %c1_7 = arith.constant 1 : index
    %c9_8 = arith.constant 9 : index
    %c0_9 = arith.constant 0 : index
    %5 = vector.load %arg10[%c1_7, %c9_8, %c0_9] : memref<10x10x128xbf16, #tpu.memory_space<vmem>>, vector<8x1x128xbf16>
    tpu.vector_store %arg10[%c1_7, %c9_8, %c0_9], %1 {strides = array<i32>} : memref<10x10x128xbf16, #tpu.memory_space<vmem>>, vector<8x1x128xbf16>,
    %c0_10 = arith.constant 0 : index
    %c0_11 = arith.constant 0 : index
    %c0_12 = arith.constant 0 : index
    %c0_13 = arith.constant 0 : index
    %6 = vector.load %arg1[%c0_10, %c0_11, %c0_12, %c0_13] : memref<1x8x8x128xbf16, #tpu.memory_space<vmem>>, vector<1x8x8x128xbf16>
    %7 = vector.shape_cast %6 : vector<1x8x8x128xbf16> to vector<8x8x128xbf16>
    %c1_14 = arith.constant 1 : index
    %c1_15 = arith.constant 1 : index
    %c0_16 = arith.constant 0 : index
    %8 = vector.load %arg10[%c1_14, %c1_15, %c0_16] : memref<10x10x128xbf16, #tpu.memory_space<vmem>>, vector<8x8x128xbf16>
    tpu.vector_store %arg10[%c1_14, %c1_15, %c0_16], %7 {strides = array<i32>} : memref<10x10x128xbf16, #tpu.memory_space<vmem>>, vector<8x8x128xbf16>,
    %c0_17 = arith.constant 0 : index
    %c0_18 = arith.constant 0 : index
    %9 = vector.load %arg3[%c0_17, %c0_18] : memref<1x128xf32, #tpu.memory_space<vmem>>, vector<1x128xf32>
    %10 = vector.shape_cast %9 : vector<1x128xf32> to vector<128xf32>
    %c0_19 = arith.constant 0 : index
    %c0_20 = arith.constant 0 : index
    %c0_21 = arith.constant 0 : index
    %11 = vector.load %arg10[%c0_19, %c0_20, %c0_21] : memref<10x10x128xbf16, #tpu.memory_space<vmem>>, vector<10x10x128xbf16>
    %cst_22 = arith.constant 0.000000e+00 : f32
    %12 = vector.broadcast %cst_22 : f32 to vector<64x128xf32>
    %13 = vector.extract_strided_slice %11 {offsets = [0, 0, 0], sizes = [10, 8, 128], strides = [1, 1, 1]} : vector<10x10x128xbf16> to vector<10x8x128xbf16>
    %14 = vector.extract_strided_slice %13 {offsets = [0, 0, 0], sizes = [8, 8, 128], strides = [1, 1, 1]} : vector<10x8x128xbf16> to vector<8x8x128xbf16>
    %15 = vector.shape_cast %14 : vector<8x8x128xbf16> to vector<64x128xbf16>
    %c0_23 = arith.constant 0 : index
    %c0_24 = arith.constant 0 : index
    %c0_25 = arith.constant 0 : index
    %16 = vector.load %arg2[%c0_23, %c0_24, %c0_25] : memref<9x128x128xbf16, #tpu.memory_space<vmem>>, vector<1x128x128xbf16>
    %17 = vector.shape_cast %16 : vector<1x128x128xbf16> to vector<128x128xbf16>
    %cst_26 = arith.constant dense<0.000000e+00> : vector<64x128xf32>
    %18 = tpu.matmul %15, %17, %cst_26 {dimension_numbers = #tpu.dot_dimension_numbers<[1], [0], [0], [1], [0, 0, 1, 1], [], []>} : vector<64x128xbf16>, vector<128x128xbf16>, vector<64x128xf32> -> vector<64x128xf32>
    %19 = arith.addf %12, %18 : vector<64x128xf32>
    %20 = vector.extract_strided_slice %13 {offsets = [1, 0, 0], sizes = [8, 8, 128], strides = [1, 1, 1]} : vector<10x8x128xbf16> to vector<8x8x128xbf16>
    %21 = vector.shape_cast %20 : vector<8x8x128xbf16> to vector<64x128xbf16>
    %c3 = arith.constant 3 : index
    %c0_27 = arith.constant 0 : index
    %c0_28 = arith.constant 0 : index
    %22 = vector.load %arg2[%c3, %c0_27, %c0_28] : memref<9x128x128xbf16, #tpu.memory_space<vmem>>, vector<1x128x128xbf16>
    %23 = vector.shape_cast %22 : vector<1x128x128xbf16> to vector<128x128xbf16>
    %cst_29 = arith.constant dense<0.000000e+00> : vector<64x128xf32>
    %24 = tpu.matmul %21, %23, %cst_29 {dimension_numbers = #tpu.dot_dimension_numbers<[1], [0], [0], [1], [0, 0, 1, 1], [], []>} : vector<64x128xbf16>, vector<128x128xbf16>, vector<64x128xf32> -> vector<64x128xf32>
    %25 = arith.addf %19, %24 : vector<64x128xf32>
    %26 = vector.extract_strided_slice %13 {offsets = [2, 0, 0], sizes = [8, 8, 128], strides = [1, 1, 1]} : vector<10x8x128xbf16> to vector<8x8x128xbf16>
    %27 = vector.shape_cast %26 : vector<8x8x128xbf16> to vector<64x128xbf16>
    %c6 = arith.constant 6 : index
    %c0_30 = arith.constant 0 : index
    %c0_31 = arith.constant 0 : index
    %28 = vector.load %arg2[%c6, %c0_30, %c0_31] : memref<9x128x128xbf16, #tpu.memory_space<vmem>>, vector<1x128x128xbf16>
    %29 = vector.shape_cast %28 : vector<1x128x128xbf16> to vector<128x128xbf16>
    %cst_32 = arith.constant dense<0.000000e+00> : vector<64x128xf32>
    %30 = tpu.matmul %27, %29, %cst_32 {dimension_numbers = #tpu.dot_dimension_numbers<[1], [0], [0], [1], [0, 0, 1, 1], [], []>} : vector<64x128xbf16>, vector<128x128xbf16>, vector<64x128xf32> -> vector<64x128xf32>
    %31 = arith.addf %25, %30 : vector<64x128xf32>
    %32 = vector.extract_strided_slice %11 {offsets = [0, 1, 0], sizes = [10, 8, 128], strides = [1, 1, 1]} : vector<10x10x128xbf16> to vector<10x8x128xbf16>
    %33 = vector.extract_strided_slice %32 {offsets = [0, 0, 0], sizes = [8, 8, 128], strides = [1, 1, 1]} : vector<10x8x128xbf16> to vector<8x8x128xbf16>
    %34 = vector.shape_cast %33 : vector<8x8x128xbf16> to vector<64x128xbf16>
    %c1_33 = arith.constant 1 : index
    %c0_34 = arith.constant 0 : index
    %c0_35 = arith.constant 0 : index
    %35 = vector.load %arg2[%c1_33, %c0_34, %c0_35] : memref<9x128x128xbf16, #tpu.memory_space<vmem>>, vector<1x128x128xbf16>
    %36 = vector.shape_cast %35 : vector<1x128x128xbf16> to vector<128x128xbf16>
    %cst_36 = arith.constant dense<0.000000e+00> : vector<64x128xf32>
    %37 = tpu.matmul %34, %36, %cst_36 {dimension_numbers = #tpu.dot_dimension_numbers<[1], [0], [0], [1], [0, 0, 1, 1], [], []>} : vector<64x128xbf16>, vector<128x128xbf16>, vector<64x128xf32> -> vector<64x128xf32>
    %38 = arith.addf %31, %37 : vector<64x128xf32>
    %39 = vector.extract_strided_slice %32 {offsets = [1, 0, 0], sizes = [8, 8, 128], strides = [1, 1, 1]} : vector<10x8x128xbf16> to vector<8x8x128xbf16>
    %40 = vector.shape_cast %39 : vector<8x8x128xbf16> to vector<64x128xbf16>
    %c4 = arith.constant 4 : index
    %c0_37 = arith.constant 0 : index
    %c0_38 = arith.constant 0 : index
    %41 = vector.load %arg2[%c4, %c0_37, %c0_38] : memref<9x128x128xbf16, #tpu.memory_space<vmem>>, vector<1x128x128xbf16>
    %42 = vector.shape_cast %41 : vector<1x128x128xbf16> to vector<128x128xbf16>
    %cst_39 = arith.constant dense<0.000000e+00> : vector<64x128xf32>
    %43 = tpu.matmul %40, %42, %cst_39 {dimension_numbers = #tpu.dot_dimension_numbers<[1], [0], [0], [1], [0, 0, 1, 1], [], []>} : vector<64x128xbf16>, vector<128x128xbf16>, vector<64x128xf32> -> vector<64x128xf32>
    %44 = arith.addf %38, %43 : vector<64x128xf32>
    %45 = vector.extract_strided_slice %32 {offsets = [2, 0, 0], sizes = [8, 8, 128], strides = [1, 1, 1]} : vector<10x8x128xbf16> to vector<8x8x128xbf16>
    %46 = vector.shape_cast %45 : vector<8x8x128xbf16> to vector<64x128xbf16>
    %c7 = arith.constant 7 : index
    %c0_40 = arith.constant 0 : index
    %c0_41 = arith.constant 0 : index
    %47 = vector.load %arg2[%c7, %c0_40, %c0_41] : memref<9x128x128xbf16, #tpu.memory_space<vmem>>, vector<1x128x128xbf16>
    %48 = vector.shape_cast %47 : vector<1x128x128xbf16> to vector<128x128xbf16>
    %cst_42 = arith.constant dense<0.000000e+00> : vector<64x128xf32>
    %49 = tpu.matmul %46, %48, %cst_42 {dimension_numbers = #tpu.dot_dimension_numbers<[1], [0], [0], [1], [0, 0, 1, 1], [], []>} : vector<64x128xbf16>, vector<128x128xbf16>, vector<64x128xf32> -> vector<64x128xf32>
    %50 = arith.addf %44, %49 : vector<64x128xf32>
    %51 = vector.extract_strided_slice %11 {offsets = [0, 2, 0], sizes = [10, 8, 128], strides = [1, 1, 1]} : vector<10x10x128xbf16> to vector<10x8x128xbf16>
    %52 = vector.extract_strided_slice %51 {offsets = [0, 0, 0], sizes = [8, 8, 128], strides = [1, 1, 1]} : vector<10x8x128xbf16> to vector<8x8x128xbf16>
    %53 = vector.shape_cast %52 : vector<8x8x128xbf16> to vector<64x128xbf16>
    %c2 = arith.constant 2 : index
    %c0_43 = arith.constant 0 : index
    %c0_44 = arith.constant 0 : index
    %54 = vector.load %arg2[%c2, %c0_43, %c0_44] : memref<9x128x128xbf16, #tpu.memory_space<vmem>>, vector<1x128x128xbf16>
    %55 = vector.shape_cast %54 : vector<1x128x128xbf16> to vector<128x128xbf16>
    %cst_45 = arith.constant dense<0.000000e+00> : vector<64x128xf32>
    %56 = tpu.matmul %53, %55, %cst_45 {dimension_numbers = #tpu.dot_dimension_numbers<[1], [0], [0], [1], [0, 0, 1, 1], [], []>} : vector<64x128xbf16>, vector<128x128xbf16>, vector<64x128xf32> -> vector<64x128xf32>
    %57 = arith.addf %50, %56 : vector<64x128xf32>
    %58 = vector.extract_strided_slice %51 {offsets = [1, 0, 0], sizes = [8, 8, 128], strides = [1, 1, 1]} : vector<10x8x128xbf16> to vector<8x8x128xbf16>
    %59 = vector.shape_cast %58 : vector<8x8x128xbf16> to vector<64x128xbf16>
    %c5 = arith.constant 5 : index
    %c0_46 = arith.constant 0 : index
    %c0_47 = arith.constant 0 : index
    %60 = vector.load %arg2[%c5, %c0_46, %c0_47] : memref<9x128x128xbf16, #tpu.memory_space<vmem>>, vector<1x128x128xbf16>
    %61 = vector.shape_cast %60 : vector<1x128x128xbf16> to vector<128x128xbf16>
    %cst_48 = arith.constant dense<0.000000e+00> : vector<64x128xf32>
    %62 = tpu.matmul %59, %61, %cst_48 {dimension_numbers = #tpu.dot_dimension_numbers<[1], [0], [0], [1], [0, 0, 1, 1], [], []>} : vector<64x128xbf16>, vector<128x128xbf16>, vector<64x128xf32> -> vector<64x128xf32>
    %63 = arith.addf %57, %62 : vector<64x128xf32>
    %64 = vector.extract_strided_slice %51 {offsets = [2, 0, 0], sizes = [8, 8, 128], strides = [1, 1, 1]} : vector<10x8x128xbf16> to vector<8x8x128xbf16>
    %65 = vector.shape_cast %64 : vector<8x8x128xbf16> to vector<64x128xbf16>
    %c8 = arith.constant 8 : index
    %c0_49 = arith.constant 0 : index
    %c0_50 = arith.constant 0 : index
    %66 = vector.load %arg2[%c8, %c0_49, %c0_50] : memref<9x128x128xbf16, #tpu.memory_space<vmem>>, vector<1x128x128xbf16>
    %67 = vector.shape_cast %66 : vector<1x128x128xbf16> to vector<128x128xbf16>
    %cst_51 = arith.constant dense<0.000000e+00> : vector<64x128xf32>
    %68 = tpu.matmul %65, %67, %cst_51 {dimension_numbers = #tpu.dot_dimension_numbers<[1], [0], [0], [1], [0, 0, 1, 1], [], []>} : vector<64x128xbf16>, vector<128x128xbf16>, vector<64x128xf32> -> vector<64x128xf32>
    %69 = arith.addf %63, %68 : vector<64x128xf32>
    %70 = vector.shape_cast %10 : vector<128xf32> to vector<1x128xf32>
    %71 = vector.broadcast %70 : vector<1x128xf32> to vector<64x128xf32>
    %72 = arith.addf %69, %71 : vector<64x128xf32>
    %cst_52 = arith.constant 0.000000e+00 : f32
    %73 = vector.broadcast %cst_52 : f32 to vector<64x128xf32>
    %74 = arith.maximumf %72, %73 : vector<64x128xf32>
    %75 = vector.shape_cast %74 : vector<64x128xf32> to vector<8x8x128xf32>
    %76 = arith.truncf %75 : vector<8x8x128xf32> to vector<8x8x128xbf16>
    %c1_53 = arith.constant 1 : index
    %c1_54 = arith.constant 1 : index
    %c0_55 = arith.constant 0 : index
    %77 = vector.load %arg10[%c1_53, %c1_54, %c0_55] : memref<10x10x128xbf16, #tpu.memory_space<vmem>>, vector<8x8x128xbf16>
    tpu.vector_store %arg10[%c1_53, %c1_54, %c0_55], %76 {strides = array<i32>} : memref<10x10x128xbf16, #tpu.memory_space<vmem>>, vector<8x8x128xbf16>,
    %c0_56 = arith.constant 0 : index
    %c0_57 = arith.constant 0 : index
    %78 = vector.load %arg5[%c0_56, %c0_57] : memref<1x128xf32, #tpu.memory_space<vmem>>, vector<1x128xf32>
    %79 = vector.shape_cast %78 : vector<1x128xf32> to vector<128xf32>
    %c0_58 = arith.constant 0 : index
    %c0_59 = arith.constant 0 : index
    %c0_60 = arith.constant 0 : index
    %80 = vector.load %arg10[%c0_58, %c0_59, %c0_60] : memref<10x10x128xbf16, #tpu.memory_space<vmem>>, vector<10x10x128xbf16>
    %cst_61 = arith.constant 0.000000e+00 : f32
    %81 = vector.broadcast %cst_61 : f32 to vector<64x128xf32>
    %82 = vector.extract_strided_slice %80 {offsets = [0, 0, 0], sizes = [10, 8, 128], strides = [1, 1, 1]} : vector<10x10x128xbf16> to vector<10x8x128xbf16>
    %83 = vector.extract_strided_slice %82 {offsets = [0, 0, 0], sizes = [8, 8, 128], strides = [1, 1, 1]} : vector<10x8x128xbf16> to vector<8x8x128xbf16>
    %84 = vector.shape_cast %83 : vector<8x8x128xbf16> to vector<64x128xbf16>
    %c0_62 = arith.constant 0 : index
    %c0_63 = arith.constant 0 : index
    %c0_64 = arith.constant 0 : index
    %85 = vector.load %arg4[%c0_62, %c0_63, %c0_64] : memref<9x128x128xbf16, #tpu.memory_space<vmem>>, vector<1x128x128xbf16>
    %86 = vector.shape_cast %85 : vector<1x128x128xbf16> to vector<128x128xbf16>
    %cst_65 = arith.constant dense<0.000000e+00> : vector<64x128xf32>
    %87 = tpu.matmul %84, %86, %cst_65 {dimension_numbers = #tpu.dot_dimension_numbers<[1], [0], [0], [1], [0, 0, 1, 1], [], []>} : vector<64x128xbf16>, vector<128x128xbf16>, vector<64x128xf32> -> vector<64x128xf32>
    %88 = arith.addf %81, %87 : vector<64x128xf32>
    %89 = vector.extract_strided_slice %82 {offsets = [1, 0, 0], sizes = [8, 8, 128], strides = [1, 1, 1]} : vector<10x8x128xbf16> to vector<8x8x128xbf16>
    %90 = vector.shape_cast %89 : vector<8x8x128xbf16> to vector<64x128xbf16>
    %c3_66 = arith.constant 3 : index
    %c0_67 = arith.constant 0 : index
    %c0_68 = arith.constant 0 : index
    %91 = vector.load %arg4[%c3_66, %c0_67, %c0_68] : memref<9x128x128xbf16, #tpu.memory_space<vmem>>, vector<1x128x128xbf16>
    %92 = vector.shape_cast %91 : vector<1x128x128xbf16> to vector<128x128xbf16>
    %cst_69 = arith.constant dense<0.000000e+00> : vector<64x128xf32>
    %93 = tpu.matmul %90, %92, %cst_69 {dimension_numbers = #tpu.dot_dimension_numbers<[1], [0], [0], [1], [0, 0, 1, 1], [], []>} : vector<64x128xbf16>, vector<128x128xbf16>, vector<64x128xf32> -> vector<64x128xf32>
    %94 = arith.addf %88, %93 : vector<64x128xf32>
    %95 = vector.extract_strided_slice %82 {offsets = [2, 0, 0], sizes = [8, 8, 128], strides = [1, 1, 1]} : vector<10x8x128xbf16> to vector<8x8x128xbf16>
    %96 = vector.shape_cast %95 : vector<8x8x128xbf16> to vector<64x128xbf16>
    %c6_70 = arith.constant 6 : index
    %c0_71 = arith.constant 0 : index
    %c0_72 = arith.constant 0 : index
    %97 = vector.load %arg4[%c6_70, %c0_71, %c0_72] : memref<9x128x128xbf16, #tpu.memory_space<vmem>>, vector<1x128x128xbf16>
    %98 = vector.shape_cast %97 : vector<1x128x128xbf16> to vector<128x128xbf16>
    %cst_73 = arith.constant dense<0.000000e+00> : vector<64x128xf32>
    %99 = tpu.matmul %96, %98, %cst_73 {dimension_numbers = #tpu.dot_dimension_numbers<[1], [0], [0], [1], [0, 0, 1, 1], [], []>} : vector<64x128xbf16>, vector<128x128xbf16>, vector<64x128xf32> -> vector<64x128xf32>
    %100 = arith.addf %94, %99 : vector<64x128xf32>
    %101 = vector.extract_strided_slice %80 {offsets = [0, 1, 0], sizes = [10, 8, 128], strides = [1, 1, 1]} : vector<10x10x128xbf16> to vector<10x8x128xbf16>
    %102 = vector.extract_strided_slice %101 {offsets = [0, 0, 0], sizes = [8, 8, 128], strides = [1, 1, 1]} : vector<10x8x128xbf16> to vector<8x8x128xbf16>
    %103 = vector.shape_cast %102 : vector<8x8x128xbf16> to vector<64x128xbf16>
    %c1_74 = arith.constant 1 : index
    %c0_75 = arith.constant 0 : index
    %c0_76 = arith.constant 0 : index
    %104 = vector.load %arg4[%c1_74, %c0_75, %c0_76] : memref<9x128x128xbf16, #tpu.memory_space<vmem>>, vector<1x128x128xbf16>
    %105 = vector.shape_cast %104 : vector<1x128x128xbf16> to vector<128x128xbf16>
    %cst_77 = arith.constant dense<0.000000e+00> : vector<64x128xf32>
    %106 = tpu.matmul %103, %105, %cst_77 {dimension_numbers = #tpu.dot_dimension_numbers<[1], [0], [0], [1], [0, 0, 1, 1], [], []>} : vector<64x128xbf16>, vector<128x128xbf16>, vector<64x128xf32> -> vector<64x128xf32>
    %107 = arith.addf %100, %106 : vector<64x128xf32>
    %108 = vector.extract_strided_slice %101 {offsets = [1, 0, 0], sizes = [8, 8, 128], strides = [1, 1, 1]} : vector<10x8x128xbf16> to vector<8x8x128xbf16>
    %109 = vector.shape_cast %108 : vector<8x8x128xbf16> to vector<64x128xbf16>
    %c4_78 = arith.constant 4 : index
    %c0_79 = arith.constant 0 : index
    %c0_80 = arith.constant 0 : index
    %110 = vector.load %arg4[%c4_78, %c0_79, %c0_80] : memref<9x128x128xbf16, #tpu.memory_space<vmem>>, vector<1x128x128xbf16>
    %111 = vector.shape_cast %110 : vector<1x128x128xbf16> to vector<128x128xbf16>
    %cst_81 = arith.constant dense<0.000000e+00> : vector<64x128xf32>
    %112 = tpu.matmul %109, %111, %cst_81 {dimension_numbers = #tpu.dot_dimension_numbers<[1], [0], [0], [1], [0, 0, 1, 1], [], []>} : vector<64x128xbf16>, vector<128x128xbf16>, vector<64x128xf32> -> vector<64x128xf32>
    %113 = arith.addf %107, %112 : vector<64x128xf32>
    %114 = vector.extract_strided_slice %101 {offsets = [2, 0, 0], sizes = [8, 8, 128], strides = [1, 1, 1]} : vector<10x8x128xbf16> to vector<8x8x128xbf16>
    %115 = vector.shape_cast %114 : vector<8x8x128xbf16> to vector<64x128xbf16>
    %c7_82 = arith.constant 7 : index
    %c0_83 = arith.constant 0 : index
    %c0_84 = arith.constant 0 : index
    %116 = vector.load %arg4[%c7_82, %c0_83, %c0_84] : memref<9x128x128xbf16, #tpu.memory_space<vmem>>, vector<1x128x128xbf16>
    %117 = vector.shape_cast %116 : vector<1x128x128xbf16> to vector<128x128xbf16>
    %cst_85 = arith.constant dense<0.000000e+00> : vector<64x128xf32>
    %118 = tpu.matmul %115, %117, %cst_85 {dimension_numbers = #tpu.dot_dimension_numbers<[1], [0], [0], [1], [0, 0, 1, 1], [], []>} : vector<64x128xbf16>, vector<128x128xbf16>, vector<64x128xf32> -> vector<64x128xf32>
    %119 = arith.addf %113, %118 : vector<64x128xf32>
    %120 = vector.extract_strided_slice %80 {offsets = [0, 2, 0], sizes = [10, 8, 128], strides = [1, 1, 1]} : vector<10x10x128xbf16> to vector<10x8x128xbf16>
    %121 = vector.extract_strided_slice %120 {offsets = [0, 0, 0], sizes = [8, 8, 128], strides = [1, 1, 1]} : vector<10x8x128xbf16> to vector<8x8x128xbf16>
    %122 = vector.shape_cast %121 : vector<8x8x128xbf16> to vector<64x128xbf16>
    %c2_86 = arith.constant 2 : index
    %c0_87 = arith.constant 0 : index
    %c0_88 = arith.constant 0 : index
    %123 = vector.load %arg4[%c2_86, %c0_87, %c0_88] : memref<9x128x128xbf16, #tpu.memory_space<vmem>>, vector<1x128x128xbf16>
    %124 = vector.shape_cast %123 : vector<1x128x128xbf16> to vector<128x128xbf16>
    %cst_89 = arith.constant dense<0.000000e+00> : vector<64x128xf32>
    %125 = tpu.matmul %122, %124, %cst_89 {dimension_numbers = #tpu.dot_dimension_numbers<[1], [0], [0], [1], [0, 0, 1, 1], [], []>} : vector<64x128xbf16>, vector<128x128xbf16>, vector<64x128xf32> -> vector<64x128xf32>
    %126 = arith.addf %119, %125 : vector<64x128xf32>
    %127 = vector.extract_strided_slice %120 {offsets = [1, 0, 0], sizes = [8, 8, 128], strides = [1, 1, 1]} : vector<10x8x128xbf16> to vector<8x8x128xbf16>
    %128 = vector.shape_cast %127 : vector<8x8x128xbf16> to vector<64x128xbf16>
    %c5_90 = arith.constant 5 : index
    %c0_91 = arith.constant 0 : index
    %c0_92 = arith.constant 0 : index
    %129 = vector.load %arg4[%c5_90, %c0_91, %c0_92] : memref<9x128x128xbf16, #tpu.memory_space<vmem>>, vector<1x128x128xbf16>
    %130 = vector.shape_cast %129 : vector<1x128x128xbf16> to vector<128x128xbf16>
    %cst_93 = arith.constant dense<0.000000e+00> : vector<64x128xf32>
    %131 = tpu.matmul %128, %130, %cst_93 {dimension_numbers = #tpu.dot_dimension_numbers<[1], [0], [0], [1], [0, 0, 1, 1], [], []>} : vector<64x128xbf16>, vector<128x128xbf16>, vector<64x128xf32> -> vector<64x128xf32>
    %132 = arith.addf %126, %131 : vector<64x128xf32>
    %133 = vector.extract_strided_slice %120 {offsets = [2, 0, 0], sizes = [8, 8, 128], strides = [1, 1, 1]} : vector<10x8x128xbf16> to vector<8x8x128xbf16>
    %134 = vector.shape_cast %133 : vector<8x8x128xbf16> to vector<64x128xbf16>
    %c8_94 = arith.constant 8 : index
    %c0_95 = arith.constant 0 : index
    %c0_96 = arith.constant 0 : index
    %135 = vector.load %arg4[%c8_94, %c0_95, %c0_96] : memref<9x128x128xbf16, #tpu.memory_space<vmem>>, vector<1x128x128xbf16>
    %136 = vector.shape_cast %135 : vector<1x128x128xbf16> to vector<128x128xbf16>
    %cst_97 = arith.constant dense<0.000000e+00> : vector<64x128xf32>
    %137 = tpu.matmul %134, %136, %cst_97 {dimension_numbers = #tpu.dot_dimension_numbers<[1], [0], [0], [1], [0, 0, 1, 1], [], []>} : vector<64x128xbf16>, vector<128x128xbf16>, vector<64x128xf32> -> vector<64x128xf32>
    %138 = arith.addf %132, %137 : vector<64x128xf32>
    %139 = vector.shape_cast %79 : vector<128xf32> to vector<1x128xf32>
    %140 = vector.broadcast %139 : vector<1x128xf32> to vector<64x128xf32>
    %141 = arith.addf %138, %140 : vector<64x128xf32>
    %cst_98 = arith.constant 0.000000e+00 : f32
    %142 = vector.broadcast %cst_98 : f32 to vector<64x128xf32>
    %143 = arith.maximumf %141, %142 : vector<64x128xf32>
    %144 = arith.truncf %143 : vector<64x128xf32> to vector<64x128xbf16>
    %c0_99 = arith.constant 0 : index
    %c0_100 = arith.constant 0 : index
    %145 = vector.load %arg6[%c0_99, %c0_100] : memref<128x256xbf16, #tpu.memory_space<vmem>>, vector<128x256xbf16>
    %cst_101 = arith.constant dense<0.000000e+00> : vector<64x256xf32>
    %146 = tpu.matmul %144, %145, %cst_101 {dimension_numbers = #tpu.dot_dimension_numbers<[1], [0], [0], [1], [0, 0, 1, 1], [], []>} : vector<64x128xbf16>, vector<128x256xbf16>, vector<64x256xf32> -> vector<64x256xf32>
    %c0_102 = arith.constant 0 : index
    %c0_103 = arith.constant 0 : index
    %147 = vector.load %arg7[%c0_102, %c0_103] : memref<1x256xf32, #tpu.memory_space<vmem>>, vector<1x256xf32>
    %148 = vector.shape_cast %147 : vector<1x256xf32> to vector<256xf32>
    %149 = vector.shape_cast %148 : vector<256xf32> to vector<1x256xf32>
    %150 = vector.broadcast %149 : vector<1x256xf32> to vector<64x256xf32>
    %151 = arith.addf %146, %150 : vector<64x256xf32>
    %152 = vector.extract_strided_slice %151 {offsets = [0, 0], sizes = [64, 128], strides = [1, 1]} : vector<64x256xf32> to vector<64x128xf32>
    %153 = vector.extract_strided_slice %151 {offsets = [0, 128], sizes = [64, 8], strides = [1, 1]} : vector<64x256xf32> to vector<64x8xf32>
    %cst_104 = arith.constant dense<0xFF800000> : vector<64xf32>
    %154 = vector.multi_reduction <maximumf>, %153, %cst_104 [1] : vector<64x8xf32> to vector<64xf32>
    %155 = vector.shape_cast %154 : vector<64xf32> to vector<64x1xf32>
    %156 = vector.broadcast %155 : vector<64x1xf32> to vector<64x8xf32>
    %157 = arith.subf %153, %156 : vector<64x8xf32>
    %158 = math.exp %157 : vector<64x8xf32>
    %cst_105 = arith.constant dense<0.000000e+00> : vector<64xf32>
    %159 = vector.multi_reduction <add>, %158, %cst_105 [1] : vector<64x8xf32> to vector<64xf32>
    %160 = vector.shape_cast %159 : vector<64xf32> to vector<64x1xf32>
    %161 = tpu.reciprocal %160 {approx = true} : vector<64x1xf32> -> vector<64x1xf32>
    %162 = vector.broadcast %161 : vector<64x1xf32> to vector<64x8xf32>
    %163 = arith.mulf %158, %162 : vector<64x8xf32>
    %c0_106 = arith.constant 0 : index
    %c0_107 = arith.constant 0 : index
    %164 = vector.load %arg8[%c0_106, %c0_107] : memref<8x128xf32, #tpu.memory_space<vmem>>, vector<8x128xf32>
    %cst_108 = arith.constant dense<0.000000e+00> : vector<64x128xf32>
    %165 = tpu.matmul %163, %164, %cst_108 {dimension_numbers = #tpu.dot_dimension_numbers<[1], [0], [0], [1], [0, 0, 1, 1], [], []>} : vector<64x8xf32>, vector<8x128xf32>, vector<64x128xf32> -> vector<64x128xf32>
    %166 = arith.mulf %165, %152 : vector<64x128xf32>
    %c0_109 = arith.constant 0 : index
    %c0_110 = arith.constant 0 : index
    %c0_111 = arith.constant 0 : index
    %167 = vector.load %arg9[%c0_109, %c0_110, %c0_111] : memref<1x64x128xf32, #tpu.memory_space<vmem>>, vector<1x64x128xf32>
    %168 = vector.shape_cast %167 : vector<1x64x128xf32> to vector<64x128xf32>
    %169 = vector.shape_cast %166 : vector<64x128xf32> to vector<1x64x128xf32>
    tpu.vector_store %arg9[%c0_109, %c0_110, %c0_111], %169 {strides = array<i32>} : memref<1x64x128xf32, #tpu.memory_space<vmem>>, vector<1x64x128xf32>,
    return
  }
  func.func @transform_0(%arg0: i32) -> (i32, i32, i32, i32) {
    %c0_i32 = arith.constant 0 : i32
    %c0_i32_0 = arith.constant 0 : i32
    %c0_i32_1 = arith.constant 0 : i32
    %c0_i32_2 = arith.constant 0 : i32
    return %arg0, %c0_i32, %c0_i32_0, %c0_i32_1 : i32, i32, i32, i32
  }
  func.func @transform_1(%arg0: i32) -> (i32, i32, i32) {
    %c0_i32 = arith.constant 0 : i32
    %c0_i32_0 = arith.constant 0 : i32
    %c0_i32_1 = arith.constant 0 : i32
    %c0_i32_2 = arith.constant 0 : i32
    return %c0_i32, %c0_i32_0, %c0_i32_1 : i32, i32, i32
  }
  func.func @transform_2(%arg0: i32) -> (i32, i32) {
    %c0_i32 = arith.constant 0 : i32
    %c0_i32_0 = arith.constant 0 : i32
    %c0_i32_1 = arith.constant 0 : i32
    return %c0_i32, %c0_i32_0 : i32, i32
  }
  func.func @transform_3(%arg0: i32) -> (i32, i32, i32) {
    %c0_i32 = arith.constant 0 : i32
    %c0_i32_0 = arith.constant 0 : i32
    %c0_i32_1 = arith.constant 0 : i32
    %c0_i32_2 = arith.constant 0 : i32
    return %c0_i32, %c0_i32_0, %c0_i32_1 : i32, i32, i32
  }
  func.func @transform_4(%arg0: i32) -> (i32, i32) {
    %c0_i32 = arith.constant 0 : i32
    %c0_i32_0 = arith.constant 0 : i32
    %c0_i32_1 = arith.constant 0 : i32
    return %c0_i32, %c0_i32_0 : i32, i32
  }
  func.func @transform_5(%arg0: i32) -> (i32, i32) {
    %c0_i32 = arith.constant 0 : i32
    %c0_i32_0 = arith.constant 0 : i32
    %c0_i32_1 = arith.constant 0 : i32
    return %c0_i32, %c0_i32_0 : i32, i32
  }
  func.func @transform_6(%arg0: i32) -> (i32, i32) {
    %c0_i32 = arith.constant 0 : i32
    %c0_i32_0 = arith.constant 0 : i32
    %c0_i32_1 = arith.constant 0 : i32
    return %c0_i32, %c0_i32_0 : i32, i32
  }
  func.func @transform_7(%arg0: i32) -> (i32, i32) {
    %c0_i32 = arith.constant 0 : i32
    %c0_i32_0 = arith.constant 0 : i32
    %c0_i32_1 = arith.constant 0 : i32
    return %c0_i32, %c0_i32_0 : i32, i32
  }
  func.func @transform_8(%arg0: i32) -> (i32, i32, i32) {
    %c0_i32 = arith.constant 0 : i32
    %c0_i32_0 = arith.constant 0 : i32
    %c0_i32_1 = arith.constant 0 : i32
    return %arg0, %c0_i32, %c0_i32_0 : i32, i32, i32
  }
}

</mosaic_0001>

<llo_original>
// kernel: cam_encode_forward.1
$region0: #{cam_encode_forward.1}
  #allocation0 [shape = 'u32[]', space=smem, size = 0x4, offset = 0x4, fixed_abs, tag = 'smem constant byte address 0x4 - core index']
  #allocation1 [shape = 'u32[144,128]{1,0:T(1,128)}', space=vmem, size = 0x12000, scoped, tag = 'internal scratch']
  #allocation2 [shape = 'bf16[10,10,128]{2,1,0:T(8,128)(2,1)}', space=vmem, size = 0xa000, scoped, tag = 'scratch operand']
  %s0 = inlined_call_operand.hbm [shape: bf16[2,8,8,128], index: 0, kind: input, shape index: {}]
  %s1 = inlined_call_operand.hbm [shape: bf16[9,128,128], index: 1, kind: input, shape index: {}]
  %s2 = inlined_call_operand.hbm [shape: f32[1,128], index: 2, kind: input, shape index: {}]
  %s3 = inlined_call_operand.hbm [shape: bf16[9,128,128], index: 3, kind: input, shape index: {}]
  %s4 = inlined_call_operand.hbm [shape: f32[1,128], index: 4, kind: input, shape index: {}]
  %s5 = inlined_call_operand.hbm [shape: bf16[128,256], index: 5, kind: input, shape index: {}]
  %s6 = inlined_call_operand.hbm [shape: f32[1,256], index: 6, kind: input, shape index: {}]
  %s7 = inlined_call_operand.hbm [shape: f32[8,128], index: 7, kind: input, shape index: {}]
  %s8 = inlined_call_operand.hbm [shape: f32[2,64,128], index: 8, kind: output, shape index: {}]
  %s9 = sld [smem:[#allocation0]]
  $region97: #{cam_encode_forward.1} parent=0
    _
  %s11 = ssub.s32 1, %s9
  %s12 = scalar_select 0, %s11, %s9
  $region1: #{cam_encode_forward.1} parent=0
    #allocation3 [shape = 'u8[32768]{0}', space=vmem, size = 0x8000, scoped, tag = 'input window, operand 0']
    #allocation4 [shape = 's32[2]{0}', space=sflag, size = 0x8, scoped, tag = 'scoped memory for cam_encode_forward.1']
    #allocation5 [shape = 's32[2]{0}', space=sflag, size = 0x8, scoped, tag = 'scoped memory for cam_encode_forward.1']
    #allocation6 [shape = 'u8[294912]{0}', space=vmem, size = 0x48000, scoped, tag = 'input window, operand 1, single buffered']
    #allocation7 [shape = 's32[1]{0}', space=sflag, size = 0x4, scoped, tag = 'scoped memory for cam_encode_forward.1']
    #allocation8 [shape = 'u8[512]{0}', space=vmem, size = 0x400, scoped, tag = 'input window, operand 2, single buffered']
    #allocation9 [shape = 'u8[294912]{0}', space=vmem, size = 0x48000, scoped, tag = 'input window, operand 3, single buffered']
    #allocation10 [shape = 's32[1]{0}', space=sflag, size = 0x4, scoped, tag = 'scoped memory for cam_encode_forward.1']
    #allocation11 [shape = 'u8[512]{0}', space=vmem, size = 0x400, scoped, tag = 'input window, operand 4, single buffered']
    #allocation12 [shape = 'u8[65536]{0}', space=vmem, size = 0x10000, scoped, tag = 'input window, operand 5, single buffered']
    #allocation13 [shape = 's32[1]{0}', space=sflag, size = 0x4, scoped, tag = 'scoped memory for cam_encode_forward.1']
    #allocation14 [shape = 'u8[1024]{0}', space=vmem, size = 0x400, scoped, tag = 'input window, operand 6, single buffered']
    #allocation15 [shape = 'u8[4096]{0}', space=vmem, size = 0x1000, scoped, tag = 'input window, operand 7, single buffered']
    #allocation16 [shape = 's32[1]{0}', space=sflag, size = 0x4, scoped, tag = 'scoped memory for cam_encode_forward.1']
    #allocation17 [shape = 'u8[65536]{0}', space=vmem, size = 0x10000, scoped, tag = 'output window, operand 0']
    %13 = vsyncpa [#allocation4], 0
    %s14 = scalar_lea.sflag [#allocation4], 1
    %15 = vsyncpa %s14, 0
    %16 = vsyncpa [#allocation7], 0
    %17 = vsyncpa [#allocation10], 0
    %18 = vsyncpa [#allocation13], 0
    %19 = vsyncpa [#allocation16], 0
    %20 = vsyncpa [#allocation5], 0
    %s21 = scalar_lea.sflag [#allocation5], 1
    %22 = vsyncpa %s21, 0
    loop: start=0, step=1, limit=4
    $region2: #{cam_encode_forward.1} parent=1 // loop_pre_header
      _
    $region3: #{cam_encode_forward.1} parent=1 // loop_header
      %s24 = sphi 0, %s28
      %p25 = scmp.ge.s32.totalorder %s24, 4
      %s34 = sphi 0, %s36
      %s37 = sphi 0, %s34
      %s38 = sphi 0, %s37
      %s54 = sphi 0, %s38
      %s58 = sphi 0, %s58
      %s60 = sphi 0, %s58
      %s61 = sphi 0, %s60
      %s75 = sphi 0, %s61
      %s79 = sphi 0, %s79
      %s81 = sphi 0, %s79
      %s82 = sphi 0, %s81
      %s96 = sphi 0, %s82
      %s100 = sphi 0, %s100
      %s102 = sphi 0, %s100
      %s103 = sphi 0, %s102
      %s117 = sphi 0, %s103
      %s121 = sphi 0, %s121
      %s123 = sphi 0, %s121
      %s124 = sphi 0, %s123
      %s138 = sphi 0, %s124
      %s142 = sphi 0, %s142
      %s144 = sphi 0, %s142
      %s145 = sphi 0, %s144
      %s159 = sphi 0, %s145
      %s163 = sphi 0, %s163
      %s165 = sphi 0, %s163
      %s166 = sphi 0, %s165
      %s180 = sphi 0, %s166
      %s184 = sphi 0, %s184
      %s186 = sphi 0, %s184
      %s187 = sphi 0, %s186
      %s201 = sphi 0, %s187
      %s207 = sphi 0, %s209
      %s210 = sphi 0, %s207
      %s211 = sphi 0, %s210
      %s227 = sphi 0, %s211
    $region4: #{cam_encode_forward.1} parent=1 // loop_header_branch
      %27 = sbr.rel (%p25) target = $region8
    $region5: #{cam_encode_forward.1} parent=1 // loop_body
      %s29 = ssub.s32 %s24, 1
      %s30 = ssub.s32 %s24, 2
      %s31 = sadd.s32 %s24, 1
      %s32 = ssub.s32 %s24, %s31
      %p33 = scmp.eq.s32.totalorder %s32, 0
      %s35 = sadd.s32 %s34, 1
      %s36 = scalar_select %p33, %s34, %s35
      %p39 = pneg %p33
      %p40 = scmp.eq.s32.totalorder %s24, 1
      %p41 = por %p39, %p40
      %p42 = scmp.ne.s32.totalorder %s34, %s37
      %p43 = scmp.eq.s32.totalorder %s24, 0
      %p44 = por %p42, %p43
      %p45 = scmp.ne.s32.totalorder %s34, %s37
      %p46 = scmp.eq.s32.totalorder %s29, 1
      %p47 = por %p45, %p46
      %p48 = scmp.ne.s32.totalorder %s37, %s38
      %p49 = scmp.eq.s32.totalorder %s29, 0
      %p50 = por %p48, %p49
      %p51 = scmp.ne.s32.totalorder %s37, %s38
      %p52 = scmp.eq.s32.totalorder %s30, 1
      %p53 = por %p51, %p52
      %p55 = scmp.ne.s32.totalorder %s38, %s54
      %p56 = scmp.eq.s32.totalorder %s30, 0
      %p57 = por %p55, %p56
      %s59 = sadd.s32 %s58, 1
      %p62 = scmp.eq.s32.totalorder %s24, 1
      %p63 = scmp.ne.s32.totalorder %s58, %s60
      %p64 = scmp.eq.s32.totalorder %s24, 0
      %p65 = por %p63, %p64
      %p66 = scmp.ne.s32.totalorder %s58, %s60
      %p67 = scmp.eq.s32.totalorder %s29, 1
      %p68 = por %p66, %p67
      %p69 = scmp.ne.s32.totalorder %s60, %s61
      %p70 = scmp.eq.s32.totalorder %s29, 0
      %p71 = por %p69, %p70
      %p72 = scmp.ne.s32.totalorder %s60, %s61
      %p73 = scmp.eq.s32.totalorder %s30, 1
      %p74 = por %p72, %p73
      %p76 = scmp.ne.s32.totalorder %s61, %s75
      %p77 = scmp.eq.s32.totalorder %s30, 0
      %p78 = por %p76, %p77
      %s80 = sadd.s32 %s79, 1
      %p83 = scmp.eq.s32.totalorder %s24, 1
      %p84 = scmp.ne.s32.totalorder %s79, %s81
      %p85 = scmp.eq.s32.totalorder %s24, 0
      %p86 = por %p84, %p85
      %p87 = scmp.ne.s32.totalorder %s79, %s81
      %p88 = scmp.eq.s32.totalorder %s29, 1
      %p89 = por %p87, %p88
      %p90 = scmp.ne.s32.totalorder %s81, %s82
      %p91 = scmp.eq.s32.totalorder %s29, 0
      %p92 = por %p90, %p91
      %p93 = scmp.ne.s32.totalorder %s81, %s82
      %p94 = scmp.eq.s32.totalorder %s30, 1
      %p95 = por %p93, %p94
      %p97 = scmp.ne.s32.totalorder %s82, %s96
      %p98 = scmp.eq.s32.totalorder %s30, 0
      %p99 = por %p97, %p98
      %s101 = sadd.s32 %s100, 1
      %p104 = scmp.eq.s32.totalorder %s24, 1
      %p105 = scmp.ne.s32.totalorder %s100, %s102
      %p106 = scmp.eq.s32.totalorder %s24, 0
      %p107 = por %p105, %p106
      %p108 = scmp.ne.s32.totalorder %s100, %s102
      %p109 = scmp.eq.s32.totalorder %s29, 1
      %p110 = por %p108, %p109
      %p111 = scmp.ne.s32.totalorder %s102, %s103
      %p112 = scmp.eq.s32.totalorder %s29, 0
      %p113 = por %p111, %p112
      %p114 = scmp.ne.s32.totalorder %s102, %s103
      %p115 = scmp.eq.s32.totalorder %s30, 1
      %p116 = por %p114, %p115
      %p118 = scmp.ne.s32.totalorder %s103, %s117
      %p119 = scmp.eq.s32.totalorder %s30, 0
      %p120 = por %p118, %p119
      %s122 = sadd.s32 %s121, 1
      %p125 = scmp.eq.s32.totalorder %s24, 1
      %p126 = scmp.ne.s32.totalorder %s121, %s123
      %p127 = scmp.eq.s32.totalorder %s24, 0
      %p128 = por %p126, %p127
      %p129 = scmp.ne.s32.totalorder %s121, %s123
      %p130 = scmp.eq.s32.totalorder %s29, 1
      %p131 = por %p129, %p130
      %p132 = scmp.ne.s32.totalorder %s123, %s124
      %p133 = scmp.eq.s32.totalorder %s29, 0
      %p134 = por %p132, %p133
      %p135 = scmp.ne.s32.totalorder %s123, %s124
      %p136 = scmp.eq.s32.totalorder %s30, 1
      %p137 = por %p135, %p136
      %p139 = scmp.ne.s32.totalorder %s124, %s138
      %p140 = scmp.eq.s32.totalorder %s30, 0
      %p141 = por %p139, %p140
      %s143 = sadd.s32 %s142, 1
      %p146 = scmp.eq.s32.totalorder %s24, 1
      %p147 = scmp.ne.s32.totalorder %s142, %s144
      %p148 = scmp.eq.s32.totalorder %s24, 0
      %p149 = por %p147, %p148
      %p150 = scmp.ne.s32.totalorder %s142, %s144
      %p151 = scmp.eq.s32.totalorder %s29, 1
      %p152 = por %p150, %p151
      %p153 = scmp.ne.s32.totalorder %s144, %s145
      %p154 = scmp.eq.s32.totalorder %s29, 0
      %p155 = por %p153, %p154
      %p156 = scmp.ne.s32.totalorder %s144, %s145
      %p157 = scmp.eq.s32.totalorder %s30, 1
      %p158 = por %p156, %p157
      %p160 = scmp.ne.s32.totalorder %s145, %s159
      %p161 = scmp.eq.s32.totalorder %s30, 0
      %p162 = por %p160, %p161
      %s164 = sadd.s32 %s163, 1
      %p167 = scmp.eq.s32.totalorder %s24, 1
      %p168 = scmp.ne.s32.totalorder %s163, %s165
      %p169 = scmp.eq.s32.totalorder %s24, 0
      %p170 = por %p168, %p169
      %p171 = scmp.ne.s32.totalorder %s163, %s165
      %p172 = scmp.eq.s32.totalorder %s29, 1
      %p173 = por %p171, %p172
      %p174 = scmp.ne.s32.totalorder %s165, %s166
      %p175 = scmp.eq.s32.totalorder %s29, 0
      %p176 = por %p174, %p175
      %p177 = scmp.ne.s32.totalorder %s165, %s166
      %p178 = scmp.eq.s32.totalorder %s30, 1
      %p179 = por %p177, %p178
      %p181 = scmp.ne.s32.totalorder %s166, %s180
      %p182 = scmp.eq.s32.totalorder %s30, 0
      %p183 = por %p181, %p182
      %s185 = sadd.s32 %s184, 1
      %p188 = scmp.eq.s32.totalorder %s24, 1
      %p189 = scmp.ne.s32.totalorder %s184, %s186
      %p190 = scmp.eq.s32.totalorder %s24, 0
      %p191 = por %p189, %p190
      %p192 = scmp.ne.s32.totalorder %s184, %s186
      %p193 = scmp.eq.s32.totalorder %s29, 1
      %p194 = por %p192, %p193
      %p195 = scmp.ne.s32.totalorder %s186, %s187
      %p196 = scmp.eq.s32.totalorder %s29, 0
      %p197 = por %p195, %p196
      %p198 = scmp.ne.s32.totalorder %s186, %s187
      %p199 = scmp.eq.s32.totalorder %s30, 1
      %p200 = por %p198, %p199
      %p202 = scmp.ne.s32.totalorder %s187, %s201
      %p203 = scmp.eq.s32.totalorder %s30, 0
      %p204 = por %p202, %p203
      %s205 = ssub.s32 %s24, %s31
      %p206 = scmp.eq.s32.totalorder %s205, 0
      %s208 = sadd.s32 %s207, 1
      %s209 = scalar_select %p206, %s207, %s208
      %p212 = pneg %p206
      %p213 = scmp.eq.s32.totalorder %s24, 1
      %p214 = por %p212, %p213
      %p215 = scmp.ne.s32.totalorder %s207, %s210
      %p216 = scmp.eq.s32.totalorder %s24, 0
      %p217 = por %p215, %p216
      %p218 = scmp.ne.s32.totalorder %s207, %s210
      %p219 = scmp.eq.s32.totalorder %s29, 1
      %p220 = por %p218, %p219
      %p221 = scmp.ne.s32.totalorder %s210, %s211
      %p222 = scmp.eq.s32.totalorder %s29, 0
      %p223 = por %p221, %p222
      %p224 = scmp.ne.s32.totalorder %s210, %s211
      %p225 = scmp.eq.s32.totalorder %s30, 1
      %p226 = por %p224, %p225
      %p228 = scmp.ne.s32.totalorder %s211, %s227
      %p229 = scmp.eq.s32.totalorder %s30, 0
      %p230 = por %p228, %p229
      %p231 = scmp.le.s32.totalorder 1, %s24
      %p232 = scmp.lt.s32.totalorder %s24, 3
      %p233 = pnand %p231, %p232
      %p234 = pneg %p233
      // Predicated region
      $region9: #{cam_encode_forward.1} parent=5 // pred_check
        _
      $region10: #{cam_encode_forward.1} parent=5 // pred_check_branch
        %236 = sbr.rel (%p233) target = $region12
      $region11: #{cam_encode_forward.1} parent=5 // pred_region
        %s237 = ssub.s32 %s24, 1
        // Predicated region
        $region13: #{cam_encode_forward.1} parent=11 // pred_check
          %p238 = pneg %p71
        $region14: #{cam_encode_forward.1} parent=11 // pred_check_branch
          %240 = sbr.rel (%p238) target = $region16
        $region15: #{cam_encode_forward.1} parent=11 // pred_region
          %s242 = ssub.s32 9216, 9216
          %243 = vsyncadd [#allocation7], %s242
          %s244 = sshll.u32 [#allocation6], 4
          %s245 = int_to_ptr.vmem [resolvable:$true] %s244
          %250 = dma.hbm_to_vmem [thread:$0]  %s1, 9216, %s245, [#allocation7], 64, 64, 4
        $region16: #{cam_encode_forward.1} parent=11 // pred_fallthru
          _
        // Predicated region
        $region17: #{cam_encode_forward.1} parent=11 // pred_check
          %p251 = pneg %p92
        $region18: #{cam_encode_forward.1} parent=11 // pred_check_branch
          %253 = sbr.rel (%p251) target = $region20
        $region19: #{cam_encode_forward.1} parent=11 // pred_region
          %s255 = ssub.s32 16, 16
          %256 = vsyncadd [#allocation7], %s255
          %s258 = sshll.u32 [#allocation8], 4
          %s259 = int_to_ptr.vmem [resolvable:$true] %s258
          %261 = dma.hbm_to_vmem [thread:$0]  %s2, 16, %s259, [#allocation7]
        $region20: #{cam_encode_forward.1} parent=11 // pred_fallthru
          _
        // Predicated region
        $region21: #{cam_encode_forward.1} parent=11 // pred_check
          %p262 = pneg %p113
        $region22: #{cam_encode_forward.1} parent=11 // pred_check_branch
          %264 = sbr.rel (%p262) target = $region24
        $region23: #{cam_encode_forward.1} parent=11 // pred_region
          %s266 = ssub.s32 9216, 9216
          %267 = vsyncadd [#allocation10], %s266
          %s268 = sshll.u32 [#allocation9], 4
          %s269 = int_to_ptr.vmem [resolvable:$true] %s268
          %274 = dma.hbm_to_vmem [thread:$0]  %s3, 9216, %s269, [#allocation10], 64, 64, 4
        $region24: #{cam_encode_forward.1} parent=11 // pred_fallthru
          _
        // Predicated region
        $region25: #{cam_encode_forward.1} parent=11 // pred_check
          %p275 = pneg %p134
        $region26: #{cam_encode_forward.1} parent=11 // pred_check_branch
          %277 = sbr.rel (%p275) target = $region28
        $region27: #{cam_encode_forward.1} parent=11 // pred_region
          %s279 = ssub.s32 16, 16
          %280 = vsyncadd [#allocation10], %s279
          %s282 = sshll.u32 [#allocation11], 4
          %s283 = int_to_ptr.vmem [resolvable:$true] %s282
          %285 = dma.hbm_to_vmem [thread:$0]  %s4, 16, %s283, [#allocation10]
        $region28: #{cam_encode_forward.1} parent=11 // pred_fallthru
          _
        // Predicated region
        $region29: #{cam_encode_forward.1} parent=11 // pred_check
          %p286 = pneg %p155
        $region30: #{cam_encode_forward.1} parent=11 // pred_check_branch
          %288 = sbr.rel (%p286) target = $region32
        $region31: #{cam_encode_forward.1} parent=11 // pred_region
          %s290 = ssub.s32 2048, 2048
          %291 = vsyncadd [#allocation13], %s290
          %s292 = sshll.u32 [#allocation12], 4
          %s293 = int_to_ptr.vmem [resolvable:$true] %s292
          %298 = dma.hbm_to_vmem [thread:$0]  %s5, 2048, %s293, [#allocation13], 128, 128, 8
        $region32: #{cam_encode_forward.1} parent=11 // pred_fallthru
          _
        // Predicated region
        $region33: #{cam_encode_forward.1} parent=11 // pred_check
          %p299 = pneg %p176
        $region34: #{cam_encode_forward.1} parent=11 // pred_check_branch
          %301 = sbr.rel (%p299) target = $region36
        $region35: #{cam_encode_forward.1} parent=11 // pred_region
          %s303 = ssub.s32 32, 32
          %304 = vsyncadd [#allocation13], %s303
          %s306 = sshll.u32 [#allocation14], 4
          %s307 = int_to_ptr.vmem [resolvable:$true] %s306
          %309 = dma.hbm_to_vmem [thread:$0]  %s6, 32, %s307, [#allocation13]
        $region36: #{cam_encode_forward.1} parent=11 // pred_fallthru
          _
        // Predicated region
        $region37: #{cam_encode_forward.1} parent=11 // pred_check
          %p310 = pneg %p197
        $region38: #{cam_encode_forward.1} parent=11 // pred_check_branch
          %312 = sbr.rel (%p310) target = $region40
        $region39: #{cam_encode_forward.1} parent=11 // pred_region
          %s314 = ssub.s32 128, 128
          %315 = vsyncadd [#allocation16], %s314
          %s317 = sshll.u32 [#allocation15], 4
          %s318 = int_to_ptr.vmem [resolvable:$true] %s317
          %320 = dma.hbm_to_vmem [thread:$0]  %s7, 128, %s318, [#allocation16]
        $region40: #{cam_encode_forward.1} parent=11 // pred_fallthru
          _
      $region12: #{cam_encode_forward.1} parent=5 // pred_fallthru
        _
      %p321 = scmp.lt.s32.totalorder %s24, 2
      // Predicated region
      $region41: #{cam_encode_forward.1} parent=5 // pred_check
        %p322 = pneg %p321
      $region42: #{cam_encode_forward.1} parent=5 // pred_check_branch
        %324 = sbr.rel (%p322) target = $region44
      $region43: #{cam_encode_forward.1} parent=5 // pred_region
        // Predicated region
        $region45: #{cam_encode_forward.1} parent=43 // pred_check
          %p325 = pneg %p44
        $region46: #{cam_encode_forward.1} parent=43 // pred_check_branch
          %327 = sbr.rel (%p325) target = $region48
        $region47: #{cam_encode_forward.1} parent=43 // pred_region
          %s328 = sand.u32 %s34, 1
          %s329 = scalar_lea.sflag [#allocation4], %s328
          %s330 = sand.u32 %s34, 1
          %s331 = smul.addr %s330, 32
          %s332 = scalar_lea.vmem [#allocation3], %s331
          %s334 = ssub.s32 512, 512
          %335 = vsyncadd %s329, %s334
          %s336 = smul.addr %s24, 8
          %s337 = smul.addr %s336, 64
          %s338 = scalar_lea.hbm %s0, %s337
          %s339 = sshll.u32 %s332, 4
          %s340 = int_to_ptr.vmem [resolvable:$true] %s339
          %345 = dma.hbm_to_vmem [thread:$0]  %s338, 512, %s340, %s329, 64, 64, 4
        $region48: #{cam_encode_forward.1} parent=43 // pred_fallthru
          _
      $region44: #{cam_encode_forward.1} parent=5 // pred_fallthru
        _
      %p346 = scmp.le.s32.totalorder 1, %s24
      %p347 = scmp.lt.s32.totalorder %s24, 3
      %p348 = pnand %p346, %p347
      %p349 = pneg %p348
      // Predicated region
      $region49: #{cam_encode_forward.1} parent=5 // pred_check
        _
      $region50: #{cam_encode_forward.1} parent=5 // pred_check_branch
        %351 = sbr.rel (%p348) target = $region52
      $region51: #{cam_encode_forward.1} parent=5 // pred_region
        %s352 = ssub.s32 %s24, 1
        %s353 = sand.u32 %s37, 1
        %s354 = scalar_lea.sflag [#allocation4], %s353
        %s355 = sand.u32 %s37, 1
        %s356 = smul.addr %s355, 32
        %s357 = scalar_lea.vmem [#allocation3], %s356
        // Predicated region
        $region53: #{cam_encode_forward.1} parent=51 // pred_check
          %p358 = pneg %p50
        $region54: #{cam_encode_forward.1} parent=51 // pred_check_branch
          %360 = sbr.rel (%p358) target = $region56
        $region55: #{cam_encode_forward.1} parent=51 // pred_region
          %361 = dma.done %s354, 512
        $region56: #{cam_encode_forward.1} parent=51 // pred_fallthru
          _
        // Predicated region
        $region57: #{cam_encode_forward.1} parent=51 // pred_check
          %p362 = pneg %p71
        $region58: #{cam_encode_forward.1} parent=51 // pred_check_branch
          %364 = sbr.rel (%p362) target = $region60
        $region59: #{cam_encode_forward.1} parent=51 // pred_region
          %365 = dma.done [#allocation7], 9216
        $region60: #{cam_encode_forward.1} parent=51 // pred_fallthru
          _
        // Predicated region
        $region61: #{cam_encode_forward.1} parent=51 // pred_check
          %p366 = pneg %p92
        $region62: #{cam_encode_forward.1} parent=51 // pred_check_branch
          %368 = sbr.rel (%p366) target = $region64
        $region63: #{cam_encode_forward.1} parent=51 // pred_region
          %369 = dma.done [#allocation7], 16
        $region64: #{cam_encode_forward.1} parent=51 // pred_fallthru
          _
        // Predicated region
        $region65: #{cam_encode_forward.1} parent=51 // pred_check
          %p370 = pneg %p113
        $region66: #{cam_encode_forward.1} parent=51 // pred_check_branch
          %372 = sbr.rel (%p370) target = $region68
        $region67: #{cam_encode_forward.1} parent=51 // pred_region
          %373 = dma.done [#allocation10], 9216
        $region68: #{cam_encode_forward.1} parent=51 // pred_fallthru
          _
        // Predicated region
        $region69: #{cam_encode_forward.1} parent=51 // pred_check
          %p374 = pneg %p134
        $region70: #{cam_encode_forward.1} parent=51 // pred_check_branch
          %376 = sbr.rel (%p374) target = $region72
        $region71: #{cam_encode_forward.1} parent=51 // pred_region
          %377 = dma.done [#allocation10], 16
        $region72: #{cam_encode_forward.1} parent=51 // pred_fallthru
          _
        // Predicated region
        $region73: #{cam_encode_forward.1} parent=51 // pred_check
          %p378 = pneg %p155
        $region74: #{cam_encode_forward.1} parent=51 // pred_check_branch
          %380 = sbr.rel (%p378) target = $region76
        $region75: #{cam_encode_forward.1} parent=51 // pred_region
          %381 = dma.done [#allocation13], 2048
        $region76: #{cam_encode_forward.1} parent=51 // pred_fallthru
          _
        // Predicated region
        $region77: #{cam_encode_forward.1} parent=51 // pred_check
          %p382 = pneg %p176
        $region78: #{cam_encode_forward.1} parent=51 // pred_check_branch
          %384 = sbr.rel (%p382) target = $region80
        $region79: #{cam_encode_forward.1} parent=51 // pred_region
          %385 = dma.done [#allocation13], 32
        $region80: #{cam_encode_forward.1} parent=51 // pred_fallthru
          _
        // Predicated region
        $region81: #{cam_encode_forward.1} parent=51 // pred_check
          %p386 = pneg %p197
        $region82: #{cam_encode_forward.1} parent=51 // pred_check_branch
          %388 = sbr.rel (%p386) target = $region84
        $region83: #{cam_encode_forward.1} parent=51 // pred_region
          %389 = dma.done [#allocation16], 128
        $region84: #{cam_encode_forward.1} parent=51 // pred_fallthru
          _
        %s390 = sand.u32 %s37, 1
        %s391 = scalar_lea.sflag [#allocation4], %s390
        %s392 = sand.u32 %s37, 1
        %s393 = smul.addr %s392, 32
        %s394 = scalar_lea.vmem [#allocation3], %s393
        %p395 = pneg %p50
        %p396 = pneg %p47
        %p397 = pneg %p71
        %p398 = pneg %p68
        %p399 = pneg %p92
        %p400 = pneg %p89
        %p401 = pneg %p113
        %p402 = pneg %p110
        %p403 = pneg %p134
        %p404 = pneg %p131
        %p405 = pneg %p155
        %p406 = pneg %p152
        %p407 = pneg %p176
        %p408 = pneg %p173
        %p409 = pneg %p197
        %p410 = pneg %p194
        %p411 = pneg %p223
        %p412 = pneg %p220
        %s413 = sand.u32 %s210, 1
        %s414 = scalar_lea.sflag [#allocation5], %s413
        %s415 = sand.u32 %s210, 1
        %s416 = smul.addr %s415, 64
        %s417 = scalar_lea.vmem [#allocation17], %s416
        %419 = vst [vmem:[#allocation2] sm:$0xf] 0
        %420 = vst [vmem:[#allocation2 + $0x4] sm:$0x1] 0
        %s421 = scalar_lea.vmem [#allocation2], 72
        %422 = vst [vmem:[%s421] sm:$0xf] 0
        %423 = vst [vmem:[%s421 + $0x4] sm:$0x1] 0
        %s424 = scalar_lea.vmem [#allocation2], 8
        %vm425 = vcmask 1040384
        %vm426 = vsmask.f32 256
        %vm427 = vmand %vm425, %vm426
        %v428 = vld [vmem:[%s424] sm:$0x1]
        %v429 = vsel %vm427, 0, %v428
        %430 = vst [vmem:[%s424] sm:$0x1] %v429
        %v431 = vld [vmem:[%s424 + $0x8] sm:$0x1]
        %v432 = vsel %vm427, 0, %v431
        %433 = vst [vmem:[%s424 + $0x8] sm:$0x1] %v432
        %v434 = vld [vmem:[%s424 + $0x10] sm:$0x1]
        %v435 = vsel %vm427, 0, %v434
        %436 = vst [vmem:[%s424 + $0x10] sm:$0x1] %v435
        %v437 = vld [vmem:[%s424 + $0x18] sm:$0x1]
        %v438 = vsel %vm427, 0, %v437
        %439 = vst [vmem:[%s424 + $0x18] sm:$0x1] %v438
        %v440 = vld [vmem:[%s424 + $0x20] sm:$0x1]
        %v441 = vsel %vm427, 0, %v440
        %442 = vst [vmem:[%s424 + $0x20] sm:$0x1] %v441
        %v443 = vld [vmem:[%s424 + $0x28] sm:$0x1]
        %v444 = vsel %vm427, 0, %v443
        %445 = vst [vmem:[%s424 + $0x28] sm:$0x1] %v444
        %v446 = vld [vmem:[%s424 + $0x30] sm:$0x1]
        %v447 = vsel %vm427, 0, %v446
        %448 = vst [vmem:[%s424 + $0x30] sm:$0x1] %v447
        %v449 = vld [vmem:[%s424 + $0x38] sm:$0x1]
        %v450 = vsel %vm427, 0, %v449
        %451 = vst [vmem:[%s424 + $0x38] sm:$0x1] %v450
        %vm452 = vsmask.f32 7938
        %vm453 = vmand %vm425, %vm452
        %v454 = vld [vmem:[%s424 + $0x4] sm:$0x1]
        %v455 = vsel %vm453, 0, %v454
        %456 = vst [vmem:[%s424 + $0x4] sm:$0x1] %v455
        %v457 = vld [vmem:[%s424 + $0xc] sm:$0x1]
        %v458 = vsel %vm453, 0, %v457
        %459 = vst [vmem:[%s424 + $0xc] sm:$0x1] %v458
        %v460 = vld [vmem:[%s424 + $0x14] sm:$0x1]
        %v461 = vsel %vm453, 0, %v460
        %462 = vst [vmem:[%s424 + $0x14] sm:$0x1] %v461
        %v463 = vld [vmem:[%s424 + $0x1c] sm:$0x1]
        %v464 = vsel %vm453, 0, %v463
        %465 = vst [vmem:[%s424 + $0x1c] sm:$0x1] %v464
        %v466 = vld [vmem:[%s424 + $0x24] sm:$0x1]
        %v467 = vsel %vm453, 0, %v466
        %468 = vst [vmem:[%s424 + $0x24] sm:$0x1] %v467
        %v469 = vld [vmem:[%s424 + $0x2c] sm:$0x1]
        %v470 = vsel %vm453, 0, %v469
        %471 = vst [vmem:[%s424 + $0x2c] sm:$0x1] %v470
        %v472 = vld [vmem:[%s424 + $0x34] sm:$0x1]
        %v473 = vsel %vm453, 0, %v472
        %474 = vst [vmem:[%s424 + $0x34] sm:$0x1] %v473
        %v475 = vld [vmem:[%s424 + $0x3c] sm:$0x1]
        %v476 = vsel %vm453, 0, %v475
        %477 = vst [vmem:[%s424 + $0x3c] sm:$0x1] %v476
        %v478 = vld [vmem:[%s357] sm:$0xf]
        %v479 = vld [vmem:[%s357 + $0x4] sm:$0xf]
        %v480 = vld [vmem:[%s357 + $0x8] sm:$0xf]
        %v481 = vld [vmem:[%s357 + $0xc] sm:$0xf]
        %v482 = vld [vmem:[%s357 + $0x10] sm:$0xf]
        %v483 = vld [vmem:[%s357 + $0x14] sm:$0xf]
        %v484 = vld [vmem:[%s357 + $0x18] sm:$0xf]
        %v485 = vld [vmem:[%s357 + $0x1c] sm:$0xf]
        %v487 = vshrl.u32 %v478, 16
        %v489 = vrot.slane %v487, 7
        %v490 = vshll.u32 %v478, 16
        %v492 = vor.u32 %v489, %v490
        %v493 = vrot.slane %v489, 4
        %v495 = vshrl.u32 %v479, 16
        %v497 = vrot.slane %v495, 7
        %v498 = vshll.u32 %v479, 16
        %v500 = vor.u32 %v497, %v498
        %v501 = vrot.slane %v497, 4
        %v503 = vshrl.u32 %v480, 16
        %v505 = vrot.slane %v503, 7
        %v506 = vshll.u32 %v480, 16
        %v508 = vor.u32 %v505, %v506
        %v509 = vrot.slane %v505, 4
        %v511 = vshrl.u32 %v481, 16
        %v513 = vrot.slane %v511, 7
        %v514 = vshll.u32 %v481, 16
        %v516 = vor.u32 %v513, %v514
        %v517 = vrot.slane %v513, 4
        %v519 = vshrl.u32 %v482, 16
        %v521 = vrot.slane %v519, 7
        %v522 = vshll.u32 %v482, 16
        %v524 = vor.u32 %v521, %v522
        %v525 = vrot.slane %v521, 4
        %v527 = vshrl.u32 %v483, 16
        %v529 = vrot.slane %v527, 7
        %v530 = vshll.u32 %v483, 16
        %v532 = vor.u32 %v529, %v530
        %v533 = vrot.slane %v529, 4
        %v535 = vshrl.u32 %v484, 16
        %v537 = vrot.slane %v535, 7
        %v538 = vshll.u32 %v484, 16
        %v540 = vor.u32 %v537, %v538
        %v541 = vrot.slane %v537, 4
        %v543 = vshrl.u32 %v485, 16
        %v545 = vrot.slane %v543, 7
        %v546 = vshll.u32 %v485, 16
        %v548 = vor.u32 %v545, %v546
        %v549 = vrot.slane %v545, 4
        %vm566 = vcmask 1043456
        %vm567 = vmand %vm566, %vm452
        %v568 = vld [vmem:[%s424] sm:$0xf]
        %v569 = vsel %vm567, %v492, %v568
        %570 = vst [vmem:[%s424] sm:$0xf] %v569
        %v571 = vld [vmem:[%s424 + $0x4] sm:$0x1]
        %v572 = vsel %vm427, %v493, %v571
        %573 = vst [vmem:[%s424 + $0x4] sm:$0x1] %v572
        %v574 = vld [vmem:[%s424 + $0x8] sm:$0xf]
        %v575 = vsel %vm567, %v500, %v574
        %576 = vst [vmem:[%s424 + $0x8] sm:$0xf] %v575
        %v577 = vld [vmem:[%s424 + $0xc] sm:$0x1]
        %v578 = vsel %vm427, %v501, %v577
        %579 = vst [vmem:[%s424 + $0xc] sm:$0x1] %v578
        %v580 = vld [vmem:[%s424 + $0x10] sm:$0xf]
        %v581 = vsel %vm567, %v508, %v580
        %582 = vst [vmem:[%s424 + $0x10] sm:$0xf] %v581
        %v583 = vld [vmem:[%s424 + $0x14] sm:$0x1]
        %v584 = vsel %vm427, %v509, %v583
        %585 = vst [vmem:[%s424 + $0x14] sm:$0x1] %v584
        %v586 = vld [vmem:[%s424 + $0x18] sm:$0xf]
        %v587 = vsel %vm567, %v516, %v586
        %588 = vst [vmem:[%s424 + $0x18] sm:$0xf] %v587
        %v589 = vld [vmem:[%s424 + $0x1c] sm:$0x1]
        %v590 = vsel %vm427, %v517, %v589
        %591 = vst [vmem:[%s424 + $0x1c] sm:$0x1] %v590
        %v592 = vld [vmem:[%s424 + $0x20] sm:$0xf]
        %v593 = vsel %vm567, %v524, %v592
        %594 = vst [vmem:[%s424 + $0x20] sm:$0xf] %v593
        %v595 = vld [vmem:[%s424 + $0x24] sm:$0x1]
        %v596 = vsel %vm427, %v525, %v595
        %597 = vst [vmem:[%s424 + $0x24] sm:$0x1] %v596
        %v598 = vld [vmem:[%s424 + $0x28] sm:$0xf]
        %v599 = vsel %vm567, %v532, %v598
        %600 = vst [vmem:[%s424 + $0x28] sm:$0xf] %v599
        %v601 = vld [vmem:[%s424 + $0x2c] sm:$0x1]
        %v602 = vsel %vm427, %v533, %v601
        %603 = vst [vmem:[%s424 + $0x2c] sm:$0x1] %v602
        %v604 = vld [vmem:[%s424 + $0x30] sm:$0xf]
        %v605 = vsel %vm567, %v540, %v604
        %606 = vst [vmem:[%s424 + $0x30] sm:$0xf] %v605
        %v607 = vld [vmem:[%s424 + $0x34] sm:$0x1]
        %v608 = vsel %vm427, %v541, %v607
        %609 = vst [vmem:[%s424 + $0x34] sm:$0x1] %v608
        %v610 = vld [vmem:[%s424 + $0x38] sm:$0xf]
        %v611 = vsel %vm567, %v548, %v610
        %612 = vst [vmem:[%s424 + $0x38] sm:$0xf] %v611
        %v613 = vld [vmem:[%s424 + $0x3c] sm:$0x1]
        %v614 = vsel %vm427, %v549, %v613
        %615 = vst [vmem:[%s424 + $0x3c] sm:$0x1] %v614
        %v616 = vld [vmem:[#allocation8] sm:$0x1]
        %v617 = vld [vmem:[#allocation2] sm:$0xf]
        %v618 = vld [vmem:[#allocation2 + $0x4] sm:$0x1]
        %v619 = vld [vmem:[#allocation2 + $0x8] sm:$0xf]
        %v620 = vld [vmem:[#allocation2 + $0xc] sm:$0x1]
        %v621 = vld [vmem:[#allocation2 + $0x10] sm:$0xf]
        %v622 = vld [vmem:[#allocation2 + $0x14] sm:$0x1]
        %v623 = vld [vmem:[#allocation2 + $0x18] sm:$0xf]
        %v624 = vld [vmem:[#allocation2 + $0x1c] sm:$0x1]
        %v625 = vld [vmem:[#allocation2 + $0x20] sm:$0xf]
        %v626 = vld [vmem:[#allocation2 + $0x24] sm:$0x1]
        %v627 = vld [vmem:[#allocation2 + $0x28] sm:$0xf]
        %v628 = vld [vmem:[#allocation2 + $0x2c] sm:$0x1]
        %v629 = vld [vmem:[#allocation2 + $0x30] sm:$0xf]
        %v630 = vld [vmem:[#allocation2 + $0x34] sm:$0x1]
        %v631 = vld [vmem:[#allocation2 + $0x38] sm:$0xf]
        %v632 = vld [vmem:[#allocation2 + $0x3c] sm:$0x1]
        %v633 = vld [vmem:[#allocation2 + $0x40] sm:$0xf]
        %v634 = vld [vmem:[#allocation2 + $0x44] sm:$0x1]
        %v635 = vld [vmem:[#allocation2 + $0x48] sm:$0xf]
        %v636 = vld [vmem:[#allocation2 + $0x4c] sm:$0x1]
        %v637 = vld [vmem:[#allocation6] sm:$0xf]
        %v638 = vld [vmem:[#allocation6 + $0x4] sm:$0xf]
        %v639 = vld [vmem:[#allocation6 + $0x8] sm:$0xf]
        %v640 = vld [vmem:[#allocation6 + $0xc] sm:$0xf]
        %v641 = vld [vmem:[#allocation6 + $0x10] sm:$0xf]
        %v642 = vld [vmem:[#allocation6 + $0x14] sm:$0xf]
        %v643 = vld [vmem:[#allocation6 + $0x18] sm:$0xf]
        %v644 = vld [vmem:[#allocation6 + $0x1c] sm:$0xf]
        %v645 = vld [vmem:[#allocation6 + $0x20] sm:$0xf]
        %v646 = vld [vmem:[#allocation6 + $0x24] sm:$0xf]
        %v647 = vld [vmem:[#allocation6 + $0x28] sm:$0xf]
        %v648 = vld [vmem:[#allocation6 + $0x2c] sm:$0xf]
        %v649 = vld [vmem:[#allocation6 + $0x30] sm:$0xf]
        %v650 = vld [vmem:[#allocation6 + $0x34] sm:$0xf]
        %v651 = vld [vmem:[#allocation6 + $0x38] sm:$0xf]
        %v652 = vld [vmem:[#allocation6 + $0x3c] sm:$0xf]
        %s653 = scalar_lea.vmem [#allocation6], 192
        %v654 = vld [vmem:[%s653] sm:$0xf]
        %v655 = vld [vmem:[%s653 + $0x4] sm:$0xf]
        %v656 = vld [vmem:[%s653 + $0x8] sm:$0xf]
        %v657 = vld [vmem:[%s653 + $0xc] sm:$0xf]
        %v658 = vld [vmem:[%s653 + $0x10] sm:$0xf]
        %v659 = vld [vmem:[%s653 + $0x14] sm:$0xf]
        %v660 = vld [vmem:[%s653 + $0x18] sm:$0xf]
        %v661 = vld [vmem:[%s653 + $0x1c] sm:$0xf]
        %v662 = vld [vmem:[%s653 + $0x20] sm:$0xf]
        %v663 = vld [vmem:[%s653 + $0x24] sm:$0xf]
        %v664 = vld [vmem:[%s653 + $0x28] sm:$0xf]
        %v665 = vld [vmem:[%s653 + $0x2c] sm:$0xf]
        %v666 = vld [vmem:[%s653 + $0x30] sm:$0xf]
        %v667 = vld [vmem:[%s653 + $0x34] sm:$0xf]
        %v668 = vld [vmem:[%s653 + $0x38] sm:$0xf]
        %v669 = vld [vmem:[%s653 + $0x3c] sm:$0xf]
        %v678 = vunpack.c.l.b16 %v619
        %v679 = vunpack.c.l.b16 %v621
        %v680 = vunpack.c.l.b16 %v623
        %v681 = vunpack.c.l.b16 %v625
        %v682 = vunpack.c.l.b16 %v627
        %v683 = vunpack.c.l.b16 %v629
        %v684 = vunpack.c.l.b16 %v631
        %v685 = vunpack.c.l.b16 %v633
        %v686 = vpack.c.b16 %v679, %v678
        %v687 = vpack.c.b16 %v681, %v680
        %v688 = vpack.c.b16 %v683, %v682
        %v689 = vpack.c.b16 %v685, %v684
        %v710 = vunpack.c.l.b16 %v654
        %v711 = vunpack.c.l.b16 %v655
        %v712 = vunpack.c.l.b16 %v656
        %v713 = vunpack.c.l.b16 %v657
        %v714 = vunpack.c.l.b16 %v658
        %v715 = vunpack.c.l.b16 %v659
        %v716 = vunpack.c.l.b16 %v660
        %v717 = vunpack.c.l.b16 %v661
        %v718 = vunpack.c.l.b16 %v662
        %v719 = vunpack.c.l.b16 %v663
        %v720 = vunpack.c.l.b16 %v664
        %v721 = vunpack.c.l.b16 %v665
        %v722 = vunpack.c.l.b16 %v666
        %v723 = vunpack.c.l.b16 %v667
        %v724 = vunpack.c.l.b16 %v668
        %v725 = vunpack.c.l.b16 %v669
        %v726 = vpack.c.b16 %v711, %v710
        %v727 = vpack.c.b16 %v713, %v712
        %v728 = vpack.c.b16 %v715, %v714
        %v729 = vpack.c.b16 %v717, %v716
        %v730 = vpack.c.b16 %v719, %v718
        %v731 = vpack.c.b16 %v721, %v720
        %v732 = vpack.c.b16 %v723, %v722
        %v733 = vpack.c.b16 %v725, %v724
        %742 = vmatprep.subr.bf16.mxu0 0
        %743 = vmatpush1.bf16.msra.mxu0 %v726
        %744 = vmatprep.subr.bf16.mxu0 0
        %745 = vmatpush1.bf16.msra.mxu0 %v727
        %746 = vmatprep.subr.bf16.mxu0 0
        %747 = vmatpush1.bf16.msra.mxu0 %v728
        %748 = vmatprep.subr.bf16.mxu0 0
        %749 = vmatpush1.bf16.msra.mxu0 %v729
        %750 = vmatprep.subr.bf16.mxu0 0
        %751 = vmatpush1.bf16.msra.mxu0 %v730
        %752 = vmatprep.subr.bf16.mxu0 0
        %753 = vmatpush1.bf16.msra.mxu0 %v731
        %754 = vmatprep.subr.bf16.mxu0 0
        %755 = vmatpush1.bf16.msra.mxu0 %v732
        %756 = vmatprep.subr.bf16.mxu0 0
        %757 = vmatpush1.bf16.msra.mxu0 %v733
        %758 = vmatprep.subr.bf16.mxu0 0
        %759 = vmatpush1.bf16.msra.mxu0 0
        %760 = vmatprep.subr.bf16.mxu0 0
        %761 = vmatpush1.bf16.msra.mxu0 0
        %762 = vmatprep.subr.bf16.mxu0 0
        %763 = vmatpush1.bf16.msra.mxu0 0
        %764 = vmatprep.subr.bf16.mxu0 0
        %765 = vmatpush1.bf16.msra.mxu0 0
        %766 = vmatprep.subr.bf16.mxu0 0
        %767 = vmatpush1.bf16.msra.mxu0 0
        %768 = vmatprep.subr.bf16.mxu0 0
        %769 = vmatpush1.bf16.msra.mxu0 0
        %770 = vmatprep.subr.bf16.mxu0 0
        %771 = vmatpush1.bf16.msra.mxu0 0
        %772 = vmatprep.subr.bf16.mxu0 0
        %773 = vmatpush1.bf16.msra.mxu0 0
        %774 = vmatprep.mubr.bf16.mxu0 0
        %775 = vmatmul.mubr.bf16.gmra.mrb[0].mxu0 %v686
        %v776 = vpop.f32.mrb[0].mxu0
        %v777 = vadd.f32 0.0, %v776
        %v778 = vpop.f32.mrb[0].mxu0
        %v779 = vpop.f32.mrb[0].mxu0
        %v780 = vadd.f32 0.0, %v779
        %v781 = vpop.f32.mrb[0].mxu0
        %782 = vmatprep.mubr.bf16.mxu0 0
        %783 = vmatmul.mubr.bf16.gmra.mrb[0].mxu0 %v687
        %v784 = vpop.f32.mrb[0].mxu0
        %v785 = vadd.f32 0.0, %v784
        %v786 = vpop.f32.mrb[0].mxu0
        %v787 = vpop.f32.mrb[0].mxu0
        %v788 = vadd.f32 0.0, %v787
        %v789 = vpop.f32.mrb[0].mxu0
        %790 = vmatprep.mubr.bf16.mxu0 0
        %791 = vmatmul.mubr.bf16.gmra.mrb[0].mxu0 %v688
        %v792 = vpop.f32.mrb[0].mxu0
        %v793 = vadd.f32 0.0, %v792
        %v794 = vpop.f32.mrb[0].mxu0
        %v795 = vpop.f32.mrb[0].mxu0
        %v796 = vadd.f32 0.0, %v795
        %v797 = vpop.f32.mrb[0].mxu0
        %798 = vmatprep.mubr.bf16.mxu0 0
        %799 = vmatmul.mubr.bf16.gmra.mrb[0].mxu0 %v689
        %v800 = vpop.f32.mrb[0].mxu0
        %v801 = vadd.f32 0.0, %v800
        %v802 = vpop.f32.mrb[0].mxu0
        %v803 = vpop.f32.mrb[0].mxu0
        %v804 = vadd.f32 0.0, %v803
        %v805 = vpop.f32.mrb[0].mxu0
        %806 = vdwg.mxu0
        %v808 = vunpack.c.l.b16 %v617
        %v809 = vpack.c.b16 %v678, %v808
        %v810 = vpack.c.b16 %v680, %v679
        %v811 = vpack.c.b16 %v682, %v681
        %v812 = vpack.c.b16 %v684, %v683
        %v833 = vunpack.c.l.b16 %v637
        %v834 = vunpack.c.l.b16 %v638
        %v835 = vunpack.c.l.b16 %v639
        %v836 = vunpack.c.l.b16 %v640
        %v837 = vunpack.c.l.b16 %v641
        %v838 = vunpack.c.l.b16 %v642
        %v839 = vunpack.c.l.b16 %v643
        %v840 = vunpack.c.l.b16 %v644
        %v841 = vunpack.c.l.b16 %v645
        %v842 = vunpack.c.l.b16 %v646
        %v843 = vunpack.c.l.b16 %v647
        %v844 = vunpack.c.l.b16 %v648
        %v845 = vunpack.c.l.b16 %v649
        %v846 = vunpack.c.l.b16 %v650
        %v847 = vunpack.c.l.b16 %v651
        %v848 = vunpack.c.l.b16 %v652
        %v849 = vpack.c.b16 %v834, %v833
        %v850 = vpack.c.b16 %v836, %v835
        %v851 = vpack.c.b16 %v838, %v837
        %v852 = vpack.c.b16 %v840, %v839
        %v853 = vpack.c.b16 %v842, %v841
        %v854 = vpack.c.b16 %v844, %v843
        %v855 = vpack.c.b16 %v846, %v845
        %v856 = vpack.c.b16 %v848, %v847
        %865 = vmatprep.subr.bf16.mxu0 0
        %866 = vmatpush1.bf16.msra.mxu0 %v849
        %867 = vmatprep.subr.bf16.mxu0 0
        %868 = vmatpush1.bf16.msra.mxu0 %v850
        %869 = vmatprep.subr.bf16.mxu0 0
        %870 = vmatpush1.bf16.msra.mxu0 %v851
        %871 = vmatprep.subr.bf16.mxu0 0
        %872 = vmatpush1.bf16.msra.mxu0 %v852
        %873 = vmatprep.subr.bf16.mxu0 0
        %874 = vmatpush1.bf16.msra.mxu0 %v853
        %875 = vmatprep.subr.bf16.mxu0 0
        %876 = vmatpush1.bf16.msra.mxu0 %v854
        %877 = vmatprep.subr.bf16.mxu0 0
        %878 = vmatpush1.bf16.msra.mxu0 %v855
        %879 = vmatprep.subr.bf16.mxu0 0
        %880 = vmatpush1.bf16.msra.mxu0 %v856
        %881 = vmatprep.subr.bf16.mxu0 0
        %882 = vmatpush1.bf16.msra.mxu0 0
        %883 = vmatprep.subr.bf16.mxu0 0
        %884 = vmatpush1.bf16.msra.mxu0 0
        %885 = vmatprep.subr.bf16.mxu0 0
        %886 = vmatpush1.bf16.msra.mxu0 0
        %887 = vmatprep.subr.bf16.mxu0 0
        %888 = vmatpush1.bf16.msra.mxu0 0
        %889 = vmatprep.subr.bf16.mxu0 0
        %890 = vmatpush1.bf16.msra.mxu0 0
        %891 = vmatprep.subr.bf16.mxu0 0
        %892 = vmatpush1.bf16.msra.mxu0 0
        %893 = vmatprep.subr.bf16.mxu0 0
        %894 = vmatpush1.bf16.msra.mxu0 0
        %895 = vmatprep.subr.bf16.mxu0 0
        %896 = vmatpush1.bf16.msra.mxu0 0
        %897 = vmatprep.mubr.bf16.mxu0 0
        %898 = vmatmul.mubr.bf16.gmra.mrb[0].mxu0 %v809
        %v899 = vpop.f32.mrb[0].mxu0
        %v900 = vadd.f32 %v777, %v899
        %v901 = vpop.f32.mrb[0].mxu0
        %v902 = vpop.f32.mrb[0].mxu0
        %v903 = vadd.f32 %v780, %v902
        %v904 = vpop.f32.mrb[0].mxu0
        %905 = vmatprep.mubr.bf16.mxu0 0
        %906 = vmatmul.mubr.bf16.gmra.mrb[0].mxu0 %v810
        %v907 = vpop.f32.mrb[0].mxu0
        %v908 = vadd.f32 %v785, %v907
        %v909 = vpop.f32.mrb[0].mxu0
        %v910 = vpop.f32.mrb[0].mxu0
        %v911 = vadd.f32 %v788, %v910
        %v912 = vpop.f32.mrb[0].mxu0
        %913 = vmatprep.mubr.bf16.mxu0 0
        %914 = vmatmul.mubr.bf16.gmra.mrb[0].mxu0 %v811
        %v915 = vpop.f32.mrb[0].mxu0
        %v916 = vadd.f32 %v793, %v915
        %v917 = vpop.f32.mrb[0].mxu0
        %v918 = vpop.f32.mrb[0].mxu0
        %v919 = vadd.f32 %v796, %v918
        %v920 = vpop.f32.mrb[0].mxu0
        %921 = vmatprep.mubr.bf16.mxu0 0
        %922 = vmatmul.mubr.bf16.gmra.mrb[0].mxu0 %v812
        %v923 = vpop.f32.mrb[0].mxu0
        %v924 = vadd.f32 %v801, %v923
        %v925 = vpop.f32.mrb[0].mxu0
        %v926 = vpop.f32.mrb[0].mxu0
        %v927 = vadd.f32 %v804, %v926
        %v928 = vpop.f32.mrb[0].mxu0
        %929 = vdwg.mxu0
        %s930 = scalar_lea.vmem [#allocation6], 384
        %v931 = vld [vmem:[%s930] sm:$0xf]
        %v932 = vld [vmem:[%s930 + $0x4] sm:$0xf]
        %v933 = vld [vmem:[%s930 + $0x8] sm:$0xf]
        %v934 = vld [vmem:[%s930 + $0xc] sm:$0xf]
        %v935 = vld [vmem:[%s930 + $0x10] sm:$0xf]
        %v936 = vld [vmem:[%s930 + $0x14] sm:$0xf]
        %v937 = vld [vmem:[%s930 + $0x18] sm:$0xf]
        %v938 = vld [vmem:[%s930 + $0x1c] sm:$0xf]
        %v939 = vld [vmem:[%s930 + $0x20] sm:$0xf]
        %v940 = vld [vmem:[%s930 + $0x24] sm:$0xf]
        %v941 = vld [vmem:[%s930 + $0x28] sm:$0xf]
        %v942 = vld [vmem:[%s930 + $0x2c] sm:$0xf]
        %v943 = vld [vmem:[%s930 + $0x30] sm:$0xf]
        %v944 = vld [vmem:[%s930 + $0x34] sm:$0xf]
        %v945 = vld [vmem:[%s930 + $0x38] sm:$0xf]
        %v946 = vld [vmem:[%s930 + $0x3c] sm:$0xf]
        %v948 = vunpack.c.l.b16 %v635
        %v949 = vpack.c.b16 %v948, %v685
        %v967 = vunpack.c.l.b16 %v931
        %v968 = vunpack.c.l.b16 %v932
        %v969 = vunpack.c.l.b16 %v933
        %v970 = vunpack.c.l.b16 %v934
        %v971 = vunpack.c.l.b16 %v935
        %v972 = vunpack.c.l.b16 %v936
        %v973 = vunpack.c.l.b16 %v937
        %v974 = vunpack.c.l.b16 %v938
        %v975 = vunpack.c.l.b16 %v939
        %v976 = vunpack.c.l.b16 %v940
        %v977 = vunpack.c.l.b16 %v941
        %v978 = vunpack.c.l.b16 %v942
        %v979 = vunpack.c.l.b16 %v943
        %v980 = vunpack.c.l.b16 %v944
        %v981 = vunpack.c.l.b16 %v945
        %v982 = vunpack.c.l.b16 %v946
        %v983 = vpack.c.b16 %v968, %v967
        %v984 = vpack.c.b16 %v970, %v969
        %v985 = vpack.c.b16 %v972, %v971
        %v986 = vpack.c.b16 %v974, %v973
        %v987 = vpack.c.b16 %v976, %v975
        %v988 = vpack.c.b16 %v978, %v977
        %v989 = vpack.c.b16 %v980, %v979
        %v990 = vpack.c.b16 %v982, %v981
        %999 = vmatprep.subr.bf16.mxu0 0
        %1000 = vmatpush1.bf16.msra.mxu0 %v983
        %1001 = vmatprep.subr.bf16.mxu0 0
        %1002 = vmatpush1.bf16.msra.mxu0 %v984
        %1003 = vmatprep.subr.bf16.mxu0 0
        %1004 = vmatpush1.bf16.msra.mxu0 %v985
        %1005 = vmatprep.subr.bf16.mxu0 0
        %1006 = vmatpush1.bf16.msra.mxu0 %v986
        %1007 = vmatprep.subr.bf16.mxu0 0
        %1008 = vmatpush1.bf16.msra.mxu0 %v987
        %1009 = vmatprep.subr.bf16.mxu0 0
        %1010 = vmatpush1.bf16.msra.mxu0 %v988
        %1011 = vmatprep.subr.bf16.mxu0 0
        %1012 = vmatpush1.bf16.msra.mxu0 %v989
        %1013 = vmatprep.subr.bf16.mxu0 0
        %1014 = vmatpush1.bf16.msra.mxu0 %v990
        %1015 = vmatprep.subr.bf16.mxu0 0
        %1016 = vmatpush1.bf16.msra.mxu0 0
        %1017 = vmatprep.subr.bf16.mxu0 0
        %1018 = vmatpush1.bf16.msra.mxu0 0
        %1019 = vmatprep.subr.bf16.mxu0 0
        %1020 = vmatpush1.bf16.msra.mxu0 0
        %1021 = vmatprep.subr.bf16.mxu0 0
        %1022 = vmatpush1.bf16.msra.mxu0 0
        %1023 = vmatprep.subr.bf16.mxu0 0
        %1024 = vmatpush1.bf16.msra.mxu0 0
        %1025 = vmatprep.subr.bf16.mxu0 0
        %1026 = vmatpush1.bf16.msra.mxu0 0
        %1027 = vmatprep.subr.bf16.mxu0 0
        %1028 = vmatpush1.bf16.msra.mxu0 0
        %1029 = vmatprep.subr.bf16.mxu0 0
        %1030 = vmatpush1.bf16.msra.mxu0 0
        %1031 = vmatprep.mubr.bf16.mxu0 0
        %1032 = vmatmul.mubr.bf16.gmra.mrb[0].mxu0 %v810
        %v1033 = vpop.f32.mrb[0].mxu0
        %v1034 = vadd.f32 0.0, %v1033
        %v1035 = vpop.f32.mrb[0].mxu0
        %v1036 = vpop.f32.mrb[0].mxu0
        %v1037 = vadd.f32 0.0, %v1036
        %v1038 = vpop.f32.mrb[0].mxu0
        %1039 = vmatprep.mubr.bf16.mxu0 0
        %1040 = vmatmul.mubr.bf16.gmra.mrb[0].mxu0 %v811
        %v1041 = vpop.f32.mrb[0].mxu0
        %v1042 = vadd.f32 0.0, %v1041
        %v1043 = vpop.f32.mrb[0].mxu0
        %v1044 = vpop.f32.mrb[0].mxu0
        %v1045 = vadd.f32 0.0, %v1044
        %v1046 = vpop.f32.mrb[0].mxu0
        %1047 = vmatprep.mubr.bf16.mxu0 0
        %1048 = vmatmul.mubr.bf16.gmra.mrb[0].mxu0 %v812
        %v1049 = vpop.f32.mrb[0].mxu0
        %v1050 = vadd.f32 0.0, %v1049
        %v1051 = vpop.f32.mrb[0].mxu0
        %v1052 = vpop.f32.mrb[0].mxu0
        %v1053 = vadd.f32 0.0, %v1052
        %v1054 = vpop.f32.mrb[0].mxu0
        %1055 = vmatprep.mubr.bf16.mxu0 0
        %1056 = vmatmul.mubr.bf16.gmra.mrb[0].mxu0 %v949
        %v1057 = vpop.f32.mrb[0].mxu0
        %v1058 = vadd.f32 0.0, %v1057
        %v1059 = vpop.f32.mrb[0].mxu0
        %v1060 = vpop.f32.mrb[0].mxu0
        %v1061 = vadd.f32 0.0, %v1060
        %v1062 = vpop.f32.mrb[0].mxu0
        %1063 = vdwg.mxu0
        %v1064 = vadd.f32 %v900, %v1034
        %v1065 = vadd.f32 %v903, %v1037
        %v1066 = vadd.f32 %v908, %v1042
        %v1067 = vadd.f32 %v911, %v1045
        %v1068 = vadd.f32 %v916, %v1050
        %v1069 = vadd.f32 %v919, %v1053
        %v1070 = vadd.f32 %v924, %v1058
        %v1071 = vadd.f32 %v927, %v1061
        %vm1072 = vsmask.f32 3328
        %vm1073 = vsmask.f32 7440
        %vm1074 = vmor %vm1072, %vm1073
        %v1076 = vshrl.u32 %v617, 16
        %v1078 = vrot.slane %v1076, 4
        %v1079 = vshll.u32 %v617, 16
        %v1081 = vrot.slane %v1079, 5
        %v1082 = vor.u32 %v1078, %v1081
        %v1083 = vrot.slane %v1082, 4
        %v1085 = vshll.u32 %v618, 16
        %v1087 = vrot.slane %v1085, 5
        %v1088 = vsel %vm1074, %v1083, %v1087
        %v1090 = vshrl.u32 %v619, 16
        %v1092 = vrot.slane %v1090, 4
        %v1093 = vshll.u32 %v619, 16
        %v1095 = vrot.slane %v1093, 5
        %v1096 = vor.u32 %v1092, %v1095
        %v1097 = vrot.slane %v1096, 4
        %v1099 = vshll.u32 %v620, 16
        %v1101 = vrot.slane %v1099, 5
        %v1102 = vsel %vm1074, %v1097, %v1101
        %v1104 = vshrl.u32 %v621, 16
        %v1106 = vrot.slane %v1104, 4
        %v1107 = vshll.u32 %v621, 16
        %v1109 = vrot.slane %v1107, 5
        %v1110 = vor.u32 %v1106, %v1109
        %v1111 = vrot.slane %v1110, 4
        %v1113 = vshll.u32 %v622, 16
        %v1115 = vrot.slane %v1113, 5
        %v1116 = vsel %vm1074, %v1111, %v1115
        %v1118 = vshrl.u32 %v623, 16
        %v1120 = vrot.slane %v1118, 4
        %v1121 = vshll.u32 %v623, 16
        %v1123 = vrot.slane %v1121, 5
        %v1124 = vor.u32 %v1120, %v1123
        %v1125 = vrot.slane %v1124, 4
        %v1127 = vshll.u32 %v624, 16
        %v1129 = vrot.slane %v1127, 5
        %v1130 = vsel %vm1074, %v1125, %v1129
        %v1132 = vshrl.u32 %v625, 16
        %v1134 = vrot.slane %v1132, 4
        %v1135 = vshll.u32 %v625, 16
        %v1137 = vrot.slane %v1135, 5
        %v1138 = vor.u32 %v1134, %v1137
        %v1139 = vrot.slane %v1138, 4
        %v1141 = vshll.u32 %v626, 16
        %v1143 = vrot.slane %v1141, 5
        %v1144 = vsel %vm1074, %v1139, %v1143
        %v1146 = vshrl.u32 %v627, 16
        %v1148 = vrot.slane %v1146, 4
        %v1149 = vshll.u32 %v627, 16
        %v1151 = vrot.slane %v1149, 5
        %v1152 = vor.u32 %v1148, %v1151
        %v1153 = vrot.slane %v1152, 4
        %v1155 = vshll.u32 %v628, 16
        %v1157 = vrot.slane %v1155, 5
        %v1158 = vsel %vm1074, %v1153, %v1157
        %v1160 = vshrl.u32 %v629, 16
        %v1162 = vrot.slane %v1160, 4
        %v1163 = vshll.u32 %v629, 16
        %v1165 = vrot.slane %v1163, 5
        %v1166 = vor.u32 %v1162, %v1165
        %v1167 = vrot.slane %v1166, 4
        %v1169 = vshll.u32 %v630, 16
        %v1171 = vrot.slane %v1169, 5
        %v1172 = vsel %vm1074, %v1167, %v1171
        %v1174 = vshrl.u32 %v631, 16
        %v1176 = vrot.slane %v1174, 4
        %v1177 = vshll.u32 %v631, 16
        %v1179 = vrot.slane %v1177, 5
        %v1180 = vor.u32 %v1176, %v1179
        %v1181 = vrot.slane %v1180, 4
        %v1183 = vshll.u32 %v632, 16
        %v1185 = vrot.slane %v1183, 5
        %v1186 = vsel %vm1074, %v1181, %v1185
        %s1187 = scalar_lea.vmem [#allocation6], 64
        %v1188 = vld [vmem:[%s1187] sm:$0xf]
        %v1189 = vld [vmem:[%s1187 + $0x4] sm:$0xf]
        %v1190 = vld [vmem:[%s1187 + $0x8] sm:$0xf]
        %v1191 = vld [vmem:[%s1187 + $0xc] sm:$0xf]
        %v1192 = vld [vmem:[%s1187 + $0x10] sm:$0xf]
        %v1193 = vld [vmem:[%s1187 + $0x14] sm:$0xf]
        %v1194 = vld [vmem:[%s1187 + $0x18] sm:$0xf]
        %v1195 = vld [vmem:[%s1187 + $0x1c] sm:$0xf]
        %v1196 = vld [vmem:[%s1187 + $0x20] sm:$0xf]
        %v1197 = vld [vmem:[%s1187 + $0x24] sm:$0xf]
        %v1198 = vld [vmem:[%s1187 + $0x28] sm:$0xf]
        %v1199 = vld [vmem:[%s1187 + $0x2c] sm:$0xf]
        %v1200 = vld [vmem:[%s1187 + $0x30] sm:$0xf]
        %v1201 = vld [vmem:[%s1187 + $0x34] sm:$0xf]
        %v1202 = vld [vmem:[%s1187 + $0x38] sm:$0xf]
        %v1203 = vld [vmem:[%s1187 + $0x3c] sm:$0xf]
        %v1204 = vunpack.c.l.b16 %v1088
        %v1205 = vunpack.c.l.b16 %v1102
        %v1206 = vunpack.c.l.b16 %v1116
        %v1207 = vunpack.c.l.b16 %v1130
        %v1208 = vunpack.c.l.b16 %v1144
        %v1209 = vunpack.c.l.b16 %v1158
        %v1210 = vunpack.c.l.b16 %v1172
        %v1211 = vunpack.c.l.b16 %v1186
        %v1212 = vpack.c.b16 %v1205, %v1204
        %v1213 = vpack.c.b16 %v1207, %v1206
        %v1214 = vpack.c.b16 %v1209, %v1208
        %v1215 = vpack.c.b16 %v1211, %v1210
        %v1236 = vunpack.c.l.b16 %v1188
        %v1237 = vunpack.c.l.b16 %v1189
        %v1238 = vunpack.c.l.b16 %v1190
        %v1239 = vunpack.c.l.b16 %v1191
        %v1240 = vunpack.c.l.b16 %v1192
        %v1241 = vunpack.c.l.b16 %v1193
        %v1242 = vunpack.c.l.b16 %v1194
        %v1243 = vunpack.c.l.b16 %v1195
        %v1244 = vunpack.c.l.b16 %v1196
        %v1245 = vunpack.c.l.b16 %v1197
        %v1246 = vunpack.c.l.b16 %v1198
        %v1247 = vunpack.c.l.b16 %v1199
        %v1248 = vunpack.c.l.b16 %v1200
        %v1249 = vunpack.c.l.b16 %v1201
        %v1250 = vunpack.c.l.b16 %v1202
        %v1251 = vunpack.c.l.b16 %v1203
        %v1252 = vpack.c.b16 %v1237, %v1236
        %v1253 = vpack.c.b16 %v1239, %v1238
        %v1254 = vpack.c.b16 %v1241, %v1240
        %v1255 = vpack.c.b16 %v1243, %v1242
        %v1256 = vpack.c.b16 %v1245, %v1244
        %v1257 = vpack.c.b16 %v1247, %v1246
        %v1258 = vpack.c.b16 %v1249, %v1248
        %v1259 = vpack.c.b16 %v1251, %v1250
        %1268 = vmatprep.subr.bf16.mxu0 0
        %1269 = vmatpush1.bf16.msra.mxu0 %v1252
        %1270 = vmatprep.subr.bf16.mxu0 0
        %1271 = vmatpush1.bf16.msra.mxu0 %v1253
        %1272 = vmatprep.subr.bf16.mxu0 0
        %1273 = vmatpush1.bf16.msra.mxu0 %v1254
        %1274 = vmatprep.subr.bf16.mxu0 0
        %1275 = vmatpush1.bf16.msra.mxu0 %v1255
        %1276 = vmatprep.subr.bf16.mxu0 0
        %1277 = vmatpush1.bf16.msra.mxu0 %v1256
        %1278 = vmatprep.subr.bf16.mxu0 0
        %1279 = vmatpush1.bf16.msra.mxu0 %v1257
        %1280 = vmatprep.subr.bf16.mxu0 0
        %1281 = vmatpush1.bf16.msra.mxu0 %v1258
        %1282 = vmatprep.subr.bf16.mxu0 0
        %1283 = vmatpush1.bf16.msra.mxu0 %v1259
        %1284 = vmatprep.subr.bf16.mxu0 0
        %1285 = vmatpush1.bf16.msra.mxu0 0
        %1286 = vmatprep.subr.bf16.mxu0 0
        %1287 = vmatpush1.bf16.msra.mxu0 0
        %1288 = vmatprep.subr.bf16.mxu0 0
        %1289 = vmatpush1.bf16.msra.mxu0 0
        %1290 = vmatprep.subr.bf16.mxu0 0
        %1291 = vmatpush1.bf16.msra.mxu0 0
        %1292 = vmatprep.subr.bf16.mxu0 0
        %1293 = vmatpush1.bf16.msra.mxu0 0
        %1294 = vmatprep.subr.bf16.mxu0 0
        %1295 = vmatpush1.bf16.msra.mxu0 0
        %1296 = vmatprep.subr.bf16.mxu0 0
        %1297 = vmatpush1.bf16.msra.mxu0 0
        %1298 = vmatprep.subr.bf16.mxu0 0
        %1299 = vmatpush1.bf16.msra.mxu0 0
        %1300 = vmatprep.mubr.bf16.mxu0 0
        %1301 = vmatmul.mubr.bf16.gmra.mrb[0].mxu0 %v1212
        %v1302 = vpop.f32.mrb[0].mxu0
        %v1303 = vadd.f32 0.0, %v1302
        %v1304 = vpop.f32.mrb[0].mxu0
        %v1305 = vpop.f32.mrb[0].mxu0
        %v1306 = vadd.f32 0.0, %v1305
        %v1307 = vpop.f32.mrb[0].mxu0
        %1308 = vmatprep.mubr.bf16.mxu0 0
        %1309 = vmatmul.mubr.bf16.gmra.mrb[0].mxu0 %v1213
        %v1310 = vpop.f32.mrb[0].mxu0
        %v1311 = vadd.f32 0.0, %v1310
        %v1312 = vpop.f32.mrb[0].mxu0
        %v1313 = vpop.f32.mrb[0].mxu0
        %v1314 = vadd.f32 0.0, %v1313
        %v1315 = vpop.f32.mrb[0].mxu0
        %1316 = vmatprep.mubr.bf16.mxu0 0
        %1317 = vmatmul.mubr.bf16.gmra.mrb[0].mxu0 %v1214
        %v1318 = vpop.f32.mrb[0].mxu0
        %v1319 = vadd.f32 0.0, %v1318
        %v1320 = vpop.f32.mrb[0].mxu0
        %v1321 = vpop.f32.mrb[0].mxu0
        %v1322 = vadd.f32 0.0, %v1321
        %v1323 = vpop.f32.mrb[0].mxu0
        %1324 = vmatprep.mubr.bf16.mxu0 0
        %1325 = vmatmul.mubr.bf16.gmra.mrb[0].mxu0 %v1215
        %v1326 = vpop.f32.mrb[0].mxu0
        %v1327 = vadd.f32 0.0, %v1326
        %v1328 = vpop.f32.mrb[0].mxu0
        %v1329 = vpop.f32.mrb[0].mxu0
        %v1330 = vadd.f32 0.0, %v1329
        %v1331 = vpop.f32.mrb[0].mxu0
        %1332 = vdwg.mxu0
        %v1333 = vadd.f32 %v1064, %v1303
        %v1334 = vadd.f32 %v1065, %v1306
        %v1335 = vadd.f32 %v1066, %v1311
        %v1336 = vadd.f32 %v1067, %v1314
        %v1337 = vadd.f32 %v1068, %v1319
        %v1338 = vadd.f32 %v1069, %v1322
        %v1339 = vadd.f32 %v1070, %v1327
        %v1340 = vadd.f32 %v1071, %v1330
        %v1342 = vshrl.u32 %v633, 16
        %v1344 = vrot.slane %v1342, 4
        %v1345 = vshll.u32 %v633, 16
        %v1347 = vrot.slane %v1345, 5
        %v1348 = vor.u32 %v1344, %v1347
        %v1349 = vrot.slane %v1348, 4
        %v1351 = vshll.u32 %v634, 16
        %v1353 = vrot.slane %v1351, 5
        %v1354 = vsel %vm1074, %v1349, %v1353
        %s1355 = scalar_lea.vmem [#allocation6], 256
        %v1356 = vld [vmem:[%s1355] sm:$0xf]
        %v1357 = vld [vmem:[%s1355 + $0x4] sm:$0xf]
        %v1358 = vld [vmem:[%s1355 + $0x8] sm:$0xf]
        %v1359 = vld [vmem:[%s1355 + $0xc] sm:$0xf]
        %v1360 = vld [vmem:[%s1355 + $0x10] sm:$0xf]
        %v1361 = vld [vmem:[%s1355 + $0x14] sm:$0xf]
        %v1362 = vld [vmem:[%s1355 + $0x18] sm:$0xf]
        %v1363 = vld [vmem:[%s1355 + $0x1c] sm:$0xf]
        %v1364 = vld [vmem:[%s1355 + $0x20] sm:$0xf]
        %v1365 = vld [vmem:[%s1355 + $0x24] sm:$0xf]
        %v1366 = vld [vmem:[%s1355 + $0x28] sm:$0xf]
        %v1367 = vld [vmem:[%s1355 + $0x2c] sm:$0xf]
        %v1368 = vld [vmem:[%s1355 + $0x30] sm:$0xf]
        %v1369 = vld [vmem:[%s1355 + $0x34] sm:$0xf]
        %v1370 = vld [vmem:[%s1355 + $0x38] sm:$0xf]
        %v1371 = vld [vmem:[%s1355 + $0x3c] sm:$0xf]
        %v1372 = vunpack.c.l.b16 %v1354
        %v1373 = vpack.c.b16 %v1206, %v1205
        %v1374 = vpack.c.b16 %v1208, %v1207
        %v1375 = vpack.c.b16 %v1210, %v1209
        %v1376 = vpack.c.b16 %v1372, %v1211
        %v1397 = vunpack.c.l.b16 %v1356
        %v1398 = vunpack.c.l.b16 %v1357
        %v1399 = vunpack.c.l.b16 %v1358
        %v1400 = vunpack.c.l.b16 %v1359
        %v1401 = vunpack.c.l.b16 %v1360
        %v1402 = vunpack.c.l.b16 %v1361
        %v1403 = vunpack.c.l.b16 %v1362
        %v1404 = vunpack.c.l.b16 %v1363
        %v1405 = vunpack.c.l.b16 %v1364
        %v1406 = vunpack.c.l.b16 %v1365
        %v1407 = vunpack.c.l.b16 %v1366
        %v1408 = vunpack.c.l.b16 %v1367
        %v1409 = vunpack.c.l.b16 %v1368
        %v1410 = vunpack.c.l.b16 %v1369
        %v1411 = vunpack.c.l.b16 %v1370
        %v1412 = vunpack.c.l.b16 %v1371
        %v1413 = vpack.c.b16 %v1398, %v1397
        %v1414 = vpack.c.b16 %v1400, %v1399
        %v1415 = vpack.c.b16 %v1402, %v1401
        %v1416 = vpack.c.b16 %v1404, %v1403
        %v1417 = vpack.c.b16 %v1406, %v1405
        %v1418 = vpack.c.b16 %v1408, %v1407
        %v1419 = vpack.c.b16 %v1410, %v1409
        %v1420 = vpack.c.b16 %v1412, %v1411
        %1429 = vmatprep.subr.bf16.mxu0 0
        %1430 = vmatpush1.bf16.msra.mxu0 %v1413
        %1431 = vmatprep.subr.bf16.mxu0 0
        %1432 = vmatpush1.bf16.msra.mxu0 %v1414
        %1433 = vmatprep.subr.bf16.mxu0 0
        %1434 = vmatpush1.bf16.msra.mxu0 %v1415
        %1435 = vmatprep.subr.bf16.mxu0 0
        %1436 = vmatpush1.bf16.msra.mxu0 %v1416
        %1437 = vmatprep.subr.bf16.mxu0 0
        %1438 = vmatpush1.bf16.msra.mxu0 %v1417
        %1439 = vmatprep.subr.bf16.mxu0 0
        %1440 = vmatpush1.bf16.msra.mxu0 %v1418
        %1441 = vmatprep.subr.bf16.mxu0 0
        %1442 = vmatpush1.bf16.msra.mxu0 %v1419
        %1443 = vmatprep.subr.bf16.mxu0 0
        %1444 = vmatpush1.bf16.msra.mxu0 %v1420
        %1445 = vmatprep.subr.bf16.mxu0 0
        %1446 = vmatpush1.bf16.msra.mxu0 0
        %1447 = vmatprep.subr.bf16.mxu0 0
        %1448 = vmatpush1.bf16.msra.mxu0 0
        %1449 = vmatprep.subr.bf16.mxu0 0
        %1450 = vmatpush1.bf16.msra.mxu0 0
        %1451 = vmatprep.subr.bf16.mxu0 0
        %1452 = vmatpush1.bf16.msra.mxu0 0
        %1453 = vmatprep.subr.bf16.mxu0 0
        %1454 = vmatpush1.bf16.msra.mxu0 0
        %1455 = vmatprep.subr.bf16.mxu0 0
        %1456 = vmatpush1.bf16.msra.mxu0 0
        %1457 = vmatprep.subr.bf16.mxu0 0
        %1458 = vmatpush1.bf16.msra.mxu0 0
        %1459 = vmatprep.subr.bf16.mxu0 0
        %1460 = vmatpush1.bf16.msra.mxu0 0
        %1461 = vmatprep.mubr.bf16.mxu0 0
        %1462 = vmatmul.mubr.bf16.gmra.mrb[0].mxu0 %v1373
        %v1463 = vpop.f32.mrb[0].mxu0
        %v1464 = vadd.f32 0.0, %v1463
        %v1465 = vpop.f32.mrb[0].mxu0
        %v1466 = vpop.f32.mrb[0].mxu0
        %v1467 = vadd.f32 0.0, %v1466
        %v1468 = vpop.f32.mrb[0].mxu0
        %1469 = vmatprep.mubr.bf16.mxu0 0
        %1470 = vmatmul.mubr.bf16.gmra.mrb[0].mxu0 %v1374
        %v1471 = vpop.f32.mrb[0].mxu0
        %v1472 = vadd.f32 0.0, %v1471
        %v1473 = vpop.f32.mrb[0].mxu0
        %v1474 = vpop.f32.mrb[0].mxu0
        %v1475 = vadd.f32 0.0, %v1474
        %v1476 = vpop.f32.mrb[0].mxu0
        %1477 = vmatprep.mubr.bf16.mxu0 0
        %1478 = vmatmul.mubr.bf16.gmra.mrb[0].mxu0 %v1375
        %v1479 = vpop.f32.mrb[0].mxu0
        %v1480 = vadd.f32 0.0, %v1479
        %v1481 = vpop.f32.mrb[0].mxu0
        %v1482 = vpop.f32.mrb[0].mxu0
        %v1483 = vadd.f32 0.0, %v1482
        %v1484 = vpop.f32.mrb[0].mxu0
        %1485 = vmatprep.mubr.bf16.mxu0 0
        %1486 = vmatmul.mubr.bf16.gmra.mrb[0].mxu0 %v1376
        %v1487 = vpop.f32.mrb[0].mxu0
        %v1488 = vadd.f32 0.0, %v1487
        %v1489 = vpop.f32.mrb[0].mxu0
        %v1490 = vpop.f32.mrb[0].mxu0
        %v1491 = vadd.f32 0.0, %v1490
        %v1492 = vpop.f32.mrb[0].mxu0
        %1493 = vdwg.mxu0
        %v1494 = vadd.f32 %v1333, %v1464
        %v1495 = vadd.f32 %v1334, %v1467
        %v1496 = vadd.f32 %v1335, %v1472
        %v1497 = vadd.f32 %v1336, %v1475
        %v1498 = vadd.f32 %v1337, %v1480
        %v1499 = vadd.f32 %v1338, %v1483
        %v1500 = vadd.f32 %v1339, %v1488
        %v1501 = vadd.f32 %v1340, %v1491
        %v1503 = vshrl.u32 %v635, 16
        %v1505 = vrot.slane %v1503, 4
        %v1506 = vshll.u32 %v635, 16
        %v1508 = vrot.slane %v1506, 5
        %v1509 = vor.u32 %v1505, %v1508
        %v1510 = vrot.slane %v1509, 4
        %v1512 = vshll.u32 %v636, 16
        %v1514 = vrot.slane %v1512, 5
        %v1515 = vsel %vm1074, %v1510, %v1514
        %s1516 = scalar_lea.vmem [#allocation6], 448
        %v1517 = vld [vmem:[%s1516] sm:$0xf]
        %v1518 = vld [vmem:[%s1516 + $0x4] sm:$0xf]
        %v1519 = vld [vmem:[%s1516 + $0x8] sm:$0xf]
        %v1520 = vld [vmem:[%s1516 + $0xc] sm:$0xf]
        %v1521 = vld [vmem:[%s1516 + $0x10] sm:$0xf]
        %v1522 = vld [vmem:[%s1516 + $0x14] sm:$0xf]
        %v1523 = vld [vmem:[%s1516 + $0x18] sm:$0xf]
        %v1524 = vld [vmem:[%s1516 + $0x1c] sm:$0xf]
        %v1525 = vld [vmem:[%s1516 + $0x20] sm:$0xf]
        %v1526 = vld [vmem:[%s1516 + $0x24] sm:$0xf]
        %v1527 = vld [vmem:[%s1516 + $0x28] sm:$0xf]
        %v1528 = vld [vmem:[%s1516 + $0x2c] sm:$0xf]
        %v1529 = vld [vmem:[%s1516 + $0x30] sm:$0xf]
        %v1530 = vld [vmem:[%s1516 + $0x34] sm:$0xf]
        %v1531 = vld [vmem:[%s1516 + $0x38] sm:$0xf]
        %v1532 = vld [vmem:[%s1516 + $0x3c] sm:$0xf]
        %v1533 = vunpack.c.l.b16 %v1515
        %v1534 = vpack.c.b16 %v1533, %v1372
        %v1552 = vunpack.c.l.b16 %v1517
        %v1553 = vunpack.c.l.b16 %v1518
        %v1554 = vunpack.c.l.b16 %v1519
        %v1555 = vunpack.c.l.b16 %v1520
        %v1556 = vunpack.c.l.b16 %v1521
        %v1557 = vunpack.c.l.b16 %v1522
        %v1558 = vunpack.c.l.b16 %v1523
        %v1559 = vunpack.c.l.b16 %v1524
        %v1560 = vunpack.c.l.b16 %v1525
        %v1561 = vunpack.c.l.b16 %v1526
        %v1562 = vunpack.c.l.b16 %v1527
        %v1563 = vunpack.c.l.b16 %v1528
        %v1564 = vunpack.c.l.b16 %v1529
        %v1565 = vunpack.c.l.b16 %v1530
        %v1566 = vunpack.c.l.b16 %v1531
        %v1567 = vunpack.c.l.b16 %v1532
        %v1568 = vpack.c.b16 %v1553, %v1552
        %v1569 = vpack.c.b16 %v1555, %v1554
        %v1570 = vpack.c.b16 %v1557, %v1556
        %v1571 = vpack.c.b16 %v1559, %v1558
        %v1572 = vpack.c.b16 %v1561, %v1560
        %v1573 = vpack.c.b16 %v1563, %v1562
        %v1574 = vpack.c.b16 %v1565, %v1564
        %v1575 = vpack.c.b16 %v1567, %v1566
        %1584 = vmatprep.subr.bf16.mxu0 0
        %1585 = vmatpush1.bf16.msra.mxu0 %v1568
        %1586 = vmatprep.subr.bf16.mxu0 0
        %1587 = vmatpush1.bf16.msra.mxu0 %v1569
        %1588 = vmatprep.subr.bf16.mxu0 0
        %1589 = vmatpush1.bf16.msra.mxu0 %v1570
        %1590 = vmatprep.subr.bf16.mxu0 0
        %1591 = vmatpush1.bf16.msra.mxu0 %v1571
        %1592 = vmatprep.subr.bf16.mxu0 0
        %1593 = vmatpush1.bf16.msra.mxu0 %v1572
        %1594 = vmatprep.subr.bf16.mxu0 0
        %1595 = vmatpush1.bf16.msra.mxu0 %v1573
        %1596 = vmatprep.subr.bf16.mxu0 0
        %1597 = vmatpush1.bf16.msra.mxu0 %v1574
        %1598 = vmatprep.subr.bf16.mxu0 0
        %1599 = vmatpush1.bf16.msra.mxu0 %v1575
        %1600 = vmatprep.subr.bf16.mxu0 0
        %1601 = vmatpush1.bf16.msra.mxu0 0
        %1602 = vmatprep.subr.bf16.mxu0 0
        %1603 = vmatpush1.bf16.msra.mxu0 0
        %1604 = vmatprep.subr.bf16.mxu0 0
        %1605 = vmatpush1.bf16.msra.mxu0 0
        %1606 = vmatprep.subr.bf16.mxu0 0
        %1607 = vmatpush1.bf16.msra.mxu0 0
        %1608 = vmatprep.subr.bf16.mxu0 0
        %1609 = vmatpush1.bf16.msra.mxu0 0
        %1610 = vmatprep.subr.bf16.mxu0 0
        %1611 = vmatpush1.bf16.msra.mxu0 0
        %1612 = vmatprep.subr.bf16.mxu0 0
        %1613 = vmatpush1.bf16.msra.mxu0 0
        %1614 = vmatprep.subr.bf16.mxu0 0
        %1615 = vmatpush1.bf16.msra.mxu0 0
        %1616 = vmatprep.mubr.bf16.mxu0 0
        %1617 = vmatmul.mubr.bf16.gmra.mrb[0].mxu0 %v1213
        %v1618 = vpop.f32.mrb[0].mxu0
        %v1619 = vadd.f32 0.0, %v1618
        %v1620 = vpop.f32.mrb[0].mxu0
        %v1621 = vpop.f32.mrb[0].mxu0
        %v1622 = vadd.f32 0.0, %v1621
        %v1623 = vpop.f32.mrb[0].mxu0
        %1624 = vmatprep.mubr.bf16.mxu0 0
        %1625 = vmatmul.mubr.bf16.gmra.mrb[0].mxu0 %v1214
        %v1626 = vpop.f32.mrb[0].mxu0
        %v1627 = vadd.f32 0.0, %v1626
        %v1628 = vpop.f32.mrb[0].mxu0
        %v1629 = vpop.f32.mrb[0].mxu0
        %v1630 = vadd.f32 0.0, %v1629
        %v1631 = vpop.f32.mrb[0].mxu0
        %1632 = vmatprep.mubr.bf16.mxu0 0
        %1633 = vmatmul.mubr.bf16.gmra.mrb[0].mxu0 %v1215
        %v1634 = vpop.f32.mrb[0].mxu0
        %v1635 = vadd.f32 0.0, %v1634
        %v1636 = vpop.f32.mrb[0].mxu0
        %v1637 = vpop.f32.mrb[0].mxu0
        %v1638 = vadd.f32 0.0, %v1637
        %v1639 = vpop.f32.mrb[0].mxu0
        %1640 = vmatprep.mubr.bf16.mxu0 0
        %1641 = vmatmul.mubr.bf16.gmra.mrb[0].mxu0 %v1534
        %v1642 = vpop.f32.mrb[0].mxu0
        %v1643 = vadd.f32 0.0, %v1642
        %v1644 = vpop.f32.mrb[0].mxu0
        %v1645 = vpop.f32.mrb[0].mxu0
        %v1646 = vadd.f32 0.0, %v1645
        %v1647 = vpop.f32.mrb[0].mxu0
        %1648 = vdwg.mxu0
        %v1649 = vadd.f32 %v1494, %v1619
        %v1650 = vadd.f32 %v1495, %v1622
        %v1651 = vadd.f32 %v1496, %v1627
        %v1652 = vadd.f32 %v1497, %v1630
        %v1653 = vadd.f32 %v1498, %v1635
        %v1654 = vadd.f32 %v1499, %v1638
        %v1655 = vadd.f32 %v1500, %v1643
        %v1656 = vadd.f32 %v1501, %v1646
        %vm1665 = vcmask 1042432
        %vm1666 = vcmask 1046532
        %vm1667 = vmor %vm1665, %vm1666
        %v1668 = vrot.slane %v617, 5
        %v1669 = vrot.slane %v1668, 4
        %v1670 = vrot.slane %v618, 5
        %v1671 = vsel %vm1667, %v1669, %v1670
        %v1672 = vrot.slane %v619, 5
        %v1673 = vrot.slane %v1672, 4
        %v1674 = vrot.slane %v620, 5
        %v1675 = vsel %vm1667, %v1673, %v1674
        %v1676 = vrot.slane %v621, 5
        %v1677 = vrot.slane %v1676, 4
        %v1678 = vrot.slane %v622, 5
        %v1679 = vsel %vm1667, %v1677, %v1678
        %v1680 = vrot.slane %v623, 5
        %v1681 = vrot.slane %v1680, 4
        %v1682 = vrot.slane %v624, 5
        %v1683 = vsel %vm1667, %v1681, %v1682
        %v1684 = vrot.slane %v625, 5
        %v1685 = vrot.slane %v1684, 4
        %v1686 = vrot.slane %v626, 5
        %v1687 = vsel %vm1667, %v1685, %v1686
        %v1688 = vrot.slane %v627, 5
        %v1689 = vrot.slane %v1688, 4
        %v1690 = vrot.slane %v628, 5
        %v1691 = vsel %vm1667, %v1689, %v1690
        %v1692 = vrot.slane %v629, 5
        %v1693 = vrot.slane %v1692, 4
        %v1694 = vrot.slane %v630, 5
        %v1695 = vsel %vm1667, %v1693, %v1694
        %v1696 = vrot.slane %v631, 5
        %v1697 = vrot.slane %v1696, 4
        %v1698 = vrot.slane %v632, 5
        %v1699 = vsel %vm1667, %v1697, %v1698
        %s1700 = scalar_lea.vmem [#allocation6], 128
        %v1701 = vld [vmem:[%s1700] sm:$0xf]
        %v1702 = vld [vmem:[%s1700 + $0x4] sm:$0xf]
        %v1703 = vld [vmem:[%s1700 + $0x8] sm:$0xf]
        %v1704 = vld [vmem:[%s1700 + $0xc] sm:$0xf]
        %v1705 = vld [vmem:[%s1700 + $0x10] sm:$0xf]
        %v1706 = vld [vmem:[%s1700 + $0x14] sm:$0xf]
        %v1707 = vld [vmem:[%s1700 + $0x18] sm:$0xf]
        %v1708 = vld [vmem:[%s1700 + $0x1c] sm:$0xf]
        %v1709 = vld [vmem:[%s1700 + $0x20] sm:$0xf]
        %v1710 = vld [vmem:[%s1700 + $0x24] sm:$0xf]
        %v1711 = vld [vmem:[%s1700 + $0x28] sm:$0xf]
        %v1712 = vld [vmem:[%s1700 + $0x2c] sm:$0xf]
        %v1713 = vld [vmem:[%s1700 + $0x30] sm:$0xf]
        %v1714 = vld [vmem:[%s1700 + $0x34] sm:$0xf]
        %v1715 = vld [vmem:[%s1700 + $0x38] sm:$0xf]
        %v1716 = vld [vmem:[%s1700 + $0x3c] sm:$0xf]
        %v1717 = vunpack.c.l.b16 %v1671
        %v1718 = vunpack.c.l.b16 %v1675
        %v1719 = vunpack.c.l.b16 %v1679
        %v1720 = vunpack.c.l.b16 %v1683
        %v1721 = vunpack.c.l.b16 %v1687
        %v1722 = vunpack.c.l.b16 %v1691
        %v1723 = vunpack.c.l.b16 %v1695
        %v1724 = vunpack.c.l.b16 %v1699
        %v1725 = vpack.c.b16 %v1718, %v1717
        %v1726 = vpack.c.b16 %v1720, %v1719
        %v1727 = vpack.c.b16 %v1722, %v1721
        %v1728 = vpack.c.b16 %v1724, %v1723
        %v1749 = vunpack.c.l.b16 %v1701
        %v1750 = vunpack.c.l.b16 %v1702
        %v1751 = vunpack.c.l.b16 %v1703
        %v1752 = vunpack.c.l.b16 %v1704
        %v1753 = vunpack.c.l.b16 %v1705
        %v1754 = vunpack.c.l.b16 %v1706
        %v1755 = vunpack.c.l.b16 %v1707
        %v1756 = vunpack.c.l.b16 %v1708
        %v1757 = vunpack.c.l.b16 %v1709
        %v1758 = vunpack.c.l.b16 %v1710
        %v1759 = vunpack.c.l.b16 %v1711
        %v1760 = vunpack.c.l.b16 %v1712
        %v1761 = vunpack.c.l.b16 %v1713
        %v1762 = vunpack.c.l.b16 %v1714
        %v1763 = vunpack.c.l.b16 %v1715
        %v1764 = vunpack.c.l.b16 %v1716
        %v1765 = vpack.c.b16 %v1750, %v1749
        %v1766 = vpack.c.b16 %v1752, %v1751
        %v1767 = vpack.c.b16 %v1754, %v1753
        %v1768 = vpack.c.b16 %v1756, %v1755
        %v1769 = vpack.c.b16 %v1758, %v1757
        %v1770 = vpack.c.b16 %v1760, %v1759
        %v1771 = vpack.c.b16 %v1762, %v1761
        %v1772 = vpack.c.b16 %v1764, %v1763
        %1781 = vmatprep.subr.bf16.mxu0 0
        %1782 = vmatpush1.bf16.msra.mxu0 %v1765
        %1783 = vmatprep.subr.bf16.mxu0 0
        %1784 = vmatpush1.bf16.msra.mxu0 %v1766
        %1785 = vmatprep.subr.bf16.mxu0 0
        %1786 = vmatpush1.bf16.msra.mxu0 %v1767
        %1787 = vmatprep.subr.bf16.mxu0 0
        %1788 = vmatpush1.bf16.msra.mxu0 %v1768
        %1789 = vmatprep.subr.bf16.mxu0 0
        %1790 = vmatpush1.bf16.msra.mxu0 %v1769
        %1791 = vmatprep.subr.bf16.mxu0 0
        %1792 = vmatpush1.bf16.msra.mxu0 %v1770
        %1793 = vmatprep.subr.bf16.mxu0 0
        %1794 = vmatpush1.bf16.msra.mxu0 %v1771
        %1795 = vmatprep.subr.bf16.mxu0 0
        %1796 = vmatpush1.bf16.msra.mxu0 %v1772
        %1797 = vmatprep.subr.bf16.mxu0 0
        %1798 = vmatpush1.bf16.msra.mxu0 0
        %1799 = vmatprep.subr.bf16.mxu0 0
        %1800 = vmatpush1.bf16.msra.mxu0 0
        %1801 = vmatprep.subr.bf16.mxu0 0
        %1802 = vmatpush1.bf16.msra.mxu0 0
        %1803 = vmatprep.subr.bf16.mxu0 0
        %1804 = vmatpush1.bf16.msra.mxu0 0
        %1805 = vmatprep.subr.bf16.mxu0 0
        %1806 = vmatpush1.bf16.msra.mxu0 0
        %1807 = vmatprep.subr.bf16.mxu0 0
        %1808 = vmatpush1.bf16.msra.mxu0 0
        %1809 = vmatprep.subr.bf16.mxu0 0
        %1810 = vmatpush1.bf16.msra.mxu0 0
        %1811 = vmatprep.subr.bf16.mxu0 0
        %1812 = vmatpush1.bf16.msra.mxu0 0
        %1813 = vmatprep.mubr.bf16.mxu0 0
        %1814 = vmatmul.mubr.bf16.gmra.mrb[0].mxu0 %v1725
        %v1815 = vpop.f32.mrb[0].mxu0
        %v1816 = vadd.f32 0.0, %v1815
        %v1817 = vpop.f32.mrb[0].mxu0
        %v1818 = vpop.f32.mrb[0].mxu0
        %v1819 = vadd.f32 0.0, %v1818
        %v1820 = vpop.f32.mrb[0].mxu0
        %1821 = vmatprep.mubr.bf16.mxu0 0
        %1822 = vmatmul.mubr.bf16.gmra.mrb[0].mxu0 %v1726
        %v1823 = vpop.f32.mrb[0].mxu0
        %v1824 = vadd.f32 0.0, %v1823
        %v1825 = vpop.f32.mrb[0].mxu0
        %v1826 = vpop.f32.mrb[0].mxu0
        %v1827 = vadd.f32 0.0, %v1826
        %v1828 = vpop.f32.mrb[0].mxu0
        %1829 = vmatprep.mubr.bf16.mxu0 0
        %1830 = vmatmul.mubr.bf16.gmra.mrb[0].mxu0 %v1727
        %v1831 = vpop.f32.mrb[0].mxu0
        %v1832 = vadd.f32 0.0, %v1831
        %v1833 = vpop.f32.mrb[0].mxu0
        %v1834 = vpop.f32.mrb[0].mxu0
        %v1835 = vadd.f32 0.0, %v1834
        %v1836 = vpop.f32.mrb[0].mxu0
        %1837 = vmatprep.mubr.bf16.mxu0 0
        %1838 = vmatmul.mubr.bf16.gmra.mrb[0].mxu0 %v1728
        %v1839 = vpop.f32.mrb[0].mxu0
        %v1840 = vadd.f32 0.0, %v1839
        %v1841 = vpop.f32.mrb[0].mxu0
        %v1842 = vpop.f32.mrb[0].mxu0
        %v1843 = vadd.f32 0.0, %v1842
        %v1844 = vpop.f32.mrb[0].mxu0
        %1845 = vdwg.mxu0
        %v1846 = vadd.f32 %v1649, %v1816
        %v1847 = vadd.f32 %v1650, %v1819
        %v1848 = vadd.f32 %v1651, %v1824
        %v1849 = vadd.f32 %v1652, %v1827
        %v1850 = vadd.f32 %v1653, %v1832
        %v1851 = vadd.f32 %v1654, %v1835
        %v1852 = vadd.f32 %v1655, %v1840
        %v1853 = vadd.f32 %v1656, %v1843
        %v1855 = vrot.slane %v633, 5
        %v1856 = vrot.slane %v1855, 4
        %v1857 = vrot.slane %v634, 5
        %v1858 = vsel %vm1667, %v1856, %v1857
        %s1859 = scalar_lea.vmem [#allocation6], 320
        %v1860 = vld [vmem:[%s1859] sm:$0xf]
        %v1861 = vld [vmem:[%s1859 + $0x4] sm:$0xf]
        %v1862 = vld [vmem:[%s1859 + $0x8] sm:$0xf]
        %v1863 = vld [vmem:[%s1859 + $0xc] sm:$0xf]
        %v1864 = vld [vmem:[%s1859 + $0x10] sm:$0xf]
        %v1865 = vld [vmem:[%s1859 + $0x14] sm:$0xf]
        %v1866 = vld [vmem:[%s1859 + $0x18] sm:$0xf]
        %v1867 = vld [vmem:[%s1859 + $0x1c] sm:$0xf]
        %v1868 = vld [vmem:[%s1859 + $0x20] sm:$0xf]
        %v1869 = vld [vmem:[%s1859 + $0x24] sm:$0xf]
        %v1870 = vld [vmem:[%s1859 + $0x28] sm:$0xf]
        %v1871 = vld [vmem:[%s1859 + $0x2c] sm:$0xf]
        %v1872 = vld [vmem:[%s1859 + $0x30] sm:$0xf]
        %v1873 = vld [vmem:[%s1859 + $0x34] sm:$0xf]
        %v1874 = vld [vmem:[%s1859 + $0x38] sm:$0xf]
        %v1875 = vld [vmem:[%s1859 + $0x3c] sm:$0xf]
        %v1876 = vunpack.c.l.b16 %v1858
        %v1877 = vpack.c.b16 %v1719, %v1718
        %v1878 = vpack.c.b16 %v1721, %v1720
        %v1879 = vpack.c.b16 %v1723, %v1722
        %v1880 = vpack.c.b16 %v1876, %v1724
        %v1901 = vunpack.c.l.b16 %v1860
        %v1902 = vunpack.c.l.b16 %v1861
        %v1903 = vunpack.c.l.b16 %v1862
        %v1904 = vunpack.c.l.b16 %v1863
        %v1905 = vunpack.c.l.b16 %v1864
        %v1906 = vunpack.c.l.b16 %v1865
        %v1907 = vunpack.c.l.b16 %v1866
        %v1908 = vunpack.c.l.b16 %v1867
        %v1909 = vunpack.c.l.b16 %v1868
        %v1910 = vunpack.c.l.b16 %v1869
        %v1911 = vunpack.c.l.b16 %v1870
        %v1912 = vunpack.c.l.b16 %v1871
        %v1913 = vunpack.c.l.b16 %v1872
        %v1914 = vunpack.c.l.b16 %v1873
        %v1915 = vunpack.c.l.b16 %v1874
        %v1916 = vunpack.c.l.b16 %v1875
        %v1917 = vpack.c.b16 %v1902, %v1901
        %v1918 = vpack.c.b16 %v1904, %v1903
        %v1919 = vpack.c.b16 %v1906, %v1905
        %v1920 = vpack.c.b16 %v1908, %v1907
        %v1921 = vpack.c.b16 %v1910, %v1909
        %v1922 = vpack.c.b16 %v1912, %v1911
        %v1923 = vpack.c.b16 %v1914, %v1913
        %v1924 = vpack.c.b16 %v1916, %v1915
        %1933 = vmatprep.subr.bf16.mxu0 0
        %1934 = vmatpush1.bf16.msra.mxu0 %v1917
        %1935 = vmatprep.subr.bf16.mxu0 0
        %1936 = vmatpush1.bf16.msra.mxu0 %v1918
        %1937 = vmatprep.subr.bf16.mxu0 0
        %1938 = vmatpush1.bf16.msra.mxu0 %v1919
        %1939 = vmatprep.subr.bf16.mxu0 0
        %1940 = vmatpush1.bf16.msra.mxu0 %v1920
        %1941 = vmatprep.subr.bf16.mxu0 0
        %1942 = vmatpush1.bf16.msra.mxu0 %v1921
        %1943 = vmatprep.subr.bf16.mxu0 0
        %1944 = vmatpush1.bf16.msra.mxu0 %v1922
        %1945 = vmatprep.subr.bf16.mxu0 0
        %1946 = vmatpush1.bf16.msra.mxu0 %v1923
        %1947 = vmatprep.subr.bf16.mxu0 0
        %1948 = vmatpush1.bf16.msra.mxu0 %v1924
        %1949 = vmatprep.subr.bf16.mxu0 0
        %1950 = vmatpush1.bf16.msra.mxu0 0
        %1951 = vmatprep.subr.bf16.mxu0 0
        %1952 = vmatpush1.bf16.msra.mxu0 0
        %1953 = vmatprep.subr.bf16.mxu0 0
        %1954 = vmatpush1.bf16.msra.mxu0 0
        %1955 = vmatprep.subr.bf16.mxu0 0
        %1956 = vmatpush1.bf16.msra.mxu0 0
        %1957 = vmatprep.subr.bf16.mxu0 0
        %1958 = vmatpush1.bf16.msra.mxu0 0
        %1959 = vmatprep.subr.bf16.mxu0 0
        %1960 = vmatpush1.bf16.msra.mxu0 0
        %1961 = vmatprep.subr.bf16.mxu0 0
        %1962 = vmatpush1.bf16.msra.mxu0 0
        %1963 = vmatprep.subr.bf16.mxu0 0
        %1964 = vmatpush1.bf16.msra.mxu0 0
        %1965 = vmatprep.mubr.bf16.mxu0 0
        %1966 = vmatmul.mubr.bf16.gmra.mrb[0].mxu0 %v1877
        %v1967 = vpop.f32.mrb[0].mxu0
        %v1968 = vadd.f32 0.0, %v1967
        %v1969 = vpop.f32.mrb[0].mxu0
        %v1970 = vpop.f32.mrb[0].mxu0
        %v1971 = vadd.f32 0.0, %v1970
        %v1972 = vpop.f32.mrb[0].mxu0
        %1973 = vmatprep.mubr.bf16.mxu0 0
        %1974 = vmatmul.mubr.bf16.gmra.mrb[0].mxu0 %v1878
        %v1975 = vpop.f32.mrb[0].mxu0
        %v1976 = vadd.f32 0.0, %v1975
        %v1977 = vpop.f32.mrb[0].mxu0
        %v1978 = vpop.f32.mrb[0].mxu0
        %v1979 = vadd.f32 0.0, %v1978
        %v1980 = vpop.f32.mrb[0].mxu0
        %1981 = vmatprep.mubr.bf16.mxu0 0
        %1982 = vmatmul.mubr.bf16.gmra.mrb[0].mxu0 %v1879
        %v1983 = vpop.f32.mrb[0].mxu0
        %v1984 = vadd.f32 0.0, %v1983
        %v1985 = vpop.f32.mrb[0].mxu0
        %v1986 = vpop.f32.mrb[0].mxu0
        %v1987 = vadd.f32 0.0, %v1986
        %v1988 = vpop.f32.mrb[0].mxu0
        %1989 = vmatprep.mubr.bf16.mxu0 0
        %1990 = vmatmul.mubr.bf16.gmra.mrb[0].mxu0 %v1880
        %v1991 = vpop.f32.mrb[0].mxu0
        %v1992 = vadd.f32 0.0, %v1991
        %v1993 = vpop.f32.mrb[0].mxu0
        %v1994 = vpop.f32.mrb[0].mxu0
        %v1995 = vadd.f32 0.0, %v1994
        %v1996 = vpop.f32.mrb[0].mxu0
        %1997 = vdwg.mxu0
        %v1998 = vadd.f32 %v1846, %v1968
        %v1999 = vadd.f32 %v1847, %v1971
        %v2000 = vadd.f32 %v1848, %v1976
        %v2001 = vadd.f32 %v1849, %v1979
        %v2002 = vadd.f32 %v1850, %v1984
        %v2003 = vadd.f32 %v1851, %v1987
        %v2004 = vadd.f32 %v1852, %v1992
        %v2005 = vadd.f32 %v1853, %v1995
        %v2007 = vrot.slane %v635, 5
        %v2008 = vrot.slane %v2007, 4
        %v2009 = vrot.slane %v636, 5
        %v2010 = vsel %vm1667, %v2008, %v2009
        %s2011 = scalar_lea.vmem [#allocation6], 512
        %v2012 = vld [vmem:[%s2011] sm:$0xf]
        %v2013 = vld [vmem:[%s2011 + $0x4] sm:$0xf]
        %v2014 = vld [vmem:[%s2011 + $0x8] sm:$0xf]
        %v2015 = vld [vmem:[%s2011 + $0xc] sm:$0xf]
        %v2016 = vld [vmem:[%s2011 + $0x10] sm:$0xf]
        %v2017 = vld [vmem:[%s2011 + $0x14] sm:$0xf]
        %v2018 = vld [vmem:[%s2011 + $0x18] sm:$0xf]
        %v2019 = vld [vmem:[%s2011 + $0x1c] sm:$0xf]
        %v2020 = vld [vmem:[%s2011 + $0x20] sm:$0xf]
        %v2021 = vld [vmem:[%s2011 + $0x24] sm:$0xf]
        %v2022 = vld [vmem:[%s2011 + $0x28] sm:$0xf]
        %v2023 = vld [vmem:[%s2011 + $0x2c] sm:$0xf]
        %v2024 = vld [vmem:[%s2011 + $0x30] sm:$0xf]
        %v2025 = vld [vmem:[%s2011 + $0x34] sm:$0xf]
        %v2026 = vld [vmem:[%s2011 + $0x38] sm:$0xf]
        %v2027 = vld [vmem:[%s2011 + $0x3c] sm:$0xf]
        %v2028 = vunpack.c.l.b16 %v2010
        %v2029 = vpack.c.b16 %v2028, %v1876
        %v2047 = vunpack.c.l.b16 %v2012
        %v2048 = vunpack.c.l.b16 %v2013
        %v2049 = vunpack.c.l.b16 %v2014
        %v2050 = vunpack.c.l.b16 %v2015
        %v2051 = vunpack.c.l.b16 %v2016
        %v2052 = vunpack.c.l.b16 %v2017
        %v2053 = vunpack.c.l.b16 %v2018
        %v2054 = vunpack.c.l.b16 %v2019
        %v2055 = vunpack.c.l.b16 %v2020
        %v2056 = vunpack.c.l.b16 %v2021
        %v2057 = vunpack.c.l.b16 %v2022
        %v2058 = vunpack.c.l.b16 %v2023
        %v2059 = vunpack.c.l.b16 %v2024
        %v2060 = vunpack.c.l.b16 %v2025
        %v2061 = vunpack.c.l.b16 %v2026
        %v2062 = vunpack.c.l.b16 %v2027
        %v2063 = vpack.c.b16 %v2048, %v2047
        %v2064 = vpack.c.b16 %v2050, %v2049
        %v2065 = vpack.c.b16 %v2052, %v2051
        %v2066 = vpack.c.b16 %v2054, %v2053
        %v2067 = vpack.c.b16 %v2056, %v2055
        %v2068 = vpack.c.b16 %v2058, %v2057
        %v2069 = vpack.c.b16 %v2060, %v2059
        %v2070 = vpack.c.b16 %v2062, %v2061
        %2079 = vmatprep.subr.bf16.mxu0 0
        %2080 = vmatpush1.bf16.msra.mxu0 %v2063
        %2081 = vmatprep.subr.bf16.mxu0 0
        %2082 = vmatpush1.bf16.msra.mxu0 %v2064
        %2083 = vmatprep.subr.bf16.mxu0 0
        %2084 = vmatpush1.bf16.msra.mxu0 %v2065
        %2085 = vmatprep.subr.bf16.mxu0 0
        %2086 = vmatpush1.bf16.msra.mxu0 %v2066
        %2087 = vmatprep.subr.bf16.mxu0 0
        %2088 = vmatpush1.bf16.msra.mxu0 %v2067
        %2089 = vmatprep.subr.bf16.mxu0 0
        %2090 = vmatpush1.bf16.msra.mxu0 %v2068
        %2091 = vmatprep.subr.bf16.mxu0 0
        %2092 = vmatpush1.bf16.msra.mxu0 %v2069
        %2093 = vmatprep.subr.bf16.mxu0 0
        %2094 = vmatpush1.bf16.msra.mxu0 %v2070
        %2095 = vmatprep.subr.bf16.mxu0 0
        %2096 = vmatpush1.bf16.msra.mxu0 0
        %2097 = vmatprep.subr.bf16.mxu0 0
        %2098 = vmatpush1.bf16.msra.mxu0 0
        %2099 = vmatprep.subr.bf16.mxu0 0
        %2100 = vmatpush1.bf16.msra.mxu0 0
        %2101 = vmatprep.subr.bf16.mxu0 0
        %2102 = vmatpush1.bf16.msra.mxu0 0
        %2103 = vmatprep.subr.bf16.mxu0 0
        %2104 = vmatpush1.bf16.msra.mxu0 0
        %2105 = vmatprep.subr.bf16.mxu0 0
        %2106 = vmatpush1.bf16.msra.mxu0 0
        %2107 = vmatprep.subr.bf16.mxu0 0
        %2108 = vmatpush1.bf16.msra.mxu0 0
        %2109 = vmatprep.subr.bf16.mxu0 0
        %2110 = vmatpush1.bf16.msra.mxu0 0
        %2111 = vmatprep.mubr.bf16.mxu0 0
        %2112 = vmatmul.mubr.bf16.gmra.mrb[0].mxu0 %v1726
        %v2113 = vpop.f32.mrb[0].mxu0
        %v2114 = vadd.f32 0.0, %v2113
        %v2115 = vpop.f32.mrb[0].mxu0
        %v2116 = vpop.f32.mrb[0].mxu0
        %v2117 = vadd.f32 0.0, %v2116
        %v2118 = vpop.f32.mrb[0].mxu0
        %2119 = vmatprep.mubr.bf16.mxu0 0
        %2120 = vmatmul.mubr.bf16.gmra.mrb[0].mxu0 %v1727
        %v2121 = vpop.f32.mrb[0].mxu0
        %v2122 = vadd.f32 0.0, %v2121
        %v2123 = vpop.f32.mrb[0].mxu0
        %v2124 = vpop.f32.mrb[0].mxu0
        %v2125 = vadd.f32 0.0, %v2124
        %v2126 = vpop.f32.mrb[0].mxu0
        %2127 = vmatprep.mubr.bf16.mxu0 0
        %2128 = vmatmul.mubr.bf16.gmra.mrb[0].mxu0 %v1728
        %v2129 = vpop.f32.mrb[0].mxu0
        %v2130 = vadd.f32 0.0, %v2129
        %v2131 = vpop.f32.mrb[0].mxu0
        %v2132 = vpop.f32.mrb[0].mxu0
        %v2133 = vadd.f32 0.0, %v2132
        %v2134 = vpop.f32.mrb[0].mxu0
        %2135 = vmatprep.mubr.bf16.mxu0 0
        %2136 = vmatmul.mubr.bf16.gmra.mrb[0].mxu0 %v2029
        %v2137 = vpop.f32.mrb[0].mxu0
        %v2138 = vadd.f32 0.0, %v2137
        %v2139 = vpop.f32.mrb[0].mxu0
        %v2140 = vpop.f32.mrb[0].mxu0
        %v2141 = vadd.f32 0.0, %v2140
        %v2142 = vpop.f32.mrb[0].mxu0
        %2143 = vdwg.mxu0
        %v2144 = vadd.f32 %v1998, %v2114
        %v2145 = vadd.f32 %v1999, %v2117
        %v2146 = vadd.f32 %v2000, %v2122
        %v2147 = vadd.f32 %v2001, %v2125
        %v2148 = vadd.f32 %v2002, %v2130
        %v2149 = vadd.f32 %v2003, %v2133
        %v2150 = vadd.f32 %v2004, %v2138
        %v2151 = vadd.f32 %v2005, %v2141
        %v2153 = vlaneseq
        %v2154 = vshrl.u32 %v2153, 7
        %v2155 = vsub.s32 0, %v2154
        %v2156 = vrot.slane %v616, %v2155
        %v2158 = vadd.f32 %v2144, %v2156
        %v2159 = vadd.f32 %v2145, %v2156
        %v2160 = vadd.f32 %v2146, %v2156
        %v2161 = vadd.f32 %v2147, %v2156
        %v2162 = vadd.f32 %v2148, %v2156
        %v2163 = vadd.f32 %v2149, %v2156
        %v2164 = vadd.f32 %v2150, %v2156
        %v2165 = vadd.f32 %v2151, %v2156
        %v2166 = vmax.f32 %v2158, 0.0
        %v2167 = vmax.f32 %v2159, 0.0
        %v2168 = vmax.f32 %v2160, 0.0
        %v2169 = vmax.f32 %v2161, 0.0
        %v2170 = vmax.f32 %v2162, 0.0
        %v2171 = vmax.f32 %v2163, 0.0
        %v2172 = vmax.f32 %v2164, 0.0
        %v2173 = vmax.f32 %v2165, 0.0
        %v2174 = vpack.c.bf16 %v2166, %v2166
        %v2175 = vpack.c.bf16 %v2167, %v2167
        %v2176 = vpack.c.bf16 %v2168, %v2168
        %v2177 = vpack.c.bf16 %v2169, %v2169
        %v2178 = vpack.c.bf16 %v2170, %v2170
        %v2179 = vpack.c.bf16 %v2171, %v2171
        %v2180 = vpack.c.bf16 %v2172, %v2172
        %v2181 = vpack.c.bf16 %v2173, %v2173
        %v2190 = vunpack.c.l.b16 %v2174
        %v2191 = vunpack.c.l.b16 %v2175
        %v2192 = vunpack.c.l.b16 %v2176
        %v2193 = vunpack.c.l.b16 %v2177
        %v2194 = vunpack.c.l.b16 %v2178
        %v2195 = vunpack.c.l.b16 %v2179
        %v2196 = vunpack.c.l.b16 %v2180
        %v2197 = vunpack.c.l.b16 %v2181
        %v2198 = vpack.c.b16 %v2190, %v2190
        %v2199 = vpack.c.b16 %v2191, %v2191
        %v2200 = vpack.c.b16 %v2192, %v2192
        %v2201 = vpack.c.b16 %v2193, %v2193
        %v2202 = vpack.c.b16 %v2194, %v2194
        %v2203 = vpack.c.b16 %v2195, %v2195
        %v2204 = vpack.c.b16 %v2196, %v2196
        %v2205 = vpack.c.b16 %v2197, %v2197
        %v2207 = vshrl.u32 %v2198, 16
        %v2209 = vrot.slane %v2207, 7
        %v2210 = vshll.u32 %v2198, 16
        %v2212 = vor.u32 %v2209, %v2210
        %v2213 = vrot.slane %v2209, 4
        %v2215 = vshrl.u32 %v2199, 16
        %v2217 = vrot.slane %v2215, 7
        %v2218 = vshll.u32 %v2199, 16
        %v2220 = vor.u32 %v2217, %v2218
        %v2221 = vrot.slane %v2217, 4
        %v2223 = vshrl.u32 %v2200, 16
        %v2225 = vrot.slane %v2223, 7
        %v2226 = vshll.u32 %v2200, 16
        %v2228 = vor.u32 %v2225, %v2226
        %v2229 = vrot.slane %v2225, 4
        %v2231 = vshrl.u32 %v2201, 16
        %v2233 = vrot.slane %v2231, 7
        %v2234 = vshll.u32 %v2201, 16
        %v2236 = vor.u32 %v2233, %v2234
        %v2237 = vrot.slane %v2233, 4
        %v2239 = vshrl.u32 %v2202, 16
        %v2241 = vrot.slane %v2239, 7
        %v2242 = vshll.u32 %v2202, 16
        %v2244 = vor.u32 %v2241, %v2242
        %v2245 = vrot.slane %v2241, 4
        %v2247 = vshrl.u32 %v2203, 16
        %v2249 = vrot.slane %v2247, 7
        %v2250 = vshll.u32 %v2203, 16
        %v2252 = vor.u32 %v2249, %v2250
        %v2253 = vrot.slane %v2249, 4
        %v2255 = vshrl.u32 %v2204, 16
        %v2257 = vrot.slane %v2255, 7
        %v2258 = vshll.u32 %v2204, 16
        %v2260 = vor.u32 %v2257, %v2258
        %v2261 = vrot.slane %v2257, 4
        %v2263 = vshrl.u32 %v2205, 16
        %v2265 = vrot.slane %v2263, 7
        %v2266 = vshll.u32 %v2205, 16
        %v2268 = vor.u32 %v2265, %v2266
        %v2269 = vrot.slane %v2265, 4
        %v2286 = vld [vmem:[%s424] sm:$0xf]
        %v2287 = vsel %vm567, %v2212, %v2286
        %2288 = vst [vmem:[%s424] sm:$0xf] %v2287
        %v2289 = vld [vmem:[%s424 + $0x4] sm:$0x1]
        %v2290 = vsel %vm427, %v2213, %v2289
        %2291 = vst [vmem:[%s424 + $0x4] sm:$0x1] %v2290
        %v2292 = vld [vmem:[%s424 + $0x8] sm:$0xf]
        %v2293 = vsel %vm567, %v2220, %v2292
        %2294 = vst [vmem:[%s424 + $0x8] sm:$0xf] %v2293
        %v2295 = vld [vmem:[%s424 + $0xc] sm:$0x1]
        %v2296 = vsel %vm427, %v2221, %v2295
        %2297 = vst [vmem:[%s424 + $0xc] sm:$0x1] %v2296
        %v2298 = vld [vmem:[%s424 + $0x10] sm:$0xf]
        %v2299 = vsel %vm567, %v2228, %v2298
        %2300 = vst [vmem:[%s424 + $0x10] sm:$0xf] %v2299
        %v2301 = vld [vmem:[%s424 + $0x14] sm:$0x1]
        %v2302 = vsel %vm427, %v2229, %v2301
        %2303 = vst [vmem:[%s424 + $0x14] sm:$0x1] %v2302
        %v2304 = vld [vmem:[%s424 + $0x18] sm:$0xf]
        %v2305 = vsel %vm567, %v2236, %v2304
        %2306 = vst [vmem:[%s424 + $0x18] sm:$0xf] %v2305
        %v2307 = vld [vmem:[%s424 + $0x1c] sm:$0x1]
        %v2308 = vsel %vm427, %v2237, %v2307
        %2309 = vst [vmem:[%s424 + $0x1c] sm:$0x1] %v2308
        %v2310 = vld [vmem:[%s424 + $0x20] sm:$0xf]
        %v2311 = vsel %vm567, %v2244, %v2310
        %2312 = vst [vmem:[%s424 + $0x20] sm:$0xf] %v2311
        %v2313 = vld [vmem:[%s424 + $0x24] sm:$0x1]
        %v2314 = vsel %vm427, %v2245, %v2313
        %2315 = vst [vmem:[%s424 + $0x24] sm:$0x1] %v2314
        %v2316 = vld [vmem:[%s424 + $0x28] sm:$0xf]
        %v2317 = vsel %vm567, %v2252, %v2316
        %2318 = vst [vmem:[%s424 + $0x28] sm:$0xf] %v2317
        %v2319 = vld [vmem:[%s424 + $0x2c] sm:$0x1]
        %v2320 = vsel %vm427, %v2253, %v2319
        %2321 = vst [vmem:[%s424 + $0x2c] sm:$0x1] %v2320
        %v2322 = vld [vmem:[%s424 + $0x30] sm:$0xf]
        %v2323 = vsel %vm567, %v2260, %v2322
        %2324 = vst [vmem:[%s424 + $0x30] sm:$0xf] %v2323
        %v2325 = vld [vmem:[%s424 + $0x34] sm:$0x1]
        %v2326 = vsel %vm427, %v2261, %v2325
        %2327 = vst [vmem:[%s424 + $0x34] sm:$0x1] %v2326
        %v2328 = vld [vmem:[%s424 + $0x38] sm:$0xf]
        %v2329 = vsel %vm567, %v2268, %v2328
        %2330 = vst [vmem:[%s424 + $0x38] sm:$0xf] %v2329
        %v2331 = vld [vmem:[%s424 + $0x3c] sm:$0x1]
        %v2332 = vsel %vm427, %v2269, %v2331
        %2333 = vst [vmem:[%s424 + $0x3c] sm:$0x1] %v2332
        %v2334 = vld [vmem:[#allocation11] sm:$0x1]
        %v2335 = vld [vmem:[#allocation2] sm:$0xf]
        %v2336 = vld [vmem:[#allocation2 + $0x4] sm:$0x1]
        %v2337 = vld [vmem:[#allocation2 + $0x8] sm:$0xf]
        %v2338 = vld [vmem:[#allocation2 + $0xc] sm:$0x1]
        %v2339 = vld [vmem:[#allocation2 + $0x10] sm:$0xf]
        %v2340 = vld [vmem:[#allocation2 + $0x14] sm:$0x1]
        %v2341 = vld [vmem:[#allocation2 + $0x18] sm:$0xf]
        %v2342 = vld [vmem:[#allocation2 + $0x1c] sm:$0x1]
        %v2343 = vld [vmem:[#allocation2 + $0x20] sm:$0xf]
        %v2344 = vld [vmem:[#allocation2 + $0x24] sm:$0x1]
        %v2345 = vld [vmem:[#allocation2 + $0x28] sm:$0xf]
        %v2346 = vld [vmem:[#allocation2 + $0x2c] sm:$0x1]
        %v2347 = vld [vmem:[#allocation2 + $0x30] sm:$0xf]
        %v2348 = vld [vmem:[#allocation2 + $0x34] sm:$0x1]
        %v2349 = vld [vmem:[#allocation2 + $0x38] sm:$0xf]
        %v2350 = vld [vmem:[#allocation2 + $0x3c] sm:$0x1]
        %v2351 = vld [vmem:[#allocation2 + $0x40] sm:$0xf]
        %v2352 = vld [vmem:[#allocation2 + $0x44] sm:$0x1]
        %v2353 = vld [vmem:[#allocation2 + $0x48] sm:$0xf]
        %v2354 = vld [vmem:[#allocation2 + $0x4c] sm:$0x1]
        %v2355 = vld [vmem:[#allocation9] sm:$0xf]
        %v2356 = vld [vmem:[#allocation9 + $0x4] sm:$0xf]
        %v2357 = vld [vmem:[#allocation9 + $0x8] sm:$0xf]
        %v2358 = vld [vmem:[#allocation9 + $0xc] sm:$0xf]
        %v2359 = vld [vmem:[#allocation9 + $0x10] sm:$0xf]
        %v2360 = vld [vmem:[#allocation9 + $0x14] sm:$0xf]
        %v2361 = vld [vmem:[#allocation9 + $0x18] sm:$0xf]
        %v2362 = vld [vmem:[#allocation9 + $0x1c] sm:$0xf]
        %v2363 = vld [vmem:[#allocation9 + $0x20] sm:$0xf]
        %v2364 = vld [vmem:[#allocation9 + $0x24] sm:$0xf]
        %v2365 = vld [vmem:[#allocation9 + $0x28] sm:$0xf]
        %v2366 = vld [vmem:[#allocation9 + $0x2c] sm:$0xf]
        %v2367 = vld [vmem:[#allocation9 + $0x30] sm:$0xf]
        %v2368 = vld [vmem:[#allocation9 + $0x34] sm:$0xf]
        %v2369 = vld [vmem:[#allocation9 + $0x38] sm:$0xf]
        %v2370 = vld [vmem:[#allocation9 + $0x3c] sm:$0xf]
        %s2371 = scalar_lea.vmem [#allocation9], 192
        %v2372 = vld [vmem:[%s2371] sm:$0xf]
        %v2373 = vld [vmem:[%s2371 + $0x4] sm:$0xf]
        %v2374 = vld [vmem:[%s2371 + $0x8] sm:$0xf]
        %v2375 = vld [vmem:[%s2371 + $0xc] sm:$0xf]
        %v2376 = vld [vmem:[%s2371 + $0x10] sm:$0xf]
        %v2377 = vld [vmem:[%s2371 + $0x14] sm:$0xf]
        %v2378 = vld [vmem:[%s2371 + $0x18] sm:$0xf]
        %v2379 = vld [vmem:[%s2371 + $0x1c] sm:$0xf]
        %v2380 = vld [vmem:[%s2371 + $0x20] sm:$0xf]
        %v2381 = vld [vmem:[%s2371 + $0x24] sm:$0xf]
        %v2382 = vld [vmem:[%s2371 + $0x28] sm:$0xf]
        %v2383 = vld [vmem:[%s2371 + $0x2c] sm:$0xf]
        %v2384 = vld [vmem:[%s2371 + $0x30] sm:$0xf]
        %v2385 = vld [vmem:[%s2371 + $0x34] sm:$0xf]
        %v2386 = vld [vmem:[%s2371 + $0x38] sm:$0xf]
        %v2387 = vld [vmem:[%s2371 + $0x3c] sm:$0xf]
        %v2396 = vunpack.c.l.b16 %v2337
        %v2397 = vunpack.c.l.b16 %v2339
        %v2398 = vunpack.c.l.b16 %v2341
        %v2399 = vunpack.c.l.b16 %v2343
        %v2400 = vunpack.c.l.b16 %v2345
        %v2401 = vunpack.c.l.b16 %v2347
        %v2402 = vunpack.c.l.b16 %v2349
        %v2403 = vunpack.c.l.b16 %v2351
        %v2404 = vpack.c.b16 %v2397, %v2396
        %v2405 = vpack.c.b16 %v2399, %v2398
        %v2406 = vpack.c.b16 %v2401, %v2400
        %v2407 = vpack.c.b16 %v2403, %v2402
        %v2428 = vunpack.c.l.b16 %v2372
        %v2429 = vunpack.c.l.b16 %v2373
        %v2430 = vunpack.c.l.b16 %v2374
        %v2431 = vunpack.c.l.b16 %v2375
        %v2432 = vunpack.c.l.b16 %v2376
        %v2433 = vunpack.c.l.b16 %v2377
        %v2434 = vunpack.c.l.b16 %v2378
        %v2435 = vunpack.c.l.b16 %v2379
        %v2436 = vunpack.c.l.b16 %v2380
        %v2437 = vunpack.c.l.b16 %v2381
        %v2438 = vunpack.c.l.b16 %v2382
        %v2439 = vunpack.c.l.b16 %v2383
        %v2440 = vunpack.c.l.b16 %v2384
        %v2441 = vunpack.c.l.b16 %v2385
        %v2442 = vunpack.c.l.b16 %v2386
        %v2443 = vunpack.c.l.b16 %v2387
        %v2444 = vpack.c.b16 %v2429, %v2428
        %v2445 = vpack.c.b16 %v2431, %v2430
        %v2446 = vpack.c.b16 %v2433, %v2432
        %v2447 = vpack.c.b16 %v2435, %v2434
        %v2448 = vpack.c.b16 %v2437, %v2436
        %v2449 = vpack.c.b16 %v2439, %v2438
        %v2450 = vpack.c.b16 %v2441, %v2440
        %v2451 = vpack.c.b16 %v2443, %v2442
        %2460 = vmatprep.subr.bf16.mxu0 0
        %2461 = vmatpush1.bf16.msra.mxu0 %v2444
        %2462 = vmatprep.subr.bf16.mxu0 0
        %2463 = vmatpush1.bf16.msra.mxu0 %v2445
        %2464 = vmatprep.subr.bf16.mxu0 0
        %2465 = vmatpush1.bf16.msra.mxu0 %v2446
        %2466 = vmatprep.subr.bf16.mxu0 0
        %2467 = vmatpush1.bf16.msra.mxu0 %v2447
        %2468 = vmatprep.subr.bf16.mxu0 0
        %2469 = vmatpush1.bf16.msra.mxu0 %v2448
        %2470 = vmatprep.subr.bf16.mxu0 0
        %2471 = vmatpush1.bf16.msra.mxu0 %v2449
        %2472 = vmatprep.subr.bf16.mxu0 0
        %2473 = vmatpush1.bf16.msra.mxu0 %v2450
        %2474 = vmatprep.subr.bf16.mxu0 0
        %2475 = vmatpush1.bf16.msra.mxu0 %v2451
        %2476 = vmatprep.subr.bf16.mxu0 0
        %2477 = vmatpush1.bf16.msra.mxu0 0
        %2478 = vmatprep.subr.bf16.mxu0 0
        %2479 = vmatpush1.bf16.msra.mxu0 0
        %2480 = vmatprep.subr.bf16.mxu0 0
        %2481 = vmatpush1.bf16.msra.mxu0 0
        %2482 = vmatprep.subr.bf16.mxu0 0
        %2483 = vmatpush1.bf16.msra.mxu0 0
        %2484 = vmatprep.subr.bf16.mxu0 0
        %2485 = vmatpush1.bf16.msra.mxu0 0
        %2486 = vmatprep.subr.bf16.mxu0 0
        %2487 = vmatpush1.bf16.msra.mxu0 0
        %2488 = vmatprep.subr.bf16.mxu0 0
        %2489 = vmatpush1.bf16.msra.mxu0 0
        %2490 = vmatprep.subr.bf16.mxu0 0
        %2491 = vmatpush1.bf16.msra.mxu0 0
        %2492 = vmatprep.mubr.bf16.mxu0 0
        %2493 = vmatmul.mubr.bf16.gmra.mrb[0].mxu0 %v2404
        %v2494 = vpop.f32.mrb[0].mxu0
        %v2495 = vadd.f32 0.0, %v2494
        %v2496 = vpop.f32.mrb[0].mxu0
        %v2497 = vpop.f32.mrb[0].mxu0
        %v2498 = vadd.f32 0.0, %v2497
        %v2499 = vpop.f32.mrb[0].mxu0
        %2500 = vmatprep.mubr.bf16.mxu0 0
        %2501 = vmatmul.mubr.bf16.gmra.mrb[0].mxu0 %v2405
        %v2502 = vpop.f32.mrb[0].mxu0
        %v2503 = vadd.f32 0.0, %v2502
        %v2504 = vpop.f32.mrb[0].mxu0
        %v2505 = vpop.f32.mrb[0].mxu0
        %v2506 = vadd.f32 0.0, %v2505
        %v2507 = vpop.f32.mrb[0].mxu0
        %2508 = vmatprep.mubr.bf16.mxu0 0
        %2509 = vmatmul.mubr.bf16.gmra.mrb[0].mxu0 %v2406
        %v2510 = vpop.f32.mrb[0].mxu0
        %v2511 = vadd.f32 0.0, %v2510
        %v2512 = vpop.f32.mrb[0].mxu0
        %v2513 = vpop.f32.mrb[0].mxu0
        %v2514 = vadd.f32 0.0, %v2513
        %v2515 = vpop.f32.mrb[0].mxu0
        %2516 = vmatprep.mubr.bf16.mxu0 0
        %2517 = vmatmul.mubr.bf16.gmra.mrb[0].mxu0 %v2407
        %v2518 = vpop.f32.mrb[0].mxu0
        %v2519 = vadd.f32 0.0, %v2518
        %v2520 = vpop.f32.mrb[0].mxu0
        %v2521 = vpop.f32.mrb[0].mxu0
        %v2522 = vadd.f32 0.0, %v2521
        %v2523 = vpop.f32.mrb[0].mxu0
        %2524 = vdwg.mxu0
        %v2526 = vunpack.c.l.b16 %v2335
        %v2527 = vpack.c.b16 %v2396, %v2526
        %v2528 = vpack.c.b16 %v2398, %v2397
        %v2529 = vpack.c.b16 %v2400, %v2399
        %v2530 = vpack.c.b16 %v2402, %v2401
        %v2551 = vunpack.c.l.b16 %v2355
        %v2552 = vunpack.c.l.b16 %v2356
        %v2553 = vunpack.c.l.b16 %v2357
        %v2554 = vunpack.c.l.b16 %v2358
        %v2555 = vunpack.c.l.b16 %v2359
        %v2556 = vunpack.c.l.b16 %v2360
        %v2557 = vunpack.c.l.b16 %v2361
        %v2558 = vunpack.c.l.b16 %v2362
        %v2559 = vunpack.c.l.b16 %v2363
        %v2560 = vunpack.c.l.b16 %v2364
        %v2561 = vunpack.c.l.b16 %v2365
        %v2562 = vunpack.c.l.b16 %v2366
        %v2563 = vunpack.c.l.b16 %v2367
        %v2564 = vunpack.c.l.b16 %v2368
        %v2565 = vunpack.c.l.b16 %v2369
        %v2566 = vunpack.c.l.b16 %v2370
        %v2567 = vpack.c.b16 %v2552, %v2551
        %v2568 = vpack.c.b16 %v2554, %v2553
        %v2569 = vpack.c.b16 %v2556, %v2555
        %v2570 = vpack.c.b16 %v2558, %v2557
        %v2571 = vpack.c.b16 %v2560, %v2559
        %v2572 = vpack.c.b16 %v2562, %v2561
        %v2573 = vpack.c.b16 %v2564, %v2563
        %v2574 = vpack.c.b16 %v2566, %v2565
        %2583 = vmatprep.subr.bf16.mxu0 0
        %2584 = vmatpush1.bf16.msra.mxu0 %v2567
        %2585 = vmatprep.subr.bf16.mxu0 0
        %2586 = vmatpush1.bf16.msra.mxu0 %v2568
        %2587 = vmatprep.subr.bf16.mxu0 0
        %2588 = vmatpush1.bf16.msra.mxu0 %v2569
        %2589 = vmatprep.subr.bf16.mxu0 0
        %2590 = vmatpush1.bf16.msra.mxu0 %v2570
        %2591 = vmatprep.subr.bf16.mxu0 0
        %2592 = vmatpush1.bf16.msra.mxu0 %v2571
        %2593 = vmatprep.subr.bf16.mxu0 0
        %2594 = vmatpush1.bf16.msra.mxu0 %v2572
        %2595 = vmatprep.subr.bf16.mxu0 0
        %2596 = vmatpush1.bf16.msra.mxu0 %v2573
        %2597 = vmatprep.subr.bf16.mxu0 0
        %2598 = vmatpush1.bf16.msra.mxu0 %v2574
        %2599 = vmatprep.subr.bf16.mxu0 0
        %2600 = vmatpush1.bf16.msra.mxu0 0
        %2601 = vmatprep.subr.bf16.mxu0 0
        %2602 = vmatpush1.bf16.msra.mxu0 0
        %2603 = vmatprep.subr.bf16.mxu0 0
        %2604 = vmatpush1.bf16.msra.mxu0 0
        %2605 = vmatprep.subr.bf16.mxu0 0
        %2606 = vmatpush1.bf16.msra.mxu0 0
        %2607 = vmatprep.subr.bf16.mxu0 0
        %2608 = vmatpush1.bf16.msra.mxu0 0
        %2609 = vmatprep.subr.bf16.mxu0 0
        %2610 = vmatpush1.bf16.msra.mxu0 0
        %2611 = vmatprep.subr.bf16.mxu0 0
        %2612 = vmatpush1.bf16.msra.mxu0 0
        %2613 = vmatprep.subr.bf16.mxu0 0
        %2614 = vmatpush1.bf16.msra.mxu0 0
        %2615 = vmatprep.mubr.bf16.mxu0 0
        %2616 = vmatmul.mubr.bf16.gmra.mrb[0].mxu0 %v2527
        %v2617 = vpop.f32.mrb[0].mxu0
        %v2618 = vadd.f32 %v2495, %v2617
        %v2619 = vpop.f32.mrb[0].mxu0
        %v2620 = vpop.f32.mrb[0].mxu0
        %v2621 = vadd.f32 %v2498, %v2620
        %v2622 = vpop.f32.mrb[0].mxu0
        %2623 = vmatprep.mubr.bf16.mxu0 0
        %2624 = vmatmul.mubr.bf16.gmra.mrb[0].mxu0 %v2528
        %v2625 = vpop.f32.mrb[0].mxu0
        %v2626 = vadd.f32 %v2503, %v2625
        %v2627 = vpop.f32.mrb[0].mxu0
        %v2628 = vpop.f32.mrb[0].mxu0
        %v2629 = vadd.f32 %v2506, %v2628
        %v2630 = vpop.f32.mrb[0].mxu0
        %2631 = vmatprep.mubr.bf16.mxu0 0
        %2632 = vmatmul.mubr.bf16.gmra.mrb[0].mxu0 %v2529
        %v2633 = vpop.f32.mrb[0].mxu0
        %v2634 = vadd.f32 %v2511, %v2633
        %v2635 = vpop.f32.mrb[0].mxu0
        %v2636 = vpop.f32.mrb[0].mxu0
        %v2637 = vadd.f32 %v2514, %v2636
        %v2638 = vpop.f32.mrb[0].mxu0
        %2639 = vmatprep.mubr.bf16.mxu0 0
        %2640 = vmatmul.mubr.bf16.gmra.mrb[0].mxu0 %v2530
        %v2641 = vpop.f32.mrb[0].mxu0
        %v2642 = vadd.f32 %v2519, %v2641
        %v2643 = vpop.f32.mrb[0].mxu0
        %v2644 = vpop.f32.mrb[0].mxu0
        %v2645 = vadd.f32 %v2522, %v2644
        %v2646 = vpop.f32.mrb[0].mxu0
        %2647 = vdwg.mxu0
        %s2648 = scalar_lea.vmem [#allocation9], 384
        %v2649 = vld [vmem:[%s2648] sm:$0xf]
        %v2650 = vld [vmem:[%s2648 + $0x4] sm:$0xf]
        %v2651 = vld [vmem:[%s2648 + $0x8] sm:$0xf]
        %v2652 = vld [vmem:[%s2648 + $0xc] sm:$0xf]
        %v2653 = vld [vmem:[%s2648 + $0x10] sm:$0xf]
        %v2654 = vld [vmem:[%s2648 + $0x14] sm:$0xf]
        %v2655 = vld [vmem:[%s2648 + $0x18] sm:$0xf]
        %v2656 = vld [vmem:[%s2648 + $0x1c] sm:$0xf]
        %v2657 = vld [vmem:[%s2648 + $0x20] sm:$0xf]
        %v2658 = vld [vmem:[%s2648 + $0x24] sm:$0xf]
        %v2659 = vld [vmem:[%s2648 + $0x28] sm:$0xf]
        %v2660 = vld [vmem:[%s2648 + $0x2c] sm:$0xf]
        %v2661 = vld [vmem:[%s2648 + $0x30] sm:$0xf]
        %v2662 = vld [vmem:[%s2648 + $0x34] sm:$0xf]
        %v2663 = vld [vmem:[%s2648 + $0x38] sm:$0xf]
        %v2664 = vld [vmem:[%s2648 + $0x3c] sm:$0xf]
        %v2666 = vunpack.c.l.b16 %v2353
        %v2667 = vpack.c.b16 %v2666, %v2403
        %v2685 = vunpack.c.l.b16 %v2649
        %v2686 = vunpack.c.l.b16 %v2650
        %v2687 = vunpack.c.l.b16 %v2651
        %v2688 = vunpack.c.l.b16 %v2652
        %v2689 = vunpack.c.l.b16 %v2653
        %v2690 = vunpack.c.l.b16 %v2654
        %v2691 = vunpack.c.l.b16 %v2655
        %v2692 = vunpack.c.l.b16 %v2656
        %v2693 = vunpack.c.l.b16 %v2657
        %v2694 = vunpack.c.l.b16 %v2658
        %v2695 = vunpack.c.l.b16 %v2659
        %v2696 = vunpack.c.l.b16 %v2660
        %v2697 = vunpack.c.l.b16 %v2661
        %v2698 = vunpack.c.l.b16 %v2662
        %v2699 = vunpack.c.l.b16 %v2663
        %v2700 = vunpack.c.l.b16 %v2664
        %v2701 = vpack.c.b16 %v2686, %v2685
        %v2702 = vpack.c.b16 %v2688, %v2687
        %v2703 = vpack.c.b16 %v2690, %v2689
        %v2704 = vpack.c.b16 %v2692, %v2691
        %v2705 = vpack.c.b16 %v2694, %v2693
        %v2706 = vpack.c.b16 %v2696, %v2695
        %v2707 = vpack.c.b16 %v2698, %v2697
        %v2708 = vpack.c.b16 %v2700, %v2699
        %2717 = vmatprep.subr.bf16.mxu0 0
        %2718 = vmatpush1.bf16.msra.mxu0 %v2701
        %2719 = vmatprep.subr.bf16.mxu0 0
        %2720 = vmatpush1.bf16.msra.mxu0 %v2702
        %2721 = vmatprep.subr.bf16.mxu0 0
        %2722 = vmatpush1.bf16.msra.mxu0 %v2703
        %2723 = vmatprep.subr.bf16.mxu0 0
        %2724 = vmatpush1.bf16.msra.mxu0 %v2704
        %2725 = vmatprep.subr.bf16.mxu0 0
        %2726 = vmatpush1.bf16.msra.mxu0 %v2705
        %2727 = vmatprep.subr.bf16.mxu0 0
        %2728 = vmatpush1.bf16.msra.mxu0 %v2706
        %2729 = vmatprep.subr.bf16.mxu0 0
        %2730 = vmatpush1.bf16.msra.mxu0 %v2707
        %2731 = vmatprep.subr.bf16.mxu0 0
        %2732 = vmatpush1.bf16.msra.mxu0 %v2708
        %2733 = vmatprep.subr.bf16.mxu0 0
        %2734 = vmatpush1.bf16.msra.mxu0 0
        %2735 = vmatprep.subr.bf16.mxu0 0
        %2736 = vmatpush1.bf16.msra.mxu0 0
        %2737 = vmatprep.subr.bf16.mxu0 0
        %2738 = vmatpush1.bf16.msra.mxu0 0
        %2739 = vmatprep.subr.bf16.mxu0 0
        %2740 = vmatpush1.bf16.msra.mxu0 0
        %2741 = vmatprep.subr.bf16.mxu0 0
        %2742 = vmatpush1.bf16.msra.mxu0 0
        %2743 = vmatprep.subr.bf16.mxu0 0
        %2744 = vmatpush1.bf16.msra.mxu0 0
        %2745 = vmatprep.subr.bf16.mxu0 0
        %2746 = vmatpush1.bf16.msra.mxu0 0
        %2747 = vmatprep.subr.bf16.mxu0 0
        %2748 = vmatpush1.bf16.msra.mxu0 0
        %2749 = vmatprep.mubr.bf16.mxu0 0
        %2750 = vmatmul.mubr.bf16.gmra.mrb[0].mxu0 %v2528
        %v2751 = vpop.f32.mrb[0].mxu0
        %v2752 = vadd.f32 0.0, %v2751
        %v2753 = vpop.f32.mrb[0].mxu0
        %v2754 = vpop.f32.mrb[0].mxu0
        %v2755 = vadd.f32 0.0, %v2754
        %v2756 = vpop.f32.mrb[0].mxu0
        %2757 = vmatprep.mubr.bf16.mxu0 0
        %2758 = vmatmul.mubr.bf16.gmra.mrb[0].mxu0 %v2529
        %v2759 = vpop.f32.mrb[0].mxu0
        %v2760 = vadd.f32 0.0, %v2759
        %v2761 = vpop.f32.mrb[0].mxu0
        %v2762 = vpop.f32.mrb[0].mxu0
        %v2763 = vadd.f32 0.0, %v2762
        %v2764 = vpop.f32.mrb[0].mxu0
        %2765 = vmatprep.mubr.bf16.mxu0 0
        %2766 = vmatmul.mubr.bf16.gmra.mrb[0].mxu0 %v2530
        %v2767 = vpop.f32.mrb[0].mxu0
        %v2768 = vadd.f32 0.0, %v2767
        %v2769 = vpop.f32.mrb[0].mxu0
        %v2770 = vpop.f32.mrb[0].mxu0
        %v2771 = vadd.f32 0.0, %v2770
        %v2772 = vpop.f32.mrb[0].mxu0
        %2773 = vmatprep.mubr.bf16.mxu0 0
        %2774 = vmatmul.mubr.bf16.gmra.mrb[0].mxu0 %v2667
        %v2775 = vpop.f32.mrb[0].mxu0
        %v2776 = vadd.f32 0.0, %v2775
        %v2777 = vpop.f32.mrb[0].mxu0
        %v2778 = vpop.f32.mrb[0].mxu0
        %v2779 = vadd.f32 0.0, %v2778
        %v2780 = vpop.f32.mrb[0].mxu0
        %2781 = vdwg.mxu0
        %v2782 = vadd.f32 %v2618, %v2752
        %v2783 = vadd.f32 %v2621, %v2755
        %v2784 = vadd.f32 %v2626, %v2760
        %v2785 = vadd.f32 %v2629, %v2763
        %v2786 = vadd.f32 %v2634, %v2768
        %v2787 = vadd.f32 %v2637, %v2771
        %v2788 = vadd.f32 %v2642, %v2776
        %v2789 = vadd.f32 %v2645, %v2779
        %v2791 = vshrl.u32 %v2335, 16
        %v2793 = vrot.slane %v2791, 4
        %v2794 = vshll.u32 %v2335, 16
        %v2796 = vrot.slane %v2794, 5
        %v2797 = vor.u32 %v2793, %v2796
        %v2798 = vrot.slane %v2797, 4
        %v2800 = vshll.u32 %v2336, 16
        %v2802 = vrot.slane %v2800, 5
        %v2803 = vsel %vm1074, %v2798, %v2802
        %v2805 = vshrl.u32 %v2337, 16
        %v2807 = vrot.slane %v2805, 4
        %v2808 = vshll.u32 %v2337, 16
        %v2810 = vrot.slane %v2808, 5
        %v2811 = vor.u32 %v2807, %v2810
        %v2812 = vrot.slane %v2811, 4
        %v2814 = vshll.u32 %v2338, 16
        %v2816 = vrot.slane %v2814, 5
        %v2817 = vsel %vm1074, %v2812, %v2816
        %v2819 = vshrl.u32 %v2339, 16
        %v2821 = vrot.slane %v2819, 4
        %v2822 = vshll.u32 %v2339, 16
        %v2824 = vrot.slane %v2822, 5
        %v2825 = vor.u32 %v2821, %v2824
        %v2826 = vrot.slane %v2825, 4
        %v2828 = vshll.u32 %v2340, 16
        %v2830 = vrot.slane %v2828, 5
        %v2831 = vsel %vm1074, %v2826, %v2830
        %v2833 = vshrl.u32 %v2341, 16
        %v2835 = vrot.slane %v2833, 4
        %v2836 = vshll.u32 %v2341, 16
        %v2838 = vrot.slane %v2836, 5
        %v2839 = vor.u32 %v2835, %v2838
        %v2840 = vrot.slane %v2839, 4
        %v2842 = vshll.u32 %v2342, 16
        %v2844 = vrot.slane %v2842, 5
        %v2845 = vsel %vm1074, %v2840, %v2844
        %v2847 = vshrl.u32 %v2343, 16
        %v2849 = vrot.slane %v2847, 4
        %v2850 = vshll.u32 %v2343, 16
        %v2852 = vrot.slane %v2850, 5
        %v2853 = vor.u32 %v2849, %v2852
        %v2854 = vrot.slane %v2853, 4
        %v2856 = vshll.u32 %v2344, 16
        %v2858 = vrot.slane %v2856, 5
        %v2859 = vsel %vm1074, %v2854, %v2858
        %v2861 = vshrl.u32 %v2345, 16
        %v2863 = vrot.slane %v2861, 4
        %v2864 = vshll.u32 %v2345, 16
        %v2866 = vrot.slane %v2864, 5
        %v2867 = vor.u32 %v2863, %v2866
        %v2868 = vrot.slane %v2867, 4
        %v2870 = vshll.u32 %v2346, 16
        %v2872 = vrot.slane %v2870, 5
        %v2873 = vsel %vm1074, %v2868, %v2872
        %v2875 = vshrl.u32 %v2347, 16
        %v2877 = vrot.slane %v2875, 4
        %v2878 = vshll.u32 %v2347, 16
        %v2880 = vrot.slane %v2878, 5
        %v2881 = vor.u32 %v2877, %v2880
        %v2882 = vrot.slane %v2881, 4
        %v2884 = vshll.u32 %v2348, 16
        %v2886 = vrot.slane %v2884, 5
        %v2887 = vsel %vm1074, %v2882, %v2886
        %v2889 = vshrl.u32 %v2349, 16
        %v2891 = vrot.slane %v2889, 4
        %v2892 = vshll.u32 %v2349, 16
        %v2894 = vrot.slane %v2892, 5
        %v2895 = vor.u32 %v2891, %v2894
        %v2896 = vrot.slane %v2895, 4
        %v2898 = vshll.u32 %v2350, 16
        %v2900 = vrot.slane %v2898, 5
        %v2901 = vsel %vm1074, %v2896, %v2900
        %s2902 = scalar_lea.vmem [#allocation9], 64
        %v2903 = vld [vmem:[%s2902] sm:$0xf]
        %v2904 = vld [vmem:[%s2902 + $0x4] sm:$0xf]
        %v2905 = vld [vmem:[%s2902 + $0x8] sm:$0xf]
        %v2906 = vld [vmem:[%s2902 + $0xc] sm:$0xf]
        %v2907 = vld [vmem:[%s2902 + $0x10] sm:$0xf]
        %v2908 = vld [vmem:[%s2902 + $0x14] sm:$0xf]
        %v2909 = vld [vmem:[%s2902 + $0x18] sm:$0xf]
        %v2910 = vld [vmem:[%s2902 + $0x1c] sm:$0xf]
        %v2911 = vld [vmem:[%s2902 + $0x20] sm:$0xf]
        %v2912 = vld [vmem:[%s2902 + $0x24] sm:$0xf]
        %v2913 = vld [vmem:[%s2902 + $0x28] sm:$0xf]
        %v2914 = vld [vmem:[%s2902 + $0x2c] sm:$0xf]
        %v2915 = vld [vmem:[%s2902 + $0x30] sm:$0xf]
        %v2916 = vld [vmem:[%s2902 + $0x34] sm:$0xf]
        %v2917 = vld [vmem:[%s2902 + $0x38] sm:$0xf]
        %v2918 = vld [vmem:[%s2902 + $0x3c] sm:$0xf]
        %v2919 = vunpack.c.l.b16 %v2803
        %v2920 = vunpack.c.l.b16 %v2817
        %v2921 = vunpack.c.l.b16 %v2831
        %v2922 = vunpack.c.l.b16 %v2845
        %v2923 = vunpack.c.l.b16 %v2859
        %v2924 = vunpack.c.l.b16 %v2873
        %v2925 = vunpack.c.l.b16 %v2887
        %v2926 = vunpack.c.l.b16 %v2901
        %v2927 = vpack.c.b16 %v2920, %v2919
        %v2928 = vpack.c.b16 %v2922, %v2921
        %v2929 = vpack.c.b16 %v2924, %v2923
        %v2930 = vpack.c.b16 %v2926, %v2925
        %v2951 = vunpack.c.l.b16 %v2903
        %v2952 = vunpack.c.l.b16 %v2904
        %v2953 = vunpack.c.l.b16 %v2905
        %v2954 = vunpack.c.l.b16 %v2906
        %v2955 = vunpack.c.l.b16 %v2907
        %v2956 = vunpack.c.l.b16 %v2908
        %v2957 = vunpack.c.l.b16 %v2909
        %v2958 = vunpack.c.l.b16 %v2910
        %v2959 = vunpack.c.l.b16 %v2911
        %v2960 = vunpack.c.l.b16 %v2912
        %v2961 = vunpack.c.l.b16 %v2913
        %v2962 = vunpack.c.l.b16 %v2914
        %v2963 = vunpack.c.l.b16 %v2915
        %v2964 = vunpack.c.l.b16 %v2916
        %v2965 = vunpack.c.l.b16 %v2917
        %v2966 = vunpack.c.l.b16 %v2918
        %v2967 = vpack.c.b16 %v2952, %v2951
        %v2968 = vpack.c.b16 %v2954, %v2953
        %v2969 = vpack.c.b16 %v2956, %v2955
        %v2970 = vpack.c.b16 %v2958, %v2957
        %v2971 = vpack.c.b16 %v2960, %v2959
        %v2972 = vpack.c.b16 %v2962, %v2961
        %v2973 = vpack.c.b16 %v2964, %v2963
        %v2974 = vpack.c.b16 %v2966, %v2965
        %2983 = vmatprep.subr.bf16.mxu0 0
        %2984 = vmatpush1.bf16.msra.mxu0 %v2967
        %2985 = vmatprep.subr.bf16.mxu0 0
        %2986 = vmatpush1.bf16.msra.mxu0 %v2968
        %2987 = vmatprep.subr.bf16.mxu0 0
        %2988 = vmatpush1.bf16.msra.mxu0 %v2969
        %2989 = vmatprep.subr.bf16.mxu0 0
        %2990 = vmatpush1.bf16.msra.mxu0 %v2970
        %2991 = vmatprep.subr.bf16.mxu0 0
        %2992 = vmatpush1.bf16.msra.mxu0 %v2971
        %2993 = vmatprep.subr.bf16.mxu0 0
        %2994 = vmatpush1.bf16.msra.mxu0 %v2972
        %2995 = vmatprep.subr.bf16.mxu0 0
        %2996 = vmatpush1.bf16.msra.mxu0 %v2973
        %2997 = vmatprep.subr.bf16.mxu0 0
        %2998 = vmatpush1.bf16.msra.mxu0 %v2974
        %2999 = vmatprep.subr.bf16.mxu0 0
        %3000 = vmatpush1.bf16.msra.mxu0 0
        %3001 = vmatprep.subr.bf16.mxu0 0
        %3002 = vmatpush1.bf16.msra.mxu0 0
        %3003 = vmatprep.subr.bf16.mxu0 0
        %3004 = vmatpush1.bf16.msra.mxu0 0
        %3005 = vmatprep.subr.bf16.mxu0 0
        %3006 = vmatpush1.bf16.msra.mxu0 0
        %3007 = vmatprep.subr.bf16.mxu0 0
        %3008 = vmatpush1.bf16.msra.mxu0 0
        %3009 = vmatprep.subr.bf16.mxu0 0
        %3010 = vmatpush1.bf16.msra.mxu0 0
        %3011 = vmatprep.subr.bf16.mxu0 0
        %3012 = vmatpush1.bf16.msra.mxu0 0
        %3013 = vmatprep.subr.bf16.mxu0 0
        %3014 = vmatpush1.bf16.msra.mxu0 0
        %3015 = vmatprep.mubr.bf16.mxu0 0
        %3016 = vmatmul.mubr.bf16.gmra.mrb[0].mxu0 %v2927
        %v3017 = vpop.f32.mrb[0].mxu0
        %v3018 = vadd.f32 0.0, %v3017
        %v3019 = vpop.f32.mrb[0].mxu0
        %v3020 = vpop.f32.mrb[0].mxu0
        %v3021 = vadd.f32 0.0, %v3020
        %v3022 = vpop.f32.mrb[0].mxu0
        %3023 = vmatprep.mubr.bf16.mxu0 0
        %3024 = vmatmul.mubr.bf16.gmra.mrb[0].mxu0 %v2928
        %v3025 = vpop.f32.mrb[0].mxu0
        %v3026 = vadd.f32 0.0, %v3025
        %v3027 = vpop.f32.mrb[0].mxu0
        %v3028 = vpop.f32.mrb[0].mxu0
        %v3029 = vadd.f32 0.0, %v3028
        %v3030 = vpop.f32.mrb[0].mxu0
        %3031 = vmatprep.mubr.bf16.mxu0 0
        %3032 = vmatmul.mubr.bf16.gmra.mrb[0].mxu0 %v2929
        %v3033 = vpop.f32.mrb[0].mxu0
        %v3034 = vadd.f32 0.0, %v3033
        %v3035 = vpop.f32.mrb[0].mxu0
        %v3036 = vpop.f32.mrb[0].mxu0
        %v3037 = vadd.f32 0.0, %v3036
        %v3038 = vpop.f32.mrb[0].mxu0
        %3039 = vmatprep.mubr.bf16.mxu0 0
        %3040 = vmatmul.mubr.bf16.gmra.mrb[0].mxu0 %v2930
        %v3041 = vpop.f32.mrb[0].mxu0
        %v3042 = vadd.f32 0.0, %v3041
        %v3043 = vpop.f32.mrb[0].mxu0
        %v3044 = vpop.f32.mrb[0].mxu0
        %v3045 = vadd.f32 0.0, %v3044
        %v3046 = vpop.f32.mrb[0].mxu0
        %3047 = vdwg.mxu0
        %v3048 = vadd.f32 %v2782, %v3018
        %v3049 = vadd.f32 %v2783, %v3021
        %v3050 = vadd.f32 %v2784, %v3026
        %v3051 = vadd.f32 %v2785, %v3029
        %v3052 = vadd.f32 %v2786, %v3034
        %v3053 = vadd.f32 %v2787, %v3037
        %v3054 = vadd.f32 %v2788, %v3042
        %v3055 = vadd.f32 %v2789, %v3045
        %v3057 = vshrl.u32 %v2351, 16
        %v3059 = vrot.slane %v3057, 4
        %v3060 = vshll.u32 %v2351, 16
        %v3062 = vrot.slane %v3060, 5
        %v3063 = vor.u32 %v3059, %v3062
        %v3064 = vrot.slane %v3063, 4
        %v3066 = vshll.u32 %v2352, 16
        %v3068 = vrot.slane %v3066, 5
        %v3069 = vsel %vm1074, %v3064, %v3068
        %s3070 = scalar_lea.vmem [#allocation9], 256
        %v3071 = vld [vmem:[%s3070] sm:$0xf]
        %v3072 = vld [vmem:[%s3070 + $0x4] sm:$0xf]
        %v3073 = vld [vmem:[%s3070 + $0x8] sm:$0xf]
        %v3074 = vld [vmem:[%s3070 + $0xc] sm:$0xf]
        %v3075 = vld [vmem:[%s3070 + $0x10] sm:$0xf]
        %v3076 = vld [vmem:[%s3070 + $0x14] sm:$0xf]
        %v3077 = vld [vmem:[%s3070 + $0x18] sm:$0xf]
        %v3078 = vld [vmem:[%s3070 + $0x1c] sm:$0xf]
        %v3079 = vld [vmem:[%s3070 + $0x20] sm:$0xf]
        %v3080 = vld [vmem:[%s3070 + $0x24] sm:$0xf]
        %v3081 = vld [vmem:[%s3070 + $0x28] sm:$0xf]
        %v3082 = vld [vmem:[%s3070 + $0x2c] sm:$0xf]
        %v3083 = vld [vmem:[%s3070 + $0x30] sm:$0xf]
        %v3084 = vld [vmem:[%s3070 + $0x34] sm:$0xf]
        %v3085 = vld [vmem:[%s3070 + $0x38] sm:$0xf]
        %v3086 = vld [vmem:[%s3070 + $0x3c] sm:$0xf]
        %v3087 = vunpack.c.l.b16 %v3069
        %v3088 = vpack.c.b16 %v2921, %v2920
        %v3089 = vpack.c.b16 %v2923, %v2922
        %v3090 = vpack.c.b16 %v2925, %v2924
        %v3091 = vpack.c.b16 %v3087, %v2926
        %v3112 = vunpack.c.l.b16 %v3071
        %v3113 = vunpack.c.l.b16 %v3072
        %v3114 = vunpack.c.l.b16 %v3073
        %v3115 = vunpack.c.l.b16 %v3074
        %v3116 = vunpack.c.l.b16 %v3075
        %v3117 = vunpack.c.l.b16 %v3076
        %v3118 = vunpack.c.l.b16 %v3077
        %v3119 = vunpack.c.l.b16 %v3078
        %v3120 = vunpack.c.l.b16 %v3079
        %v3121 = vunpack.c.l.b16 %v3080
        %v3122 = vunpack.c.l.b16 %v3081
        %v3123 = vunpack.c.l.b16 %v3082
        %v3124 = vunpack.c.l.b16 %v3083
        %v3125 = vunpack.c.l.b16 %v3084
        %v3126 = vunpack.c.l.b16 %v3085
        %v3127 = vunpack.c.l.b16 %v3086
        %v3128 = vpack.c.b16 %v3113, %v3112
        %v3129 = vpack.c.b16 %v3115, %v3114
        %v3130 = vpack.c.b16 %v3117, %v3116
        %v3131 = vpack.c.b16 %v3119, %v3118
        %v3132 = vpack.c.b16 %v3121, %v3120
        %v3133 = vpack.c.b16 %v3123, %v3122
        %v3134 = vpack.c.b16 %v3125, %v3124
        %v3135 = vpack.c.b16 %v3127, %v3126
        %3144 = vmatprep.subr.bf16.mxu0 0
        %3145 = vmatpush1.bf16.msra.mxu0 %v3128
        %3146 = vmatprep.subr.bf16.mxu0 0
        %3147 = vmatpush1.bf16.msra.mxu0 %v3129
        %3148 = vmatprep.subr.bf16.mxu0 0
        %3149 = vmatpush1.bf16.msra.mxu0 %v3130
        %3150 = vmatprep.subr.bf16.mxu0 0
        %3151 = vmatpush1.bf16.msra.mxu0 %v3131
        %3152 = vmatprep.subr.bf16.mxu0 0
        %3153 = vmatpush1.bf16.msra.mxu0 %v3132
        %3154 = vmatprep.subr.bf16.mxu0 0
        %3155 = vmatpush1.bf16.msra.mxu0 %v3133
        %3156 = vmatprep.subr.bf16.mxu0 0
        %3157 = vmatpush1.bf16.msra.mxu0 %v3134
        %3158 = vmatprep.subr.bf16.mxu0 0
        %3159 = vmatpush1.bf16.msra.mxu0 %v3135
        %3160 = vmatprep.subr.bf16.mxu0 0
        %3161 = vmatpush1.bf16.msra.mxu0 0
        %3162 = vmatprep.subr.bf16.mxu0 0
        %3163 = vmatpush1.bf16.msra.mxu0 0
        %3164 = vmatprep.subr.bf16.mxu0 0
        %3165 = vmatpush1.bf16.msra.mxu0 0
        %3166 = vmatprep.subr.bf16.mxu0 0
        %3167 = vmatpush1.bf16.msra.mxu0 0
        %3168 = vmatprep.subr.bf16.mxu0 0
        %3169 = vmatpush1.bf16.msra.mxu0 0
        %3170 = vmatprep.subr.bf16.mxu0 0
        %3171 = vmatpush1.bf16.msra.mxu0 0
        %3172 = vmatprep.subr.bf16.mxu0 0
        %3173 = vmatpush1.bf16.msra.mxu0 0
        %3174 = vmatprep.subr.bf16.mxu0 0
        %3175 = vmatpush1.bf16.msra.mxu0 0
        %3176 = vmatprep.mubr.bf16.mxu0 0
        %3177 = vmatmul.mubr.bf16.gmra.mrb[0].mxu0 %v3088
        %v3178 = vpop.f32.mrb[0].mxu0
        %v3179 = vadd.f32 0.0, %v3178
        %v3180 = vpop.f32.mrb[0].mxu0
        %v3181 = vpop.f32.mrb[0].mxu0
        %v3182 = vadd.f32 0.0, %v3181
        %v3183 = vpop.f32.mrb[0].mxu0
        %3184 = vmatprep.mubr.bf16.mxu0 0
        %3185 = vmatmul.mubr.bf16.gmra.mrb[0].mxu0 %v3089
        %v3186 = vpop.f32.mrb[0].mxu0
        %v3187 = vadd.f32 0.0, %v3186
        %v3188 = vpop.f32.mrb[0].mxu0
        %v3189 = vpop.f32.mrb[0].mxu0
        %v3190 = vadd.f32 0.0, %v3189
        %v3191 = vpop.f32.mrb[0].mxu0
        %3192 = vmatprep.mubr.bf16.mxu0 0
        %3193 = vmatmul.mubr.bf16.gmra.mrb[0].mxu0 %v3090
        %v3194 = vpop.f32.mrb[0].mxu0
        %v3195 = vadd.f32 0.0, %v3194
        %v3196 = vpop.f32.mrb[0].mxu0
        %v3197 = vpop.f32.mrb[0].mxu0
        %v3198 = vadd.f32 0.0, %v3197
        %v3199 = vpop.f32.mrb[0].mxu0
        %3200 = vmatprep.mubr.bf16.mxu0 0
        %3201 = vmatmul.mubr.bf16.gmra.mrb[0].mxu0 %v3091
        %v3202 = vpop.f32.mrb[0].mxu0
        %v3203 = vadd.f32 0.0, %v3202
        %v3204 = vpop.f32.mrb[0].mxu0
        %v3205 = vpop.f32.mrb[0].mxu0
        %v3206 = vadd.f32 0.0, %v3205
        %v3207 = vpop.f32.mrb[0].mxu0
        %3208 = vdwg.mxu0
        %v3209 = vadd.f32 %v3048, %v3179
        %v3210 = vadd.f32 %v3049, %v3182
        %v3211 = vadd.f32 %v3050, %v3187
        %v3212 = vadd.f32 %v3051, %v3190
        %v3213 = vadd.f32 %v3052, %v3195
        %v3214 = vadd.f32 %v3053, %v3198
        %v3215 = vadd.f32 %v3054, %v3203
        %v3216 = vadd.f32 %v3055, %v3206
        %v3218 = vshrl.u32 %v2353, 16
        %v3220 = vrot.slane %v3218, 4
        %v3221 = vshll.u32 %v2353, 16
        %v3223 = vrot.slane %v3221, 5
        %v3224 = vor.u32 %v3220, %v3223
        %v3225 = vrot.slane %v3224, 4
        %v3227 = vshll.u32 %v2354, 16
        %v3229 = vrot.slane %v3227, 5
        %v3230 = vsel %vm1074, %v3225, %v3229
        %s3231 = scalar_lea.vmem [#allocation9], 448
        %v3232 = vld [vmem:[%s3231] sm:$0xf]
        %v3233 = vld [vmem:[%s3231 + $0x4] sm:$0xf]
        %v3234 = vld [vmem:[%s3231 + $0x8] sm:$0xf]
        %v3235 = vld [vmem:[%s3231 + $0xc] sm:$0xf]
        %v3236 = vld [vmem:[%s3231 + $0x10] sm:$0xf]
        %v3237 = vld [vmem:[%s3231 + $0x14] sm:$0xf]
        %v3238 = vld [vmem:[%s3231 + $0x18] sm:$0xf]
        %v3239 = vld [vmem:[%s3231 + $0x1c] sm:$0xf]
        %v3240 = vld [vmem:[%s3231 + $0x20] sm:$0xf]
        %v3241 = vld [vmem:[%s3231 + $0x24] sm:$0xf]
        %v3242 = vld [vmem:[%s3231 + $0x28] sm:$0xf]
        %v3243 = vld [vmem:[%s3231 + $0x2c] sm:$0xf]
        %v3244 = vld [vmem:[%s3231 + $0x30] sm:$0xf]
        %v3245 = vld [vmem:[%s3231 + $0x34] sm:$0xf]
        %v3246 = vld [vmem:[%s3231 + $0x38] sm:$0xf]
        %v3247 = vld [vmem:[%s3231 + $0x3c] sm:$0xf]
        %v3248 = vunpack.c.l.b16 %v3230
        %v3249 = vpack.c.b16 %v3248, %v3087
        %v3267 = vunpack.c.l.b16 %v3232
        %v3268 = vunpack.c.l.b16 %v3233
        %v3269 = vunpack.c.l.b16 %v3234
        %v3270 = vunpack.c.l.b16 %v3235
        %v3271 = vunpack.c.l.b16 %v3236
        %v3272 = vunpack.c.l.b16 %v3237
        %v3273 = vunpack.c.l.b16 %v3238
        %v3274 = vunpack.c.l.b16 %v3239
        %v3275 = vunpack.c.l.b16 %v3240
        %v3276 = vunpack.c.l.b16 %v3241
        %v3277 = vunpack.c.l.b16 %v3242
        %v3278 = vunpack.c.l.b16 %v3243
        %v3279 = vunpack.c.l.b16 %v3244
        %v3280 = vunpack.c.l.b16 %v3245
        %v3281 = vunpack.c.l.b16 %v3246
        %v3282 = vunpack.c.l.b16 %v3247
        %v3283 = vpack.c.b16 %v3268, %v3267
        %v3284 = vpack.c.b16 %v3270, %v3269
        %v3285 = vpack.c.b16 %v3272, %v3271
        %v3286 = vpack.c.b16 %v3274, %v3273
        %v3287 = vpack.c.b16 %v3276, %v3275
        %v3288 = vpack.c.b16 %v3278, %v3277
        %v3289 = vpack.c.b16 %v3280, %v3279
        %v3290 = vpack.c.b16 %v3282, %v3281
        %3299 = vmatprep.subr.bf16.mxu0 0
        %3300 = vmatpush1.bf16.msra.mxu0 %v3283
        %3301 = vmatprep.subr.bf16.mxu0 0
        %3302 = vmatpush1.bf16.msra.mxu0 %v3284
        %3303 = vmatprep.subr.bf16.mxu0 0
        %3304 = vmatpush1.bf16.msra.mxu0 %v3285
        %3305 = vmatprep.subr.bf16.mxu0 0
        %3306 = vmatpush1.bf16.msra.mxu0 %v3286
        %3307 = vmatprep.subr.bf16.mxu0 0
        %3308 = vmatpush1.bf16.msra.mxu0 %v3287
        %3309 = vmatprep.subr.bf16.mxu0 0
        %3310 = vmatpush1.bf16.msra.mxu0 %v3288
        %3311 = vmatprep.subr.bf16.mxu0 0
        %3312 = vmatpush1.bf16.msra.mxu0 %v3289
        %3313 = vmatprep.subr.bf16.mxu0 0
        %3314 = vmatpush1.bf16.msra.mxu0 %v3290
        %3315 = vmatprep.subr.bf16.mxu0 0
        %3316 = vmatpush1.bf16.msra.mxu0 0
        %3317 = vmatprep.subr.bf16.mxu0 0
        %3318 = vmatpush1.bf16.msra.mxu0 0
        %3319 = vmatprep.subr.bf16.mxu0 0
        %3320 = vmatpush1.bf16.msra.mxu0 0
        %3321 = vmatprep.subr.bf16.mxu0 0
        %3322 = vmatpush1.bf16.msra.mxu0 0
        %3323 = vmatprep.subr.bf16.mxu0 0
        %3324 = vmatpush1.bf16.msra.mxu0 0
        %3325 = vmatprep.subr.bf16.mxu0 0
        %3326 = vmatpush1.bf16.msra.mxu0 0
        %3327 = vmatprep.subr.bf16.mxu0 0
        %3328 = vmatpush1.bf16.msra.mxu0 0
        %3329 = vmatprep.subr.bf16.mxu0 0
        %3330 = vmatpush1.bf16.msra.mxu0 0
        %3331 = vmatprep.mubr.bf16.mxu0 0
        %3332 = vmatmul.mubr.bf16.gmra.mrb[0].mxu0 %v2928
        %v3333 = vpop.f32.mrb[0].mxu0
        %v3334 = vadd.f32 0.0, %v3333
        %v3335 = vpop.f32.mrb[0].mxu0
        %v3336 = vpop.f32.mrb[0].mxu0
        %v3337 = vadd.f32 0.0, %v3336
        %v3338 = vpop.f32.mrb[0].mxu0
        %3339 = vmatprep.mubr.bf16.mxu0 0
        %3340 = vmatmul.mubr.bf16.gmra.mrb[0].mxu0 %v2929
        %v3341 = vpop.f32.mrb[0].mxu0
        %v3342 = vadd.f32 0.0, %v3341
        %v3343 = vpop.f32.mrb[0].mxu0
        %v3344 = vpop.f32.mrb[0].mxu0
        %v3345 = vadd.f32 0.0, %v3344
        %v3346 = vpop.f32.mrb[0].mxu0
        %3347 = vmatprep.mubr.bf16.mxu0 0
        %3348 = vmatmul.mubr.bf16.gmra.mrb[0].mxu0 %v2930
        %v3349 = vpop.f32.mrb[0].mxu0
        %v3350 = vadd.f32 0.0, %v3349
        %v3351 = vpop.f32.mrb[0].mxu0
        %v3352 = vpop.f32.mrb[0].mxu0
        %v3353 = vadd.f32 0.0, %v3352
        %v3354 = vpop.f32.mrb[0].mxu0
        %3355 = vmatprep.mubr.bf16.mxu0 0
        %3356 = vmatmul.mubr.bf16.gmra.mrb[0].mxu0 %v3249
        %v3357 = vpop.f32.mrb[0].mxu0
        %v3358 = vadd.f32 0.0, %v3357
        %v3359 = vpop.f32.mrb[0].mxu0
        %v3360 = vpop.f32.mrb[0].mxu0
        %v3361 = vadd.f32 0.0, %v3360
        %v3362 = vpop.f32.mrb[0].mxu0
        %3363 = vdwg.mxu0
        %v3364 = vadd.f32 %v3209, %v3334
        %v3365 = vadd.f32 %v3210, %v3337
        %v3366 = vadd.f32 %v3211, %v3342
        %v3367 = vadd.f32 %v3212, %v3345
        %v3368 = vadd.f32 %v3213, %v3350
        %v3369 = vadd.f32 %v3214, %v3353
        %v3370 = vadd.f32 %v3215, %v3358
        %v3371 = vadd.f32 %v3216, %v3361
        %v3380 = vrot.slane %v2335, 5
        %v3381 = vrot.slane %v3380, 4
        %v3382 = vrot.slane %v2336, 5
        %v3383 = vsel %vm1667, %v3381, %v3382
        %v3384 = vrot.slane %v2337, 5
        %v3385 = vrot.slane %v3384, 4
        %v3386 = vrot.slane %v2338, 5
        %v3387 = vsel %vm1667, %v3385, %v3386
        %v3388 = vrot.slane %v2339, 5
        %v3389 = vrot.slane %v3388, 4
        %v3390 = vrot.slane %v2340, 5
        %v3391 = vsel %vm1667, %v3389, %v3390
        %v3392 = vrot.slane %v2341, 5
        %v3393 = vrot.slane %v3392, 4
        %v3394 = vrot.slane %v2342, 5
        %v3395 = vsel %vm1667, %v3393, %v3394
        %v3396 = vrot.slane %v2343, 5
        %v3397 = vrot.slane %v3396, 4
        %v3398 = vrot.slane %v2344, 5
        %v3399 = vsel %vm1667, %v3397, %v3398
        %v3400 = vrot.slane %v2345, 5
        %v3401 = vrot.slane %v3400, 4
        %v3402 = vrot.slane %v2346, 5
        %v3403 = vsel %vm1667, %v3401, %v3402
        %v3404 = vrot.slane %v2347, 5
        %v3405 = vrot.slane %v3404, 4
        %v3406 = vrot.slane %v2348, 5
        %v3407 = vsel %vm1667, %v3405, %v3406
        %v3408 = vrot.slane %v2349, 5
        %v3409 = vrot.slane %v3408, 4
        %v3410 = vrot.slane %v2350, 5
        %v3411 = vsel %vm1667, %v3409, %v3410
        %s3412 = scalar_lea.vmem [#allocation9], 128
        %v3413 = vld [vmem:[%s3412] sm:$0xf]
        %v3414 = vld [vmem:[%s3412 + $0x4] sm:$0xf]
        %v3415 = vld [vmem:[%s3412 + $0x8] sm:$0xf]
        %v3416 = vld [vmem:[%s3412 + $0xc] sm:$0xf]
        %v3417 = vld [vmem:[%s3412 + $0x10] sm:$0xf]
        %v3418 = vld [vmem:[%s3412 + $0x14] sm:$0xf]
        %v3419 = vld [vmem:[%s3412 + $0x18] sm:$0xf]
        %v3420 = vld [vmem:[%s3412 + $0x1c] sm:$0xf]
        %v3421 = vld [vmem:[%s3412 + $0x20] sm:$0xf]
        %v3422 = vld [vmem:[%s3412 + $0x24] sm:$0xf]
        %v3423 = vld [vmem:[%s3412 + $0x28] sm:$0xf]
        %v3424 = vld [vmem:[%s3412 + $0x2c] sm:$0xf]
        %v3425 = vld [vmem:[%s3412 + $0x30] sm:$0xf]
        %v3426 = vld [vmem:[%s3412 + $0x34] sm:$0xf]
        %v3427 = vld [vmem:[%s3412 + $0x38] sm:$0xf]
        %v3428 = vld [vmem:[%s3412 + $0x3c] sm:$0xf]
        %v3429 = vunpack.c.l.b16 %v3383
        %v3430 = vunpack.c.l.b16 %v3387
        %v3431 = vunpack.c.l.b16 %v3391
        %v3432 = vunpack.c.l.b16 %v3395
        %v3433 = vunpack.c.l.b16 %v3399
        %v3434 = vunpack.c.l.b16 %v3403
        %v3435 = vunpack.c.l.b16 %v3407
        %v3436 = vunpack.c.l.b16 %v3411
        %v3437 = vpack.c.b16 %v3430, %v3429
        %v3438 = vpack.c.b16 %v3432, %v3431
        %v3439 = vpack.c.b16 %v3434, %v3433
        %v3440 = vpack.c.b16 %v3436, %v3435
        %v3461 = vunpack.c.l.b16 %v3413
        %v3462 = vunpack.c.l.b16 %v3414
        %v3463 = vunpack.c.l.b16 %v3415
        %v3464 = vunpack.c.l.b16 %v3416
        %v3465 = vunpack.c.l.b16 %v3417
        %v3466 = vunpack.c.l.b16 %v3418
        %v3467 = vunpack.c.l.b16 %v3419
        %v3468 = vunpack.c.l.b16 %v3420
        %v3469 = vunpack.c.l.b16 %v3421
        %v3470 = vunpack.c.l.b16 %v3422
        %v3471 = vunpack.c.l.b16 %v3423
        %v3472 = vunpack.c.l.b16 %v3424
        %v3473 = vunpack.c.l.b16 %v3425
        %v3474 = vunpack.c.l.b16 %v3426
        %v3475 = vunpack.c.l.b16 %v3427
        %v3476 = vunpack.c.l.b16 %v3428
        %v3477 = vpack.c.b16 %v3462, %v3461
        %v3478 = vpack.c.b16 %v3464, %v3463
        %v3479 = vpack.c.b16 %v3466, %v3465
        %v3480 = vpack.c.b16 %v3468, %v3467
        %v3481 = vpack.c.b16 %v3470, %v3469
        %v3482 = vpack.c.b16 %v3472, %v3471
        %v3483 = vpack.c.b16 %v3474, %v3473
        %v3484 = vpack.c.b16 %v3476, %v3475
        %3493 = vmatprep.subr.bf16.mxu0 0
        %3494 = vmatpush1.bf16.msra.mxu0 %v3477
        %3495 = vmatprep.subr.bf16.mxu0 0
        %3496 = vmatpush1.bf16.msra.mxu0 %v3478
        %3497 = vmatprep.subr.bf16.mxu0 0
        %3498 = vmatpush1.bf16.msra.mxu0 %v3479
        %3499 = vmatprep.subr.bf16.mxu0 0
        %3500 = vmatpush1.bf16.msra.mxu0 %v3480
        %3501 = vmatprep.subr.bf16.mxu0 0
        %3502 = vmatpush1.bf16.msra.mxu0 %v3481
        %3503 = vmatprep.subr.bf16.mxu0 0
        %3504 = vmatpush1.bf16.msra.mxu0 %v3482
        %3505 = vmatprep.subr.bf16.mxu0 0
        %3506 = vmatpush1.bf16.msra.mxu0 %v3483
        %3507 = vmatprep.subr.bf16.mxu0 0
        %3508 = vmatpush1.bf16.msra.mxu0 %v3484
        %3509 = vmatprep.subr.bf16.mxu0 0
        %3510 = vmatpush1.bf16.msra.mxu0 0
        %3511 = vmatprep.subr.bf16.mxu0 0
        %3512 = vmatpush1.bf16.msra.mxu0 0
        %3513 = vmatprep.subr.bf16.mxu0 0
        %3514 = vmatpush1.bf16.msra.mxu0 0
        %3515 = vmatprep.subr.bf16.mxu0 0
        %3516 = vmatpush1.bf16.msra.mxu0 0
        %3517 = vmatprep.subr.bf16.mxu0 0
        %3518 = vmatpush1.bf16.msra.mxu0 0
        %3519 = vmatprep.subr.bf16.mxu0 0
        %3520 = vmatpush1.bf16.msra.mxu0 0
        %3521 = vmatprep.subr.bf16.mxu0 0
        %3522 = vmatpush1.bf16.msra.mxu0 0
        %3523 = vmatprep.subr.bf16.mxu0 0
        %3524 = vmatpush1.bf16.msra.mxu0 0
        %3525 = vmatprep.mubr.bf16.mxu0 0
        %3526 = vmatmul.mubr.bf16.gmra.mrb[0].mxu0 %v3437
        %v3527 = vpop.f32.mrb[0].mxu0
        %v3528 = vadd.f32 0.0, %v3527
        %v3529 = vpop.f32.mrb[0].mxu0
        %v3530 = vpop.f32.mrb[0].mxu0
        %v3531 = vadd.f32 0.0, %v3530
        %v3532 = vpop.f32.mrb[0].mxu0
        %3533 = vmatprep.mubr.bf16.mxu0 0
        %3534 = vmatmul.mubr.bf16.gmra.mrb[0].mxu0 %v3438
        %v3535 = vpop.f32.mrb[0].mxu0
        %v3536 = vadd.f32 0.0, %v3535
        %v3537 = vpop.f32.mrb[0].mxu0
        %v3538 = vpop.f32.mrb[0].mxu0
        %v3539 = vadd.f32 0.0, %v3538
        %v3540 = vpop.f32.mrb[0].mxu0
        %3541 = vmatprep.mubr.bf16.mxu0 0
        %3542 = vmatmul.mubr.bf16.gmra.mrb[0].mxu0 %v3439
        %v3543 = vpop.f32.mrb[0].mxu0
        %v3544 = vadd.f32 0.0, %v3543
        %v3545 = vpop.f32.mrb[0].mxu0
        %v3546 = vpop.f32.mrb[0].mxu0
        %v3547 = vadd.f32 0.0, %v3546
        %v3548 = vpop.f32.mrb[0].mxu0
        %3549 = vmatprep.mubr.bf16.mxu0 0
        %3550 = vmatmul.mubr.bf16.gmra.mrb[0].mxu0 %v3440
        %v3551 = vpop.f32.mrb[0].mxu0
        %v3552 = vadd.f32 0.0, %v3551
        %v3553 = vpop.f32.mrb[0].mxu0
        %v3554 = vpop.f32.mrb[0].mxu0
        %v3555 = vadd.f32 0.0, %v3554
        %v3556 = vpop.f32.mrb[0].mxu0
        %3557 = vdwg.mxu0
        %v3558 = vadd.f32 %v3364, %v3528
        %v3559 = vadd.f32 %v3365, %v3531
        %v3560 = vadd.f32 %v3366, %v3536
        %v3561 = vadd.f32 %v3367, %v3539
        %v3562 = vadd.f32 %v3368, %v3544
        %v3563 = vadd.f32 %v3369, %v3547
        %v3564 = vadd.f32 %v3370, %v3552
        %v3565 = vadd.f32 %v3371, %v3555
        %v3567 = vrot.slane %v2351, 5
        %v3568 = vrot.slane %v3567, 4
        %v3569 = vrot.slane %v2352, 5
        %v3570 = vsel %vm1667, %v3568, %v3569
        %s3571 = scalar_lea.vmem [#allocation9], 320
        %v3572 = vld [vmem:[%s3571] sm:$0xf]
        %v3573 = vld [vmem:[%s3571 + $0x4] sm:$0xf]
        %v3574 = vld [vmem:[%s3571 + $0x8] sm:$0xf]
        %v3575 = vld [vmem:[%s3571 + $0xc] sm:$0xf]
        %v3576 = vld [vmem:[%s3571 + $0x10] sm:$0xf]
        %v3577 = vld [vmem:[%s3571 + $0x14] sm:$0xf]
        %v3578 = vld [vmem:[%s3571 + $0x18] sm:$0xf]
        %v3579 = vld [vmem:[%s3571 + $0x1c] sm:$0xf]
        %v3580 = vld [vmem:[%s3571 + $0x20] sm:$0xf]
        %v3581 = vld [vmem:[%s3571 + $0x24] sm:$0xf]
        %v3582 = vld [vmem:[%s3571 + $0x28] sm:$0xf]
        %v3583 = vld [vmem:[%s3571 + $0x2c] sm:$0xf]
        %v3584 = vld [vmem:[%s3571 + $0x30] sm:$0xf]
        %v3585 = vld [vmem:[%s3571 + $0x34] sm:$0xf]
        %v3586 = vld [vmem:[%s3571 + $0x38] sm:$0xf]
        %v3587 = vld [vmem:[%s3571 + $0x3c] sm:$0xf]
        %v3588 = vunpack.c.l.b16 %v3570
        %v3589 = vpack.c.b16 %v3431, %v3430
        %v3590 = vpack.c.b16 %v3433, %v3432
        %v3591 = vpack.c.b16 %v3435, %v3434
        %v3592 = vpack.c.b16 %v3588, %v3436
        %v3613 = vunpack.c.l.b16 %v3572
        %v3614 = vunpack.c.l.b16 %v3573
        %v3615 = vunpack.c.l.b16 %v3574
        %v3616 = vunpack.c.l.b16 %v3575
        %v3617 = vunpack.c.l.b16 %v3576
        %v3618 = vunpack.c.l.b16 %v3577
        %v3619 = vunpack.c.l.b16 %v3578
        %v3620 = vunpack.c.l.b16 %v3579
        %v3621 = vunpack.c.l.b16 %v3580
        %v3622 = vunpack.c.l.b16 %v3581
        %v3623 = vunpack.c.l.b16 %v3582
        %v3624 = vunpack.c.l.b16 %v3583
        %v3625 = vunpack.c.l.b16 %v3584
        %v3626 = vunpack.c.l.b16 %v3585
        %v3627 = vunpack.c.l.b16 %v3586
        %v3628 = vunpack.c.l.b16 %v3587
        %v3629 = vpack.c.b16 %v3614, %v3613
        %v3630 = vpack.c.b16 %v3616, %v3615
        %v3631 = vpack.c.b16 %v3618, %v3617
        %v3632 = vpack.c.b16 %v3620, %v3619
        %v3633 = vpack.c.b16 %v3622, %v3621
        %v3634 = vpack.c.b16 %v3624, %v3623
        %v3635 = vpack.c.b16 %v3626, %v3625
        %v3636 = vpack.c.b16 %v3628, %v3627
        %3645 = vmatprep.subr.bf16.mxu0 0
        %3646 = vmatpush1.bf16.msra.mxu0 %v3629
        %3647 = vmatprep.subr.bf16.mxu0 0
        %3648 = vmatpush1.bf16.msra.mxu0 %v3630
        %3649 = vmatprep.subr.bf16.mxu0 0
        %3650 = vmatpush1.bf16.msra.mxu0 %v3631
        %3651 = vmatprep.subr.bf16.mxu0 0
        %3652 = vmatpush1.bf16.msra.mxu0 %v3632
        %3653 = vmatprep.subr.bf16.mxu0 0
        %3654 = vmatpush1.bf16.msra.mxu0 %v3633
        %3655 = vmatprep.subr.bf16.mxu0 0
        %3656 = vmatpush1.bf16.msra.mxu0 %v3634
        %3657 = vmatprep.subr.bf16.mxu0 0
        %3658 = vmatpush1.bf16.msra.mxu0 %v3635
        %3659 = vmatprep.subr.bf16.mxu0 0
        %3660 = vmatpush1.bf16.msra.mxu0 %v3636
        %3661 = vmatprep.subr.bf16.mxu0 0
        %3662 = vmatpush1.bf16.msra.mxu0 0
        %3663 = vmatprep.subr.bf16.mxu0 0
        %3664 = vmatpush1.bf16.msra.mxu0 0
        %3665 = vmatprep.subr.bf16.mxu0 0
        %3666 = vmatpush1.bf16.msra.mxu0 0
        %3667 = vmatprep.subr.bf16.mxu0 0
        %3668 = vmatpush1.bf16.msra.mxu0 0
        %3669 = vmatprep.subr.bf16.mxu0 0
        %3670 = vmatpush1.bf16.msra.mxu0 0
        %3671 = vmatprep.subr.bf16.mxu0 0
        %3672 = vmatpush1.bf16.msra.mxu0 0
        %3673 = vmatprep.subr.bf16.mxu0 0
        %3674 = vmatpush1.bf16.msra.mxu0 0
        %3675 = vmatprep.subr.bf16.mxu0 0
        %3676 = vmatpush1.bf16.msra.mxu0 0
        %3677 = vmatprep.mubr.bf16.mxu0 0
        %3678 = vmatmul.mubr.bf16.gmra.mrb[0].mxu0 %v3589
        %v3679 = vpop.f32.mrb[0].mxu0
        %v3680 = vadd.f32 0.0, %v3679
        %v3681 = vpop.f32.mrb[0].mxu0
        %v3682 = vpop.f32.mrb[0].mxu0
        %v3683 = vadd.f32 0.0, %v3682
        %v3684 = vpop.f32.mrb[0].mxu0
        %3685 = vmatprep.mubr.bf16.mxu0 0
        %3686 = vmatmul.mubr.bf16.gmra.mrb[0].mxu0 %v3590
        %v3687 = vpop.f32.mrb[0].mxu0
        %v3688 = vadd.f32 0.0, %v3687
        %v3689 = vpop.f32.mrb[0].mxu0
        %v3690 = vpop.f32.mrb[0].mxu0
        %v3691 = vadd.f32 0.0, %v3690
        %v3692 = vpop.f32.mrb[0].mxu0
        %3693 = vmatprep.mubr.bf16.mxu0 0
        %3694 = vmatmul.mubr.bf16.gmra.mrb[0].mxu0 %v3591
        %v3695 = vpop.f32.mrb[0].mxu0
        %v3696 = vadd.f32 0.0, %v3695
        %v3697 = vpop.f32.mrb[0].mxu0
        %v3698 = vpop.f32.mrb[0].mxu0
        %v3699 = vadd.f32 0.0, %v3698
        %v3700 = vpop.f32.mrb[0].mxu0
        %3701 = vmatprep.mubr.bf16.mxu0 0
        %3702 = vmatmul.mubr.bf16.gmra.mrb[0].mxu0 %v3592
        %v3703 = vpop.f32.mrb[0].mxu0
        %v3704 = vadd.f32 0.0, %v3703
        %v3705 = vpop.f32.mrb[0].mxu0
        %v3706 = vpop.f32.mrb[0].mxu0
        %v3707 = vadd.f32 0.0, %v3706
        %v3708 = vpop.f32.mrb[0].mxu0
        %3709 = vdwg.mxu0
        %v3710 = vadd.f32 %v3558, %v3680
        %v3711 = vadd.f32 %v3559, %v3683
        %v3712 = vadd.f32 %v3560, %v3688
        %v3713 = vadd.f32 %v3561, %v3691
        %v3714 = vadd.f32 %v3562, %v3696
        %v3715 = vadd.f32 %v3563, %v3699
        %v3716 = vadd.f32 %v3564, %v3704
        %v3717 = vadd.f32 %v3565, %v3707
        %v3719 = vrot.slane %v2353, 5
        %v3720 = vrot.slane %v3719, 4
        %v3721 = vrot.slane %v2354, 5
        %v3722 = vsel %vm1667, %v3720, %v3721
        %s3723 = scalar_lea.vmem [#allocation9], 512
        %v3724 = vld [vmem:[%s3723] sm:$0xf]
        %v3725 = vld [vmem:[%s3723 + $0x4] sm:$0xf]
        %v3726 = vld [vmem:[%s3723 + $0x8] sm:$0xf]
        %v3727 = vld [vmem:[%s3723 + $0xc] sm:$0xf]
        %v3728 = vld [vmem:[%s3723 + $0x10] sm:$0xf]
        %v3729 = vld [vmem:[%s3723 + $0x14] sm:$0xf]
        %v3730 = vld [vmem:[%s3723 + $0x18] sm:$0xf]
        %v3731 = vld [vmem:[%s3723 + $0x1c] sm:$0xf]
        %v3732 = vld [vmem:[%s3723 + $0x20] sm:$0xf]
        %v3733 = vld [vmem:[%s3723 + $0x24] sm:$0xf]
        %v3734 = vld [vmem:[%s3723 + $0x28] sm:$0xf]
        %v3735 = vld [vmem:[%s3723 + $0x2c] sm:$0xf]
        %v3736 = vld [vmem:[%s3723 + $0x30] sm:$0xf]
        %v3737 = vld [vmem:[%s3723 + $0x34] sm:$0xf]
        %v3738 = vld [vmem:[%s3723 + $0x38] sm:$0xf]
        %v3739 = vld [vmem:[%s3723 + $0x3c] sm:$0xf]
        %v3740 = vunpack.c.l.b16 %v3722
        %v3741 = vpack.c.b16 %v3740, %v3588
        %v3759 = vunpack.c.l.b16 %v3724
        %v3760 = vunpack.c.l.b16 %v3725
        %v3761 = vunpack.c.l.b16 %v3726
        %v3762 = vunpack.c.l.b16 %v3727
        %v3763 = vunpack.c.l.b16 %v3728
        %v3764 = vunpack.c.l.b16 %v3729
        %v3765 = vunpack.c.l.b16 %v3730
        %v3766 = vunpack.c.l.b16 %v3731
        %v3767 = vunpack.c.l.b16 %v3732
        %v3768 = vunpack.c.l.b16 %v3733
        %v3769 = vunpack.c.l.b16 %v3734
        %v3770 = vunpack.c.l.b16 %v3735
        %v3771 = vunpack.c.l.b16 %v3736
        %v3772 = vunpack.c.l.b16 %v3737
        %v3773 = vunpack.c.l.b16 %v3738
        %v3774 = vunpack.c.l.b16 %v3739
        %v3775 = vpack.c.b16 %v3760, %v3759
        %v3776 = vpack.c.b16 %v3762, %v3761
        %v3777 = vpack.c.b16 %v3764, %v3763
        %v3778 = vpack.c.b16 %v3766, %v3765
        %v3779 = vpack.c.b16 %v3768, %v3767
        %v3780 = vpack.c.b16 %v3770, %v3769
        %v3781 = vpack.c.b16 %v3772, %v3771
        %v3782 = vpack.c.b16 %v3774, %v3773
        %3791 = vmatprep.subr.bf16.mxu0 0
        %3792 = vmatpush1.bf16.msra.mxu0 %v3775
        %3793 = vmatprep.subr.bf16.mxu0 0
        %3794 = vmatpush1.bf16.msra.mxu0 %v3776
        %3795 = vmatprep.subr.bf16.mxu0 0
        %3796 = vmatpush1.bf16.msra.mxu0 %v3777
        %3797 = vmatprep.subr.bf16.mxu0 0
        %3798 = vmatpush1.bf16.msra.mxu0 %v3778
        %3799 = vmatprep.subr.bf16.mxu0 0
        %3800 = vmatpush1.bf16.msra.mxu0 %v3779
        %3801 = vmatprep.subr.bf16.mxu0 0
        %3802 = vmatpush1.bf16.msra.mxu0 %v3780
        %3803 = vmatprep.subr.bf16.mxu0 0
        %3804 = vmatpush1.bf16.msra.mxu0 %v3781
        %3805 = vmatprep.subr.bf16.mxu0 0
        %3806 = vmatpush1.bf16.msra.mxu0 %v3782
        %3807 = vmatprep.subr.bf16.mxu0 0
        %3808 = vmatpush1.bf16.msra.mxu0 0
        %3809 = vmatprep.subr.bf16.mxu0 0
        %3810 = vmatpush1.bf16.msra.mxu0 0
        %3811 = vmatprep.subr.bf16.mxu0 0
        %3812 = vmatpush1.bf16.msra.mxu0 0
        %3813 = vmatprep.subr.bf16.mxu0 0
        %3814 = vmatpush1.bf16.msra.mxu0 0
        %3815 = vmatprep.subr.bf16.mxu0 0
        %3816 = vmatpush1.bf16.msra.mxu0 0
        %3817 = vmatprep.subr.bf16.mxu0 0
        %3818 = vmatpush1.bf16.msra.mxu0 0
        %3819 = vmatprep.subr.bf16.mxu0 0
        %3820 = vmatpush1.bf16.msra.mxu0 0
        %3821 = vmatprep.subr.bf16.mxu0 0
        %3822 = vmatpush1.bf16.msra.mxu0 0
        %3823 = vmatprep.mubr.bf16.mxu0 0
        %3824 = vmatmul.mubr.bf16.gmra.mrb[0].mxu0 %v3438
        %v3825 = vpop.f32.mrb[0].mxu0
        %v3826 = vadd.f32 0.0, %v3825
        %v3827 = vpop.f32.mrb[0].mxu0
        %v3828 = vpop.f32.mrb[0].mxu0
        %v3829 = vadd.f32 0.0, %v3828
        %v3830 = vpop.f32.mrb[0].mxu0
        %3831 = vmatprep.mubr.bf16.mxu0 0
        %3832 = vmatmul.mubr.bf16.gmra.mrb[0].mxu0 %v3439
        %v3833 = vpop.f32.mrb[0].mxu0
        %v3834 = vadd.f32 0.0, %v3833
        %v3835 = vpop.f32.mrb[0].mxu0
        %v3836 = vpop.f32.mrb[0].mxu0
        %v3837 = vadd.f32 0.0, %v3836
        %v3838 = vpop.f32.mrb[0].mxu0
        %3839 = vmatprep.mubr.bf16.mxu0 0
        %3840 = vmatmul.mubr.bf16.gmra.mrb[0].mxu0 %v3440
        %v3841 = vpop.f32.mrb[0].mxu0
        %v3842 = vadd.f32 0.0, %v3841
        %v3843 = vpop.f32.mrb[0].mxu0
        %v3844 = vpop.f32.mrb[0].mxu0
        %v3845 = vadd.f32 0.0, %v3844
        %v3846 = vpop.f32.mrb[0].mxu0
        %3847 = vmatprep.mubr.bf16.mxu0 0
        %3848 = vmatmul.mubr.bf16.gmra.mrb[0].mxu0 %v3741
        %v3849 = vpop.f32.mrb[0].mxu0
        %v3850 = vadd.f32 0.0, %v3849
        %v3851 = vpop.f32.mrb[0].mxu0
        %v3852 = vpop.f32.mrb[0].mxu0
        %v3853 = vadd.f32 0.0, %v3852
        %v3854 = vpop.f32.mrb[0].mxu0
        %3855 = vdwg.mxu0
        %v3856 = vadd.f32 %v3710, %v3826
        %v3857 = vadd.f32 %v3711, %v3829
        %v3858 = vadd.f32 %v3712, %v3834
        %v3859 = vadd.f32 %v3713, %v3837
        %v3860 = vadd.f32 %v3714, %v3842
        %v3861 = vadd.f32 %v3715, %v3845
        %v3862 = vadd.f32 %v3716, %v3850
        %v3863 = vadd.f32 %v3717, %v3853
        %v3865 = vlaneseq
        %v3866 = vshrl.u32 %v3865, 7
        %v3867 = vsub.s32 0, %v3866
        %v3868 = vrot.slane %v2334, %v3867
        %v3870 = vadd.f32 %v3856, %v3868
        %v3871 = vadd.f32 %v3857, %v3868
        %v3872 = vadd.f32 %v3858, %v3868
        %v3873 = vadd.f32 %v3859, %v3868
        %v3874 = vadd.f32 %v3860, %v3868
        %v3875 = vadd.f32 %v3861, %v3868
        %v3876 = vadd.f32 %v3862, %v3868
        %v3877 = vadd.f32 %v3863, %v3868
        %v3878 = vmax.f32 %v3870, 0.0
        %v3879 = vmax.f32 %v3871, 0.0
        %v3880 = vmax.f32 %v3872, 0.0
        %v3881 = vmax.f32 %v3873, 0.0
        %v3882 = vmax.f32 %v3874, 0.0
        %v3883 = vmax.f32 %v3875, 0.0
        %v3884 = vmax.f32 %v3876, 0.0
        %v3885 = vmax.f32 %v3877, 0.0
        %v3886 = vpack.c.bf16 %v3879, %v3878
        %v3887 = vpack.c.bf16 %v3881, %v3880
        %v3888 = vpack.c.bf16 %v3883, %v3882
        %v3889 = vpack.c.bf16 %v3885, %v3884
        %v3890 = vld [vmem:[#allocation12] sm:$0xff]
        %v3891 = vld [vmem:[#allocation12 + $0x8] sm:$0xff]
        %v3892 = vld [vmem:[#allocation12 + $0x10] sm:$0xff]
        %v3893 = vld [vmem:[#allocation12 + $0x18] sm:$0xff]
        %v3894 = vld [vmem:[#allocation12 + $0x20] sm:$0xff]
        %v3895 = vld [vmem:[#allocation12 + $0x28] sm:$0xff]
        %v3896 = vld [vmem:[#allocation12 + $0x30] sm:$0xff]
        %v3897 = vld [vmem:[#allocation12 + $0x38] sm:$0xff]
        %v3898 = vld [vmem:[#allocation12 + $0x40] sm:$0xff]
        %v3899 = vld [vmem:[#allocation12 + $0x48] sm:$0xff]
        %v3900 = vld [vmem:[#allocation12 + $0x50] sm:$0xff]
        %v3901 = vld [vmem:[#allocation12 + $0x58] sm:$0xff]
        %v3902 = vld [vmem:[#allocation12 + $0x60] sm:$0xff]
        %v3903 = vld [vmem:[#allocation12 + $0x68] sm:$0xff]
        %v3904 = vld [vmem:[#allocation12 + $0x70] sm:$0xff]
        %v3905 = vld [vmem:[#allocation12 + $0x78] sm:$0xff]
        %v3906 = vld [vmem:[#allocation14] sm:$0x3]
        %v3908 = vlaneseq
        %v3909 = vshrl.u32 %v3908, 7
        %v3910 = vsub.s32 0, %v3909
        %v3911 = vrot.slane %v3906, %v3910
        %v3912 = vlaneseq
        %v3913 = vshrl.u32 %v3912, 7
        %v3914 = vsub.s32 1, %v3913
        %v3915 = vrot.slane %v3906, %v3914
        %v3934 = vunpack.c.l.b16 %v3890
        %v3935 = vunpack.c.h.b16 %v3890
        %v3936 = vunpack.c.l.b16 %v3891
        %v3937 = vunpack.c.h.b16 %v3891
        %v3938 = vunpack.c.l.b16 %v3892
        %v3939 = vunpack.c.h.b16 %v3892
        %v3940 = vunpack.c.l.b16 %v3893
        %v3941 = vunpack.c.h.b16 %v3893
        %v3942 = vunpack.c.l.b16 %v3894
        %v3943 = vunpack.c.h.b16 %v3894
        %v3944 = vunpack.c.l.b16 %v3895
        %v3945 = vunpack.c.h.b16 %v3895
        %v3946 = vunpack.c.l.b16 %v3896
        %v3947 = vunpack.c.h.b16 %v3896
        %v3948 = vunpack.c.l.b16 %v3897
        %v3949 = vunpack.c.h.b16 %v3897
        %v3950 = vunpack.c.l.b16 %v3898
        %v3951 = vunpack.c.h.b16 %v3898
        %v3952 = vunpack.c.l.b16 %v3899
        %v3953 = vunpack.c.h.b16 %v3899
        %v3954 = vunpack.c.l.b16 %v3900
        %v3955 = vunpack.c.h.b16 %v3900
        %v3956 = vunpack.c.l.b16 %v3901
        %v3957 = vunpack.c.h.b16 %v3901
        %v3958 = vunpack.c.l.b16 %v3902
        %v3959 = vunpack.c.h.b16 %v3902
        %v3960 = vunpack.c.l.b16 %v3903
        %v3961 = vunpack.c.h.b16 %v3903
        %v3962 = vunpack.c.l.b16 %v3904
        %v3963 = vunpack.c.h.b16 %v3904
        %v3964 = vunpack.c.l.b16 %v3905
        %v3965 = vunpack.c.h.b16 %v3905
        %v3966 = vpack.c.b16 %v3936, %v3934
        %v3967 = vpack.c.b16 %v3937, %v3935
        %v3968 = vpack.c.b16 %v3940, %v3938
        %v3969 = vpack.c.b16 %v3941, %v3939
        %v3970 = vpack.c.b16 %v3944, %v3942
        %v3971 = vpack.c.b16 %v3945, %v3943
        %v3972 = vpack.c.b16 %v3948, %v3946
        %v3973 = vpack.c.b16 %v3949, %v3947
        %v3974 = vpack.c.b16 %v3952, %v3950
        %v3975 = vpack.c.b16 %v3953, %v3951
        %v3976 = vpack.c.b16 %v3956, %v3954
        %v3977 = vpack.c.b16 %v3957, %v3955
        %v3978 = vpack.c.b16 %v3960, %v3958
        %v3979 = vpack.c.b16 %v3961, %v3959
        %v3980 = vpack.c.b16 %v3964, %v3962
        %v3981 = vpack.c.b16 %v3965, %v3963
        %3998 = vmatprep.subr.bf16.mxu0 %v3967
        %3999 = vmatpush1.bf16.msra.mxu0 %v3966
        %4000 = vmatprep.subr.bf16.mxu0 %v3969
        %4001 = vmatpush1.bf16.msra.mxu0 %v3968
        %4002 = vmatprep.subr.bf16.mxu0 %v3971
        %4003 = vmatpush1.bf16.msra.mxu0 %v3970
        %4004 = vmatprep.subr.bf16.mxu0 %v3973
        %4005 = vmatpush1.bf16.msra.mxu0 %v3972
        %4006 = vmatprep.subr.bf16.mxu0 %v3975
        %4007 = vmatpush1.bf16.msra.mxu0 %v3974
        %4008 = vmatprep.subr.bf16.mxu0 %v3977
        %4009 = vmatpush1.bf16.msra.mxu0 %v3976
        %4010 = vmatprep.subr.bf16.mxu0 %v3979
        %4011 = vmatpush1.bf16.msra.mxu0 %v3978
        %4012 = vmatprep.subr.bf16.mxu0 %v3981
        %4013 = vmatpush1.bf16.msra.mxu0 %v3980
        %4014 = vmatprep.subr.bf16.mxu0 0
        %4015 = vmatpush1.bf16.msra.mxu0 0
        %4016 = vmatprep.subr.bf16.mxu0 0
        %4017 = vmatpush1.bf16.msra.mxu0 0
        %4018 = vmatprep.subr.bf16.mxu0 0
        %4019 = vmatpush1.bf16.msra.mxu0 0
        %4020 = vmatprep.subr.bf16.mxu0 0
        %4021 = vmatpush1.bf16.msra.mxu0 0
        %4022 = vmatprep.subr.bf16.mxu0 0
        %4023 = vmatpush1.bf16.msra.mxu0 0
        %4024 = vmatprep.subr.bf16.mxu0 0
        %4025 = vmatpush1.bf16.msra.mxu0 0
        %4026 = vmatprep.subr.bf16.mxu0 0
        %4027 = vmatpush1.bf16.msra.mxu0 0
        %4028 = vmatprep.subr.bf16.mxu0 0
        %4029 = vmatpush1.bf16.msra.mxu0 0
        %4030 = vmatprep.mubr.bf16.mxu0 0
        %4031 = vmatmul.mubr.bf16.gmra.mrb[0].mxu0 %v3886
        %v4032 = vpop.f32.mrb[0].mxu0
        %v4033 = vadd.f32 %v3911, %v4032
        %v4034 = vpop.f32.mrb[0].mxu0
        %v4035 = vadd.f32 %v3915, %v4034
        %v4036 = vpop.f32.mrb[0].mxu0
        %v4037 = vadd.f32 %v3911, %v4036
        %v4038 = vpop.f32.mrb[0].mxu0
        %v4039 = vadd.f32 %v3915, %v4038
        %4040 = vmatprep.mubr.bf16.mxu0 0
        %4041 = vmatmul.mubr.bf16.gmra.mrb[0].mxu0 %v3887
        %v4042 = vpop.f32.mrb[0].mxu0
        %v4043 = vadd.f32 %v3911, %v4042
        %v4044 = vpop.f32.mrb[0].mxu0
        %v4045 = vadd.f32 %v3915, %v4044
        %v4046 = vpop.f32.mrb[0].mxu0
        %v4047 = vadd.f32 %v3911, %v4046
        %v4048 = vpop.f32.mrb[0].mxu0
        %v4049 = vadd.f32 %v3915, %v4048
        %4050 = vmatprep.mubr.bf16.mxu0 0
        %4051 = vmatmul.mubr.bf16.gmra.mrb[0].mxu0 %v3888
        %v4052 = vpop.f32.mrb[0].mxu0
        %v4053 = vadd.f32 %v3911, %v4052
        %v4054 = vpop.f32.mrb[0].mxu0
        %v4055 = vadd.f32 %v3915, %v4054
        %v4056 = vpop.f32.mrb[0].mxu0
        %v4057 = vadd.f32 %v3911, %v4056
        %v4058 = vpop.f32.mrb[0].mxu0
        %v4059 = vadd.f32 %v3915, %v4058
        %4060 = vmatprep.mubr.bf16.mxu0 0
        %4061 = vmatmul.mubr.bf16.gmra.mrb[0].mxu0 %v3889
        %v4062 = vpop.f32.mrb[0].mxu0
        %v4063 = vadd.f32 %v3911, %v4062
        %v4064 = vpop.f32.mrb[0].mxu0
        %v4065 = vadd.f32 %v3915, %v4064
        %v4066 = vpop.f32.mrb[0].mxu0
        %v4067 = vadd.f32 %v3911, %v4066
        %v4068 = vpop.f32.mrb[0].mxu0
        %v4069 = vadd.f32 %v3915, %v4068
        %4070 = vdwg.mxu0
        %vm4071 = vcmask 64512
        %v4072 = vsel %vm4071, %v4035, -inf
        %4073 = vmax.xlane.f32.xlu0 %v4072
        %v4074 = vpop.xlane.xlu0 %4073
        %v4075 = vsel %vm4071, %v4039, -inf
        %4076 = vmax.xlane.f32.xlu0 %v4075
        %v4077 = vpop.xlane.xlu0 %4076
        %v4078 = vsel %vm4071, %v4045, -inf
        %4079 = vmax.xlane.f32.xlu0 %v4078
        %v4080 = vpop.xlane.xlu0 %4079
        %v4081 = vsel %vm4071, %v4049, -inf
        %4082 = vmax.xlane.f32.xlu0 %v4081
        %v4083 = vpop.xlane.xlu0 %4082
        %v4084 = vsel %vm4071, %v4055, -inf
        %4085 = vmax.xlane.f32.xlu0 %v4084
        %v4086 = vpop.xlane.xlu0 %4085
        %v4087 = vsel %vm4071, %v4059, -inf
        %4088 = vmax.xlane.f32.xlu0 %v4087
        %v4089 = vpop.xlane.xlu0 %4088
        %v4090 = vsel %vm4071, %v4065, -inf
        %4091 = vmax.xlane.f32.xlu0 %v4090
        %v4092 = vpop.xlane.xlu0 %4091
        %v4093 = vsel %vm4071, %v4069, -inf
        %4094 = vmax.xlane.f32.xlu0 %v4093
        %v4095 = vpop.xlane.xlu0 %4094
        %v4096 = vsub.f32 %v4035, %v4074
        %v4097 = vsub.f32 %v4039, %v4077
        %v4098 = vsub.f32 %v4045, %v4080
        %v4099 = vsub.f32 %v4049, %v4083
        %v4100 = vsub.f32 %v4055, %v4086
        %v4101 = vsub.f32 %v4059, %v4089
        %v4102 = vsub.f32 %v4065, %v4092
        %v4103 = vsub.f32 %v4069, %v4095
        %v4104 = vmul.f32 %v4096, 1.442695
        %v4105 = vpow.pop %v4104
        %v4106 = vmul.f32 %v4097, 1.442695
        %v4107 = vpow.pop %v4106
        %v4108 = vmul.f32 %v4098, 1.442695
        %v4109 = vpow.pop %v4108
        %v4110 = vmul.f32 %v4099, 1.442695
        %v4111 = vpow.pop %v4110
        %v4112 = vmul.f32 %v4100, 1.442695
        %v4113 = vpow.pop %v4112
        %v4114 = vmul.f32 %v4101, 1.442695
        %v4115 = vpow.pop %v4114
        %v4116 = vmul.f32 %v4102, 1.442695
        %v4117 = vpow.pop %v4116
        %v4118 = vmul.f32 %v4103, 1.442695
        %v4119 = vpow.pop %v4118
        %v4120 = vsel %vm4071, %v4105, 0.0
        %4121 = vadd.xlane.f32.xlu0 %v4120
        %v4122 = vpop.xlane.xlu0 %4121
        %v4123 = vsel %vm4071, %v4107, 0.0
        %4124 = vadd.xlane.f32.xlu0 %v4123
        %v4125 = vpop.xlane.xlu0 %4124
        %v4126 = vsel %vm4071, %v4109, 0.0
        %4127 = vadd.xlane.f32.xlu0 %v4126
        %v4128 = vpop.xlane.xlu0 %4127
        %v4129 = vsel %vm4071, %v4111, 0.0
        %4130 = vadd.xlane.f32.xlu0 %v4129
        %v4131 = vpop.xlane.xlu0 %4130
        %v4132 = vsel %vm4071, %v4113, 0.0
        %4133 = vadd.xlane.f32.xlu0 %v4132
        %v4134 = vpop.xlane.xlu0 %4133
        %v4135 = vsel %vm4071, %v4115, 0.0
        %4136 = vadd.xlane.f32.xlu0 %v4135
        %v4137 = vpop.xlane.xlu0 %4136
        %v4138 = vsel %vm4071, %v4117, 0.0
        %4139 = vadd.xlane.f32.xlu0 %v4138
        %v4140 = vpop.xlane.xlu0 %4139
        %v4141 = vsel %vm4071, %v4119, 0.0
        %4142 = vadd.xlane.f32.xlu0 %v4141
        %v4143 = vpop.xlane.xlu0 %4142
        %v4144 = vrcp.pop %v4122
        %v4145 = vrcp.pop %v4125
        %v4146 = vrcp.pop %v4128
        %v4147 = vrcp.pop %v4131
        %v4148 = vrcp.pop %v4134
        %v4149 = vrcp.pop %v4137
        %v4150 = vrcp.pop %v4140
        %v4151 = vrcp.pop %v4143
        %v4152 = vmul.f32 %v4105, %v4144
        %v4153 = vmul.f32 %v4107, %v4145
        %v4154 = vmul.f32 %v4109, %v4146
        %v4155 = vmul.f32 %v4111, %v4147
        %v4156 = vmul.f32 %v4113, %v4148
        %v4157 = vmul.f32 %v4115, %v4149
        %v4158 = vmul.f32 %v4117, %v4150
        %v4159 = vmul.f32 %v4119, %v4151
        %v4160 = vld [vmem:[#allocation15] sm:$0xff]
        %v4162 = vsel %vm4071, %v4152, 0
        %v4165 = vsel %vm4071, %v4153, 0
        %v4168 = vsel %vm4071, %v4154, 0
        %v4171 = vsel %vm4071, %v4155, 0
        %v4174 = vsel %vm4071, %v4156, 0
        %v4177 = vsel %vm4071, %v4157, 0
        %v4180 = vsel %vm4071, %v4158, 0
        %v4183 = vsel %vm4071, %v4159, 0
        %4185 = vmatprep.subr.mxu0 0.0
        %4186 = vmatpush1.msra.mxu0 %v4160
        %4187 = vmatprep.subr.mxu0 0.0
        %4188 = vmatpush1.msra.mxu0 0.0
        %4189 = vmatprep.subr.mxu0 0.0
        %4190 = vmatpush1.msra.mxu0 0.0
        %4191 = vmatprep.subr.mxu0 0.0
        %4192 = vmatpush1.msra.mxu0 0.0
        %4193 = vmatprep.subr.mxu0 0.0
        %4194 = vmatpush1.msra.mxu0 0.0
        %4195 = vmatprep.subr.mxu0 0.0
        %4196 = vmatpush1.msra.mxu0 0.0
        %4197 = vmatprep.subr.mxu0 0.0
        %4198 = vmatpush1.msra.mxu0 0.0
        %4199 = vmatprep.subr.mxu0 0.0
        %4200 = vmatpush1.msra.mxu0 0.0
        %4201 = vmatprep.subr.mxu0 0.0
        %4202 = vmatpush1.msra.mxu0 0.0
        %4203 = vmatprep.subr.mxu0 0.0
        %4204 = vmatpush1.msra.mxu0 0.0
        %4205 = vmatprep.subr.mxu0 0.0
        %4206 = vmatpush1.msra.mxu0 0.0
        %4207 = vmatprep.subr.mxu0 0.0
        %4208 = vmatpush1.msra.mxu0 0.0
        %4209 = vmatprep.subr.mxu0 0.0
        %4210 = vmatpush1.msra.mxu0 0.0
        %4211 = vmatprep.subr.mxu0 0.0
        %4212 = vmatpush1.msra.mxu0 0.0
        %4213 = vmatprep.subr.mxu0 0.0
        %4214 = vmatpush1.msra.mxu0 0.0
        %4215 = vmatprep.subr.mxu0 0.0
        %4216 = vmatpush1.msra.mxu0 0.0
        %4217 = vmatprep.subr.mxu0 0.0
        %4218 = vmatpush1.msra.mxu0 0.0
        %4219 = vmatprep.subr.mxu0 0.0
        %4220 = vmatpush1.msra.mxu0 0.0
        %4221 = vmatprep.subr.mxu0 0.0
        %4222 = vmatpush1.msra.mxu0 0.0
        %4223 = vmatprep.subr.mxu0 0.0
        %4224 = vmatpush1.msra.mxu0 0.0
        %4225 = vmatprep.subr.mxu0 0.0
        %4226 = vmatpush1.msra.mxu0 0.0
        %4227 = vmatprep.subr.mxu0 0.0
        %4228 = vmatpush1.msra.mxu0 0.0
        %4229 = vmatprep.subr.mxu0 0.0
        %4230 = vmatpush1.msra.mxu0 0.0
        %4231 = vmatprep.subr.mxu0 0.0
        %4232 = vmatpush1.msra.mxu0 0.0
        %4233 = vmatprep.subr.mxu0 0.0
        %4234 = vmatpush1.msra.mxu0 0.0
        %4235 = vmatprep.subr.mxu0 0.0
        %4236 = vmatpush1.msra.mxu0 0.0
        %4237 = vmatprep.subr.mxu0 0.0
        %4238 = vmatpush1.msra.mxu0 0.0
        %4239 = vmatprep.subr.mxu0 0.0
        %4240 = vmatpush1.msra.mxu0 0.0
        %4241 = vmatprep.subr.mxu0 0.0
        %4242 = vmatpush1.msra.mxu0 0.0
        %4243 = vmatprep.subr.mxu0 0.0
        %4244 = vmatpush1.msra.mxu0 0.0
        %4245 = vmatprep.subr.mxu0 0.0
        %4246 = vmatpush1.msra.mxu0 0.0
        %4247 = vmatprep.subr.mxu0 0.0
        %4248 = vmatpush1.msra.mxu0 0.0
        %4249 = vmatprep.mubr.f32.mxu0 0.0
        %4250 = vmatmul.mubr.f32.gmra.mrb[0].mxu0 %v4162
        %v4251 = vpop.f32.mrb[0].mxu0
        %v4252 = vadd.f32 0.0, %v4251
        %v4253 = vpop.f32.mrb[0].mxu0
        %4254 = vmatprep.mubr.f32.mxu0 0.0
        %4255 = vmatmul.mubr.f32.gmra.mrb[0].mxu0 %v4165
        %v4256 = vpop.f32.mrb[0].mxu0
        %v4257 = vadd.f32 0.0, %v4256
        %v4258 = vpop.f32.mrb[0].mxu0
        %4259 = vmatprep.mubr.f32.mxu0 0.0
        %4260 = vmatmul.mubr.f32.gmra.mrb[0].mxu0 %v4168
        %v4261 = vpop.f32.mrb[0].mxu0
        %v4262 = vadd.f32 0.0, %v4261
        %v4263 = vpop.f32.mrb[0].mxu0
        %4264 = vmatprep.mubr.f32.mxu0 0.0
        %4265 = vmatmul.mubr.f32.gmra.mrb[0].mxu0 %v4171
        %v4266 = vpop.f32.mrb[0].mxu0
        %v4267 = vadd.f32 0.0, %v4266
        %v4268 = vpop.f32.mrb[0].mxu0
        %4269 = vmatprep.mubr.f32.mxu0 0.0
        %4270 = vmatmul.mubr.f32.gmra.mrb[0].mxu0 %v4174
        %v4271 = vpop.f32.mrb[0].mxu0
        %v4272 = vadd.f32 0.0, %v4271
        %v4273 = vpop.f32.mrb[0].mxu0
        %4274 = vmatprep.mubr.f32.mxu0 0.0
        %4275 = vmatmul.mubr.f32.gmra.mrb[0].mxu0 %v4177
        %v4276 = vpop.f32.mrb[0].mxu0
        %v4277 = vadd.f32 0.0, %v4276
        %v4278 = vpop.f32.mrb[0].mxu0
        %4279 = vmatprep.mubr.f32.mxu0 0.0
        %4280 = vmatmul.mubr.f32.gmra.mrb[0].mxu0 %v4180
        %v4281 = vpop.f32.mrb[0].mxu0
        %v4282 = vadd.f32 0.0, %v4281
        %v4283 = vpop.f32.mrb[0].mxu0
        %4284 = vmatprep.mubr.f32.mxu0 0.0
        %4285 = vmatmul.mubr.f32.gmra.mrb[0].mxu0 %v4183
        %v4286 = vpop.f32.mrb[0].mxu0
        %v4287 = vadd.f32 0.0, %v4286
        %v4288 = vpop.f32.mrb[0].mxu0
        %4289 = vdwg.mxu0
        %v4290 = vmul.f32 %v4252, %v4033
        %v4291 = vmul.f32 %v4257, %v4037
        %v4292 = vmul.f32 %v4262, %v4043
        %v4293 = vmul.f32 %v4267, %v4047
        %v4294 = vmul.f32 %v4272, %v4053
        %v4295 = vmul.f32 %v4277, %v4057
        %v4296 = vmul.f32 %v4282, %v4063
        %v4297 = vmul.f32 %v4287, %v4067
        %4298 = vst [vmem:[%s417] sm:$0xff] %v4290
        %4299 = vst [vmem:[%s417 + $0x8] sm:$0xff] %v4291
        %4300 = vst [vmem:[%s417 + $0x10] sm:$0xff] %v4292
        %4301 = vst [vmem:[%s417 + $0x18] sm:$0xff] %v4293
        %4302 = vst [vmem:[%s417 + $0x20] sm:$0xff] %v4294
        %4303 = vst [vmem:[%s417 + $0x28] sm:$0xff] %v4295
        %4304 = vst [vmem:[%s417 + $0x30] sm:$0xff] %v4296
        %4305 = vst [vmem:[%s417 + $0x38] sm:$0xff] %v4297
        %s4306 = sand.u32 %s210, 1
        %s4307 = scalar_lea.sflag [#allocation5], %s4306
        %s4308 = sand.u32 %s210, 1
        %s4309 = smul.addr %s4308, 64
        %s4310 = scalar_lea.vmem [#allocation17], %s4309
        // Predicated region
        $region85: #{cam_encode_forward.1} parent=51 // pred_check
          %p4311 = pneg %p220
        $region86: #{cam_encode_forward.1} parent=51 // pred_check_branch
          %4313 = sbr.rel (%p4311) target = $region88
        $region87: #{cam_encode_forward.1} parent=51 // pred_region
          %s4315 = ssub.s32 1024, 1024
          %4316 = vsyncadd %s4307, %s4315
          %s4317 = smul.addr %s29, 8
          %s4318 = smul.addr %s4317, 128
          %s4319 = scalar_lea.hbm %s8, %s4318
          %s4320 = sshll.u32 %s4310, 4
          %s4321 = int_to_ptr.vmem [resolvable:$true] %s4320
          %4326 = dma.vmem_to_hbm [thread:$0]  %s4321, 1024, %s4319, %s4307, 128, 128, 8
        $region88: #{cam_encode_forward.1} parent=51 // pred_fallthru
          _
      $region52: #{cam_encode_forward.1} parent=5 // pred_fallthru
        _
      %p4327 = scmp.le.s32.totalorder 2, %s24
      // Predicated region
      $region89: #{cam_encode_forward.1} parent=5 // pred_check
        %p4328 = pneg %p4327
      $region90: #{cam_encode_forward.1} parent=5 // pred_check_branch
        %4330 = sbr.rel (%p4328) target = $region92
      $region91: #{cam_encode_forward.1} parent=5 // pred_region
        %s4331 = ssub.s32 %s24, 2
        // Predicated region
        $region93: #{cam_encode_forward.1} parent=91 // pred_check
          %p4332 = pneg %p226
        $region94: #{cam_encode_forward.1} parent=91 // pred_check_branch
          %4334 = sbr.rel (%p4332) target = $region96
        $region95: #{cam_encode_forward.1} parent=91 // pred_region
          %s4335 = sand.u32 %s211, 1
          %s4336 = scalar_lea.sflag [#allocation5], %s4335
          %s4337 = sand.u32 %s211, 1
          %s4338 = smul.addr %s4337, 64
          %s4339 = scalar_lea.vmem [#allocation17], %s4338
          %4340 = dma.done %s4336, 1024
        $region96: #{cam_encode_forward.1} parent=91 // pred_fallthru
          _
      $region92: #{cam_encode_forward.1} parent=5 // pred_fallthru
        _
    $region6: #{cam_encode_forward.1} parent=1 // loop_footer
      %s28 = sadd.s32 1, %s24
    $region7: #{cam_encode_forward.1} parent=1 // loop_footer_branch
      %23 = sbr.rel target = $region3
    $region8: #{cam_encode_forward.1} parent=1 // loop_exit
      _
    %4341 = vsyncpa [#allocation4], 1
    %s4342 = scalar_lea.sflag [#allocation4], 1
    %4343 = vsyncpa %s4342, 1
    %4344 = vsyncpa [#allocation7], 1
    %4345 = vsyncpa [#allocation10], 1
    %4346 = vsyncpa [#allocation13], 1
    %4347 = vsyncpa [#allocation16], 1
    %4348 = vsyncpa [#allocation5], 1
    %s4349 = scalar_lea.sflag [#allocation5], 1
    %4350 = vsyncpa %s4349, 1

</llo_original>
